<compile_context>
chip_gen: v7x
topology: tpu7x:2x2x1
jax: 0.10.0
libtpu: 0.0.40
codegen_flags: <defaults>
</compile_context>

<pallas_src>
import functools

import jax
import jax.numpy as jnp
import numpy as np
from jax.experimental import pallas as pl
from jax.experimental.pallas import tpu as pltpu

EPS = 1e-5
MATMUL_DTYPE = jnp.bfloat16          # MXU operand dtype; accumulation is always f32
ACT_DTYPE = jnp.bfloat16             # activation dtype in HBM between kernels
VMEM_LIMIT_BYTES = 48 * 1024 * 1024  # scoped-VMEM cap we request (< v7x 64 MiB physical VMEM)
_TILE_VMEM_BUDGET = 20 * 1024 * 1024 # per-grid-step working-set target used by the tile choosers
_SQRT_2_OVER_PI = 0.7978845608028654


# ----------------------------- module helpers (host-side) -----------------------------

def get_dynamic_window_size(resolution):
    avg_size = (resolution[0] + resolution[1]) // 2
    if avg_size <= 8:
        return 8
    elif avg_size <= 16:
        return 6
    elif avg_size <= 32:
        return 4
    else:
        return 2


def _relative_position_index(ws):
    """Same construction as WindowAttention.__init__ (numpy, host-side)."""
    coords = np.stack(np.meshgrid(np.arange(ws), np.arange(ws), indexing="ij"))   # (2, ws, ws)
    cf = coords.reshape(2, -1)                                                     # (2, N)
    rel = cf[:, :, None] - cf[:, None, :]                                          # (2, N, N)
    rel = rel.transpose(1, 2, 0).copy()                                            # (N, N, 2)
    rel[:, :, 0] += ws - 1
    rel[:, :, 1] += ws - 1
    rel[:, :, 0] *= 2 * ws - 1
    return rel.sum(-1)                                                             # (N, N) int


def _gelu_tanh(z):
    # tanh-form GELU (divide-free, tanh goes to the EUP slot).  Max deviation from the exact
    # erf GELU of nn.GELU() is ~3e-4, well inside the deliberate bf16 operand noise.
    return 0.5 * z * (1.0 + jnp.tanh(_SQRT_2_OVER_PI * (z + 0.044715 * z * z * z)))


def _round_up(x, m):
    return ((x + m - 1) // m) * m


# ----------------------------- Pallas kernels -----------------------------

def _window_attn_kernel(x_ref, *refs, num_heads, has_mask):
    """norm1 + window MHSA + residual for one block of windows.

    x_ref   : (WB, N, C)  bf16 pre-norm tokens (windows of the padded NHWC input)
    mask_ref: (NW_total, N) f32, 1.0 for real tokens (only present when the image was padded)
    wqkv_ref: (C, 3C) bf16 (q columns pre-scaled by head_dim**-0.5), bqkv_ref: (1, 3C) f32
    rpb_ref : (num_heads, N, N) f32 relative-position bias
    wp_ref  : (C, C) bf16, bp_ref: (1, C) f32
    o_ref   : (WB, N, C) bf16  ==  x + proj(attn)   (first residual fused)
    """
    if has_mask:
        (mask_ref, g1_ref, b1_ref, wqkv_ref, bqkv_ref,
         rpb_ref, wp_ref, bp_ref, o_ref) = refs
    else:
        (g1_ref, b1_ref, wqkv_ref, bqkv_ref,
         rpb_ref, wp_ref, bp_ref, o_ref) = refs

    WB, N, C = x_ref.shape
    hd = C // num_heads

    x = x_ref[...].astype(jnp.float32)                       # (WB, N, C)
    xf = x.reshape(WB * N, C)

    # ---- LayerNorm(norm1): centred two-pass mean/var (robust), affine folded into one FMA ----
    mean = jnp.sum(xf, axis=-1, keepdims=True) * (1.0 / C)
    d = xf - mean
    var = jnp.sum(d * d, axis=-1, keepdims=True) * (1.0 / C)
    inv = jax.lax.rsqrt(var + EPS)
    xn = d * (inv * g1_ref[...]) + b1_ref[...]

    if has_mask:
        # zero padded tokens (matches "norm1 then F.pad" ordering of the reference)
        start = pl.multiple_of(pl.program_id(0) * WB, WB)
        m = mask_ref[pl.ds(start, WB), :]                    # (WB, N)
        xn = (xn.reshape(WB, N, C) * m[:, :, None]).reshape(WB * N, C)

    # ---- qkv projection (bf16 operands, f32 accumulation); scale folded into W_q / b_q ----
    qkv = jnp.dot(xn.astype(MATMUL_DTYPE), wqkv_ref[...],
                  preferred_element_type=jnp.float32) + bqkv_ref[...]
    qkv = qkv.reshape(WB, N, 3 * C).astype(MATMUL_DTYPE)     # single bf16 copy, sliced per head

    # ---- per-head attention (single-leading-batch-dim einsums; lowers on all generations) ----
    head_outs = []
    for h in range(num_heads):
        q = qkv[:, :, h * hd:(h + 1) * hd]                               # (WB, N, hd) bf16
        k = qkv[:, :, C + h * hd:C + (h + 1) * hd]
        v = qkv[:, :, 2 * C + h * hd:2 * C + (h + 1) * hd]
        sc = jnp.einsum("bnd,bmd->bnm", q, k,
                        preferred_element_type=jnp.float32)              # (WB, N, N) f32
        sc = sc + rpb_ref[h][None, :, :]
        sc = sc - jnp.max(sc, axis=-1, keepdims=True)
        e = jnp.exp(sc)
        p = e * pl.reciprocal(jnp.sum(e, axis=-1, keepdims=True), approx=True)
        oh = jnp.einsum("bnm,bmd->bnd", p.astype(MATMUL_DTYPE), v,
                        preferred_element_type=jnp.float32)              # (WB, N, hd)
        head_outs.append(oh.astype(MATMUL_DTYPE))
    attn = jnp.concatenate(head_outs, axis=-1).reshape(WB * N, C)        # bf16

    proj = jnp.dot(attn, wp_ref[...], preferred_element_type=jnp.float32) + bp_ref[...]
    o_ref[...] = (x + proj.reshape(WB, N, C)).astype(o_ref.dtype)        # fused first residual


def _mlp_kernel(h_ref, g2_ref, b2_ref, w1_ref, bb1_ref, w2_ref, bb2_ref, o_ref):
    """norm2 + Linear + GELU(tanh) + Linear + residual for a tile of token rows."""
    h = h_ref[...].astype(jnp.float32)                       # (TM, C)
    C = h.shape[-1]

    mean = jnp.sum(h, axis=-1, keepdims=True) * (1.0 / C)
    d = h - mean
    var = jnp.sum(d * d, axis=-1, keepdims=True) * (1.0 / C)
    inv = jax.lax.rsqrt(var + EPS)
    y = d * (inv * g2_ref[...]) + b2_ref[...]

    z = jnp.dot(y.astype(MATMUL_DTYPE), w1_ref[...],
                preferred_element_type=jnp.float32) + bb1_ref[...]
    z = _gelu_tanh(z)
    out = jnp.dot(z.astype(MATMUL_DTYPE), w2_ref[...],
                  preferred_element_type=jnp.float32) + bb2_ref[...]
    o_ref[...] = (h + out).astype(o_ref.dtype)


# ----------------------------- VMEM-aware tile choosers -----------------------------

def _attn_tile_bytes(wb, n, c, num_heads):
    rows = wb * n
    b = 2 * (2 * rows * c * 2)                     # x in + out tiles (bf16), double-buffered
    b += 2 * rows * 4                              # mask rows (f32), worst case
    b += rows * 3 * c * (4 + 2)                    # qkv f32 + its bf16 copy
    b += wb * num_heads * n * n * (4 + 4 + 2)      # scores, exp, probs (bf16)
    b += rows * c * (2 + 4)                        # concat(bf16) + proj(f32)
    b += 2 * (c * 3 * c + c * c) * 2               # qkv / proj weights (bf16), double-buffered
    b += 2 * num_heads * n * n * 4                 # relative-position bias, double-buffered
    return b


def _mlp_tile_bytes(tm, c, hidden):
    b = 2 * tm * c * 2                             # input tile (bf16), double-buffered
    b += 2 * tm * c * 4                            # output tile (f32), double-buffered
    b += tm * c * 4                                # normalized activations
    b += tm * hidden * (4 + 2 + 4)                 # z f32, z bf16, gelu f32
    b += tm * c * 4                                # mlp output f32
    b += 2 * (c * hidden * 2) * 2                  # both weights (bf16), double-buffered
    return b


def _choose_window_block(num_windows, n, c, num_heads,
                         budget=_TILE_VMEM_BUDGET, max_rows=2048):
    wb_max = 1
    for wb in range(1, num_windows + 1):
        if wb * n > max_rows:
            break
        if _attn_tile_bytes(wb, n, c, num_heads) > budget:
            break
        wb_max = wb
    # keep >= 2 grid steps so both v7x TensorCores get work and the pipeline can overlap
    if num_windows >= 2:
        wb_max = min(wb_max, max(1, (num_windows + 1) // 2))
    # prefer an exact divisor close to the max (no padded windows); otherwise pad the grid
    for wb in range(wb_max, 0, -1):
        if num_windows % wb == 0 and 2 * wb >= wb_max:
            return wb, num_windows
    return wb_max, _round_up(num_windows, wb_max)


def _choose_row_tile(total_rows, c, hidden, budget=_TILE_VMEM_BUDGET, max_tile=1024):
    cap = min(max_tile, _round_up(total_rows, 8))
    if total_rows >= 16:
        cap = min(cap, _round_up(pl.cdiv(total_rows, 2), 8))   # >= 2 grid steps (megacore)
    tm = 8
    for t in range(8, cap + 1, 8):
        if _mlp_tile_bytes(t, c, hidden) > budget:
            break
        tm = t
    return tm, _round_up(total_rows, tm)


# ----------------------------- pallas_call wrappers -----------------------------

def _attn_call(windows, mask, prep, *, num_heads, wb):
    NWp, N, C = windows.shape
    has_mask = mask is not None
    kernel = functools.partial(_window_attn_kernel, num_heads=num_heads, has_mask=has_mask)

    in_specs = [pl.BlockSpec((wb, N, C), lambda i: (i, 0, 0))]
    args = [windows]
    if has_mask:
        # small, lane-dense, kept resident in full; sliced per block inside the kernel via pl.ds
        in_specs.append(pl.BlockSpec((NWp, N), lambda i: (0, 0)))
        args.append(mask)
    in_specs += [
        pl.BlockSpec((1, C), lambda i: (0, 0)),
        pl.BlockSpec((1, C), lambda i: (0, 0)),
        pl.BlockSpec((C, 3 * C), lambda i: (0, 0)),
        pl.BlockSpec((1, 3 * C), lambda i: (0, 0)),
        pl.BlockSpec((num_heads, N, N), lambda i: (0, 0, 0)),
        pl.BlockSpec((C, C), lambda i: (0, 0)),
        pl.BlockSpec((1, C), lambda i: (0, 0)),
    ]
    args += [prep["norm1_g"], prep["norm1_b"], prep["wqkv_t"], prep["bqkv"],
             prep["rpb"], prep["wproj_t"], prep["bproj"]]

    return pl.pallas_call(
        kernel,
        out_shape=jax.ShapeDtypeStruct((NWp, N, C), ACT_DTYPE),
        grid=(NWp // wb,),
        in_specs=in_specs,
        out_specs=pl.BlockSpec((wb, N, C), lambda i: (i, 0, 0)),
        compiler_params=pltpu.CompilerParams(
            dimension_semantics=("parallel",),
            vmem_limit_bytes=VMEM_LIMIT_BYTES),
    )(*args)


def _mlp_call(h, prep, *, tm):
    Tp, C = h.shape
    hidden = prep["mlp_w1_t"].shape[1]
    # NOTE: input is bf16, output f32 (final block output), so input_output_aliases is not applicable.
    return pl.pallas_call(
        _mlp_kernel,
        out_shape=jax.ShapeDtypeStruct((Tp, C), jnp.float32),
        grid=(Tp // tm,),
        in_specs=[
            pl.BlockSpec((tm, C), lambda i: (i, 0)),
            pl.BlockSpec((1, C), lambda i: (0, 0)),
            pl.BlockSpec((1, C), lambda i: (0, 0)),
            pl.BlockSpec((C, hidden), lambda i: (0, 0)),
            pl.BlockSpec((1, hidden), lambda i: (0, 0)),
            pl.BlockSpec((hidden, C), lambda i: (0, 0)),
            pl.BlockSpec((1, C), lambda i: (0, 0)),
        ],
        out_specs=pl.BlockSpec((tm, C), lambda i: (i, 0)),
        compiler_params=pltpu.CompilerParams(
            dimension_semantics=("parallel",),
            vmem_limit_bytes=VMEM_LIMIT_BYTES),
    )(h, prep["norm2_g"], prep["norm2_b"], prep["mlp_w1_t"], prep["mlp_b1"],
      prep["mlp_w2_t"], prep["mlp_b2"])


# ----------------------------- forward pass -----------------------------

def csa_block_forward(x, prep, *, num_heads):
    B, C, H, W = x.shape
    assert C % num_heads == 0, "dim must be divisible by num_heads"
    ws = get_dynamic_window_size((H, W))
    N = ws * ws
    assert prep["rpb"].shape[-1] == N, "prepared params were built for another window size"

    # ---- layout-only prologue (single bf16 activation copy) ----
    x_nhwc = jnp.transpose(x, (0, 2, 3, 1)).astype(ACT_DTYPE)          # (B, H, W, C) bf16
    pad_h = (-H) % ws
    pad_w = (-W) % ws
    Hp, Wp = H + pad_h, W + pad_w
    xp = jnp.pad(x_nhwc, ((0, 0), (0, pad_h), (0, pad_w), (0, 0)))
    nHw, nWw = Hp // ws, Wp // ws
    NW = B * nHw * nWw

    windows = xp.reshape(B, nHw, ws, nWw, ws, C).transpose(0, 1, 3, 2, 4, 5).reshape(NW, N, C)

    mask = None
    if pad_h > 0 or pad_w > 0:        # static: no mask input / multiply in the common no-pad case
        valid = jnp.pad(jnp.ones((B, H, W), jnp.float32), ((0, 0), (0, pad_h), (0, pad_w)))
        mask = valid.reshape(B, nHw, ws, nWw, ws).transpose(0, 1, 3, 2, 4).reshape(NW, N)

    wb, NWp = _choose_window_block(NW, N, C, num_heads)
    if NWp != NW:                     # pad window count to a multiple of the block (not WB=1 fallback)
        windows = jnp.pad(windows, ((0, NWp - NW), (0, 0), (0, 0)))
        if mask is not None:
            mask = jnp.pad(mask, ((0, NWp - NW), (0, 0)))

    # ---- kernel 1: norm1 + window MHSA + residual (bf16 in / bf16 out) ----
    attn = _attn_call(windows, mask, prep, num_heads=num_heads, wb=wb)[:NW]   # (NW, N, C) bf16

    # ---- kernel 2: norm2 + MLP + residual, run directly on the window tokens
    # (window reverse / crop deferred: padded tokens are computed then dropped) ----
    T = NW * N
    hidden = prep["mlp_w1_t"].shape[1]
    h2 = attn.reshape(T, C)
    tm, Tp = _choose_row_tile(T, C, hidden)
    if Tp != T:
        h2 = jnp.pad(h2, ((0, Tp - T), (0, 0)))
    out = _mlp_call(h2, prep, tm=tm)[:T]                                      # (T, C) f32

    # ---- single layout epilogue: window reverse + crop + NHWC -> NCHW ----
    y = out.reshape(B, nHw, nWw, ws, ws, C).transpose(0, 1, 3, 2, 4, 5).reshape(B, Hp, Wp, C)
    y = y[:, :H, :W, :]
    return jnp.transpose(y, (0, 3, 1, 2))


# ----------------------------- params -----------------------------

def init_csa_params(dim, num_heads, window_size, mlp_ratio, key):
    hidden = int(dim * mlp_ratio)
    ks = jax.random.split(key, 13)

    def linear_w(k, fan_in, shape):
        bound = 1.0 / np.sqrt(fan_in)
        return jax.random.uniform(k, shape, jnp.float32, -bound, bound)

    table = (2 * window_size - 1) ** 2
    # norm affines are randomized slightly (instead of ones/zeros) to exercise the affine path;
    # the computation graph is unchanged.
    return {
        "norm1_g": 1.0 + 0.1 * jax.random.normal(ks[0], (dim,), jnp.float32),
        "norm1_b": 0.1 * jax.random.normal(ks[1], (dim,), jnp.float32),
        "norm2_g": 1.0 + 0.1 * jax.random.normal(ks[2], (dim,), jnp.float32),
        "norm2_b": 0.1 * jax.random.normal(ks[3], (dim,), jnp.float32),
        "rpb_table": 0.02 * jax.random.normal(ks[4], (table, num_heads), jnp.float32),
        "wqkv": linear_w(ks[5], dim, (3 * dim, dim)),
        "bqkv": linear_w(ks[6], dim, (3 * dim,)),
        "wproj": linear_w(ks[7], dim, (dim, dim)),
        "bproj": linear_w(ks[8], dim, (dim,)),
        "mlp_w1": linear_w(ks[9], dim, (hidden, dim)),
        "mlp_b1": linear_w(ks[10], dim, (hidden,)),
        "mlp_w2": linear_w(ks[11], hidden, (dim, hidden)),
        "mlp_b2": linear_w(ks[12], hidden, (dim,)),
    }


def prepare_csa_params(params, num_heads, window_size):
    """One-time, host/XLA-side weight preparation: transpose + bf16 cast, fold the q scale into
    W_q/b_q, and expand the relative-position bias table to (num_heads, N, N)."""
    C = params["norm1_g"].shape[0]
    assert C % num_heads == 0
    assert params["rpb_table"].shape[0] == (2 * window_size - 1) ** 2
    hd = C // num_heads
    scale = hd ** -0.5
    N = window_size * window_size
    hidden = params["mlp_w1"].shape[0]

    qkv_scale = jnp.concatenate(
        [jnp.full((C,), scale, jnp.float32), jnp.ones((2 * C,), jnp.float32)])
    wqkv_t = (params["wqkv"].T * qkv_scale[None, :]).astype(MATMUL_DTYPE)      # (C, 3C)
    bqkv = (params["bqkv"] * qkv_scale).reshape(1, 3 * C).astype(jnp.float32)

    rel_idx = _relative_position_index(window_size)
    rpb = params["rpb_table"][rel_idx.reshape(-1)].reshape(N, N, num_heads)
    rpb = jnp.transpose(rpb, (2, 0, 1)).astype(jnp.float32)

    return {
        "norm1_g": params["norm1_g"].reshape(1, C).astype(jnp.float32),
        "norm1_b": params["norm1_b"].reshape(1, C).astype(jnp.float32),
        "norm2_g": params["norm2_g"].reshape(1, C).astype(jnp.float32),
        "norm2_b": params["norm2_b"].reshape(1, C).astype(jnp.float32),
        "wqkv_t": wqkv_t,
        "bqkv": bqkv,
        "rpb": rpb,
        "wproj_t": params["wproj"].T.astype(MATMUL_DTYPE),
        "bproj": params["bproj"].reshape(1, C).astype(jnp.float32),
        "mlp_w1_t": params["mlp_w1"].T.astype(MATMUL_DTYPE),                   # (C, hidden)
        "mlp_b1": params["mlp_b1"].reshape(1, hidden).astype(jnp.float32),
        "mlp_w2_t": params["mlp_w2"].T.astype(MATMUL_DTYPE),                   # (hidden, C)
        "mlp_b2": params["mlp_b2"].reshape(1, C).astype(jnp.float32),
    }


# ----------------------------- pure-JAX references -----------------------------

def _layer_norm_ref(t, g, b):
    m = jnp.mean(t, axis=-1, keepdims=True)
    v = jnp.mean(jnp.square(t - m), axis=-1, keepdims=True)
    return (t - m) / jnp.sqrt(v + EPS) * g + b


def _window_ops(x_nhwc, ws):
    B, Hx, Wx, C = x_nhwc.shape
    pad_h = (-Hx) % ws
    pad_w = (-Wx) % ws
    Hp, Wp = Hx + pad_h, Wx + pad_w
    xp = jnp.pad(x_nhwc, ((0, 0), (0, pad_h), (0, pad_w), (0, 0)))
    nHw, nWw = Hp // ws, Wp // ws
    win = xp.reshape(B, nHw, ws, nWw, ws, C).transpose(0, 1, 3, 2, 4, 5).reshape(-1, ws * ws, C)
    return win, (Hp, Wp, nHw, nWw)


def _reference(x, params, num_heads):
    """Pure-f32 mirror of the PyTorch forward (exact erf GELU, exact softmax)."""
    B, C, H, W = x.shape
    ws = get_dynamic_window_size((H, W))
    N = ws * ws
    hd = C // num_heads

    xh = jnp.transpose(x.astype(jnp.float32), (0, 2, 3, 1))
    xn = _layer_norm_ref(xh, params["norm1_g"], params["norm1_b"])
    win, (Hp, Wp, nHw, nWw) = _window_ops(xn, ws)

    qkv = win @ params["wqkv"].T + params["bqkv"]
    q = qkv[..., :C].reshape(-1, N, num_heads, hd).transpose(0, 2, 1, 3) * (hd ** -0.5)
    k = qkv[..., C:2 * C].reshape(-1, N, num_heads, hd).transpose(0, 2, 1, 3)
    v = qkv[..., 2 * C:].reshape(-1, N, num_heads, hd).transpose(0, 2, 1, 3)

    rel_idx = _relative_position_index(ws)
    rpb = params["rpb_table"][rel_idx.reshape(-1)].reshape(N, N, num_heads)
    rpb = jnp.transpose(rpb, (2, 0, 1))

    attn = jnp.einsum("whnd,whmd->whnm", q, k) + rpb[None]
    attn = jax.nn.softmax(attn, axis=-1)
    out = jnp.einsum("whnm,whmd->whnd", attn, v)
    out = out.transpose(0, 2, 1, 3).reshape(-1, N, C)
    out = out @ params["wproj"].T + params["bproj"]

    y = out.reshape(B, nHw, nWw, ws, ws, C).transpose(0, 1, 3, 2, 4, 5).reshape(B, Hp, Wp, C)
    y = y[:, :H, :W, :]
    x1 = xh + y

    z = _layer_norm_ref(x1, params["norm2_g"], params["norm2_b"])
    z = z @ params["mlp_w1"].T + params["mlp_b1"]
    z = 0.5 * z * (1.0 + jax.lax.erf(z * 0.7071067811865476))             # exact GELU
    z = z @ params["mlp_w2"].T + params["mlp_b2"]
    return jnp.transpose(x1 + z, (0, 3, 1, 2))


def _reference_prepared(x, prep, num_heads):
    """Plain-JAX mirror of the kernel pipeline: bf16 activations at kernel boundaries, bf16 matmul
    operands with f32 accumulation, prepared (pre-scaled) weights, tanh GELU."""
    B, C, H, W = x.shape
    ws = get_dynamic_window_size((H, W))
    N = ws * ws
    hd = C // num_heads
    f32 = jnp.float32

    def mm(a, w):
        return jnp.dot(a.astype(MATMUL_DTYPE), w, preferred_element_type=f32)

    xh = jnp.transpose(x, (0, 2, 3, 1)).astype(ACT_DTYPE).astype(f32)      # bf16 activation rounding
    xn = _layer_norm_ref(xh, prep["norm1_g"][0], prep["norm1_b"][0])
    win, (Hp, Wp, nHw, nWw) = _window_ops(xn, ws)

    qkv = (mm(win.reshape(-1, C), prep["wqkv_t"]) + prep["bqkv"]).reshape(-1, N, 3 * C)
    q = qkv[..., :C].reshape(-1, N, num_heads, hd).transpose(0, 2, 1, 3)   # scale already folded
    k = qkv[..., C:2 * C].reshape(-1, N, num_heads, hd).transpose(0, 2, 1, 3)
    v = qkv[..., 2 * C:].reshape(-1, N, num_heads, hd).transpose(0, 2, 1, 3)

    attn = jnp.einsum("whnd,whmd->whnm", q.astype(MATMUL_DTYPE), k.astype(MATMUL_DTYPE),
                      preferred_element_type=f32) + prep["rpb"][None]
    attn = jax.nn.softmax(attn, axis=-1)
    out = jnp.einsum("whnm,whmd->whnd", attn.astype(MATMUL_DTYPE), v.astype(MATMUL_DTYPE),
                     preferred_element_type=f32)
    out = out.transpose(0, 2, 1, 3).reshape(-1, C)
    out = (mm(out, prep["wproj_t"]) + prep["bproj"]).reshape(-1, N, C)

    y = out.reshape(B, nHw, nWw, ws, ws, C).transpose(0, 1, 3, 2, 4, 5).reshape(B, Hp, Wp, C)
    y = y[:, :H, :W, :]
    x1 = (xh + y).astype(ACT_DTYPE).astype(f32)             # attention kernel writes bf16

    z = _layer_norm_ref(x1, prep["norm2_g"][0], prep["norm2_b"][0])
    z = mm(z.reshape(-1, C), prep["mlp_w1_t"]) + prep["mlp_b1"]
    z = _gelu_tanh(z)
    z = (mm(z, prep["mlp_w2_t"]) + prep["mlp_b2"]).reshape(B, H, W, C)
    return jnp.transpose(x1 + z, (0, 3, 1, 2))


# ----------------------------- demo -----------------------------

if __name__ == "__main__":
    # TODO(synk): stochastic nn.Dropout (p>0) is not implemented; with the module defaults
    # (drop=attn_drop=0.0) it is the identity, which is what is computed here.
    key = jax.random.PRNGKey(0)

    configs = [
        # (B, C, H, W, num_heads)
        (2, 128, 8, 8, 4),     # window_size=8: one window per image, no padding, lane-dense C
        (2, 128, 10, 10, 4),   # window_size=6: pads 10->12, exercises the padding/mask path
    ]

    for (B, C, H, W, num_heads) in configs:
        key, kx, kp = jax.random.split(key, 3)
        ws = get_dynamic_window_size((H, W))
        params = init_csa_params(C, num_heads, ws, 4.0, kp)
        prep = prepare_csa_params(params, num_heads, ws)      # one-time weight prep (outside jit)
        x = jax.random.normal(kx, (B, C, H, W), jnp.float32)

        fwd = jax.jit(functools.partial(csa_block_forward, num_heads=num_heads))
        out = jax.block_until_ready(fwd(x, prep))
        assert out.shape == (B, C, H, W), out.shape

        # tight check against a reference that mirrors the kernel's bf16 / tanh-GELU pipeline
        ref_match = jax.block_until_ready(_reference_prepared(x, prep, num_heads))
        np.testing.assert_allclose(np.asarray(out), np.asarray(ref_match), rtol=1e-2, atol=1e-2)

        # fidelity check against the full-f32 PyTorch-semantics reference (tolerance reflects the
        # deliberate bf16 storage of activations at kernel boundaries + bf16 matmul operands)
        ref_f32 = jax.block_until_ready(_reference(x, params, num_heads))
        np.testing.assert_allclose(np.asarray(out), np.asarray(ref_f32), rtol=5e-2, atol=1e-1)

    print("KERNEL_OK")
</pallas_src>

<mosaic_0001>
module attributes {stable_mosaic.version = 11 : i64} {
  func.func @_mlp_kernel(%arg0: i32, %arg1: memref<64x128xbf16, #tpu.memory_space<vmem>>, %arg2: memref<1x128xf32, #tpu.memory_space<vmem>>, %arg3: memref<1x128xf32, #tpu.memory_space<vmem>>, %arg4: memref<128x512xbf16, #tpu.memory_space<vmem>>, %arg5: memref<1x512xf32, #tpu.memory_space<vmem>>, %arg6: memref<512x128xbf16, #tpu.memory_space<vmem>>, %arg7: memref<1x128xf32, #tpu.memory_space<vmem>>, %arg8: memref<64x128xf32, #tpu.memory_space<vmem>>) attributes {dimension_semantics = [#tpu.dimension_semantics<parallel>], iteration_bounds = array<i64: 2>, scalar_prefetch = 0 : i64, scratch_operands = 0 : i64, tpu.core_type = #tpu.core_type<tc>, window_params = [{transform_indices = @transform_0, window_bounds = array<i64: 64, 128>}, {pipeline_mode = #tpu.pipeline_mode<synchronous>, transform_indices = @transform_1, window_bounds = array<i64: 1, 128>}, {pipeline_mode = #tpu.pipeline_mode<synchronous>, transform_indices = @transform_2, window_bounds = array<i64: 1, 128>}, {pipeline_mode = #tpu.pipeline_mode<synchronous>, transform_indices = @transform_3, window_bounds = array<i64: 128, 512>}, {pipeline_mode = #tpu.pipeline_mode<synchronous>, transform_indices = @transform_4, window_bounds = array<i64: 1, 512>}, {pipeline_mode = #tpu.pipeline_mode<synchronous>, transform_indices = @transform_5, window_bounds = array<i64: 512, 128>}, {pipeline_mode = #tpu.pipeline_mode<synchronous>, transform_indices = @transform_6, window_bounds = array<i64: 1, 128>}, {transform_indices = @transform_7, window_bounds = array<i64: 64, 128>}]} {
    %c0 = arith.constant 0 : index
    %c0_0 = arith.constant 0 : index
    %0 = vector.load %arg1[%c0, %c0_0] : memref<64x128xbf16, #tpu.memory_space<vmem>>, vector<64x128xbf16>
    %1 = arith.extf %0 : vector<64x128xbf16> to vector<64x128xf32>
    %cst = arith.constant dense<0.000000e+00> : vector<64xf32>
    %2 = vector.multi_reduction <add>, %1, %cst [1] : vector<64x128xf32> to vector<64xf32>
    %3 = vector.shape_cast %2 : vector<64xf32> to vector<64x1xf32>
    %cst_1 = arith.constant 7.812500e-03 : f32
    %4 = vector.broadcast %cst_1 : f32 to vector<64x1xf32>
    %5 = arith.mulf %3, %4 : vector<64x1xf32>
    %6 = vector.broadcast %5 : vector<64x1xf32> to vector<64x128xf32>
    %7 = arith.subf %1, %6 : vector<64x128xf32>
    %8 = arith.mulf %7, %7 : vector<64x128xf32>
    %cst_2 = arith.constant dense<0.000000e+00> : vector<64xf32>
    %9 = vector.multi_reduction <add>, %8, %cst_2 [1] : vector<64x128xf32> to vector<64xf32>
    %10 = vector.shape_cast %9 : vector<64xf32> to vector<64x1xf32>
    %cst_3 = arith.constant 7.812500e-03 : f32
    %11 = vector.broadcast %cst_3 : f32 to vector<64x1xf32>
    %12 = arith.mulf %10, %11 : vector<64x1xf32>
    %cst_4 = arith.constant 9.99999974E-6 : f32
    %13 = vector.broadcast %cst_4 : f32 to vector<64x1xf32>
    %14 = arith.addf %12, %13 : vector<64x1xf32>
    %15 = math.rsqrt %14 : vector<64x1xf32>
    %c0_5 = arith.constant 0 : index
    %c0_6 = arith.constant 0 : index
    %16 = vector.load %arg2[%c0_5, %c0_6] : memref<1x128xf32, #tpu.memory_space<vmem>>, vector<1x128xf32>
    %17 = vector.broadcast %15 : vector<64x1xf32> to vector<64x128xf32>
    %18 = vector.broadcast %16 : vector<1x128xf32> to vector<64x128xf32>
    %19 = arith.mulf %17, %18 : vector<64x128xf32>
    %20 = arith.mulf %7, %19 : vector<64x128xf32>
    %c0_7 = arith.constant 0 : index
    %c0_8 = arith.constant 0 : index
    %21 = vector.load %arg3[%c0_7, %c0_8] : memref<1x128xf32, #tpu.memory_space<vmem>>, vector<1x128xf32>
    %22 = vector.broadcast %21 : vector<1x128xf32> to vector<64x128xf32>
    %23 = arith.addf %20, %22 : vector<64x128xf32>
    %24 = arith.truncf %23 : vector<64x128xf32> to vector<64x128xbf16>
    %c0_9 = arith.constant 0 : index
    %c0_10 = arith.constant 0 : index
    %25 = vector.load %arg4[%c0_9, %c0_10] : memref<128x512xbf16, #tpu.memory_space<vmem>>, vector<128x512xbf16>
    %cst_11 = arith.constant dense<0.000000e+00> : vector<64x512xf32>
    %26 = tpu.matmul %24, %25, %cst_11 {dimension_numbers = #tpu.dot_dimension_numbers<[1], [0], [0], [1], [0, 0, 1, 1], [], []>} : vector<64x128xbf16>, vector<128x512xbf16>, vector<64x512xf32> -> vector<64x512xf32>
    %c0_12 = arith.constant 0 : index
    %c0_13 = arith.constant 0 : index
    %27 = vector.load %arg5[%c0_12, %c0_13] : memref<1x512xf32, #tpu.memory_space<vmem>>, vector<1x512xf32>
    %28 = vector.broadcast %27 : vector<1x512xf32> to vector<64x512xf32>
    %29 = arith.addf %26, %28 : vector<64x512xf32>
    %cst_14 = arith.constant 5.000000e-01 : f32
    %30 = vector.broadcast %cst_14 : f32 to vector<64x512xf32>
    %31 = arith.mulf %30, %29 : vector<64x512xf32>
    %cst_15 = arith.constant 4.471500e-02 : f32
    %32 = vector.broadcast %cst_15 : f32 to vector<64x512xf32>
    %33 = arith.mulf %32, %29 : vector<64x512xf32>
    %34 = arith.mulf %33, %29 : vector<64x512xf32>
    %35 = arith.mulf %34, %29 : vector<64x512xf32>
    %36 = arith.addf %29, %35 : vector<64x512xf32>
    %cst_16 = arith.constant 0.797884583 : f32
    %37 = vector.broadcast %cst_16 : f32 to vector<64x512xf32>
    %38 = arith.mulf %37, %36 : vector<64x512xf32>
    %39 = math.tanh %38 : vector<64x512xf32>
    %cst_17 = arith.constant 1.000000e+00 : f32
    %40 = vector.broadcast %cst_17 : f32 to vector<64x512xf32>
    %41 = arith.addf %40, %39 : vector<64x512xf32>
    %42 = arith.mulf %31, %41 : vector<64x512xf32>
    %43 = arith.truncf %42 : vector<64x512xf32> to vector<64x512xbf16>
    %c0_18 = arith.constant 0 : index
    %c0_19 = arith.constant 0 : index
    %44 = vector.load %arg6[%c0_18, %c0_19] : memref<512x128xbf16, #tpu.memory_space<vmem>>, vector<512x128xbf16>
    %cst_20 = arith.constant dense<0.000000e+00> : vector<64x128xf32>
    %45 = tpu.matmul %43, %44, %cst_20 {dimension_numbers = #tpu.dot_dimension_numbers<[1], [0], [0], [1], [0, 0, 1, 1], [], []>} : vector<64x512xbf16>, vector<512x128xbf16>, vector<64x128xf32> -> vector<64x128xf32>
    %c0_21 = arith.constant 0 : index
    %c0_22 = arith.constant 0 : index
    %46 = vector.load %arg7[%c0_21, %c0_22] : memref<1x128xf32, #tpu.memory_space<vmem>>, vector<1x128xf32>
    %47 = vector.broadcast %46 : vector<1x128xf32> to vector<64x128xf32>
    %48 = arith.addf %45, %47 : vector<64x128xf32>
    %49 = arith.addf %1, %48 : vector<64x128xf32>
    %c0_23 = arith.constant 0 : index
    %c0_24 = arith.constant 0 : index
    %50 = vector.load %arg8[%c0_23, %c0_24] : memref<64x128xf32, #tpu.memory_space<vmem>>, vector<64x128xf32>
    tpu.vector_store %arg8[%c0_23, %c0_24], %49 {strides = array<i32>} : memref<64x128xf32, #tpu.memory_space<vmem>>, vector<64x128xf32>,
    return
  }
  func.func @transform_0(%arg0: i32) -> (i32, i32) {
    %c0_i32 = arith.constant 0 : i32
    %c0_i32_0 = arith.constant 0 : i32
    return %arg0, %c0_i32 : i32, i32
  }
  func.func @transform_1(%arg0: i32) -> (i32, i32) {
    %c0_i32 = arith.constant 0 : i32
    %c0_i32_0 = arith.constant 0 : i32
    %c0_i32_1 = arith.constant 0 : i32
    return %c0_i32, %c0_i32_0 : i32, i32
  }
  func.func @transform_2(%arg0: i32) -> (i32, i32) {
    %c0_i32 = arith.constant 0 : i32
    %c0_i32_0 = arith.constant 0 : i32
    %c0_i32_1 = arith.constant 0 : i32
    return %c0_i32, %c0_i32_0 : i32, i32
  }
  func.func @transform_3(%arg0: i32) -> (i32, i32) {
    %c0_i32 = arith.constant 0 : i32
    %c0_i32_0 = arith.constant 0 : i32
    %c0_i32_1 = arith.constant 0 : i32
    return %c0_i32, %c0_i32_0 : i32, i32
  }
  func.func @transform_4(%arg0: i32) -> (i32, i32) {
    %c0_i32 = arith.constant 0 : i32
    %c0_i32_0 = arith.constant 0 : i32
    %c0_i32_1 = arith.constant 0 : i32
    return %c0_i32, %c0_i32_0 : i32, i32
  }
  func.func @transform_5(%arg0: i32) -> (i32, i32) {
    %c0_i32 = arith.constant 0 : i32
    %c0_i32_0 = arith.constant 0 : i32
    %c0_i32_1 = arith.constant 0 : i32
    return %c0_i32, %c0_i32_0 : i32, i32
  }
  func.func @transform_6(%arg0: i32) -> (i32, i32) {
    %c0_i32 = arith.constant 0 : i32
    %c0_i32_0 = arith.constant 0 : i32
    %c0_i32_1 = arith.constant 0 : i32
    return %c0_i32, %c0_i32_0 : i32, i32
  }
  func.func @transform_7(%arg0: i32) -> (i32, i32) {
    %c0_i32 = arith.constant 0 : i32
    %c0_i32_0 = arith.constant 0 : i32
    return %arg0, %c0_i32 : i32, i32
  }
}

module attributes {stable_mosaic.version = 11 : i64} {
  func.func @_window_attn_kernel(%arg0: i32, %arg1: memref<1x64x128xbf16, #tpu.memory_space<vmem>>, %arg2: memref<1x128xf32, #tpu.memory_space<vmem>>, %arg3: memref<1x128xf32, #tpu.memory_space<vmem>>, %arg4: memref<128x384xbf16, #tpu.memory_space<vmem>>, %arg5: memref<1x384xf32, #tpu.memory_space<vmem>>, %arg6: memref<4x64x64xf32, #tpu.memory_space<vmem>>, %arg7: memref<128x128xbf16, #tpu.memory_space<vmem>>, %arg8: memref<1x128xf32, #tpu.memory_space<vmem>>, %arg9: memref<1x64x128xbf16, #tpu.memory_space<vmem>>) attributes {dimension_semantics = [#tpu.dimension_semantics<parallel>], iteration_bounds = array<i64: 2>, scalar_prefetch = 0 : i64, scratch_operands = 0 : i64, tpu.core_type = #tpu.core_type<tc>, window_params = [{transform_indices = @transform_0, window_bounds = array<i64: 1, 64, 128>}, {pipeline_mode = #tpu.pipeline_mode<synchronous>, transform_indices = @transform_1, window_bounds = array<i64: 1, 128>}, {pipeline_mode = #tpu.pipeline_mode<synchronous>, transform_indices = @transform_2, window_bounds = array<i64: 1, 128>}, {pipeline_mode = #tpu.pipeline_mode<synchronous>, transform_indices = @transform_3, window_bounds = array<i64: 128, 384>}, {pipeline_mode = #tpu.pipeline_mode<synchronous>, transform_indices = @transform_4, window_bounds = array<i64: 1, 384>}, {pipeline_mode = #tpu.pipeline_mode<synchronous>, transform_indices = @transform_5, window_bounds = array<i64: 4, 64, 64>}, {pipeline_mode = #tpu.pipeline_mode<synchronous>, transform_indices = @transform_6, window_bounds = array<i64: 128, 128>}, {pipeline_mode = #tpu.pipeline_mode<synchronous>, transform_indices = @transform_7, window_bounds = array<i64: 1, 128>}, {transform_indices = @transform_8, window_bounds = array<i64: 1, 64, 128>}]} {
    %c0 = arith.constant 0 : index
    %c0_0 = arith.constant 0 : index
    %c0_1 = arith.constant 0 : index
    %0 = vector.load %arg1[%c0, %c0_0, %c0_1] : memref<1x64x128xbf16, #tpu.memory_space<vmem>>, vector<1x64x128xbf16>
    %1 = arith.extf %0 : vector<1x64x128xbf16> to vector<1x64x128xf32>
    %2 = vector.shape_cast %1 : vector<1x64x128xf32> to vector<64x128xf32>
    %cst = arith.constant dense<0.000000e+00> : vector<64xf32>
    %3 = vector.multi_reduction <add>, %2, %cst [1] : vector<64x128xf32> to vector<64xf32>
    %4 = vector.shape_cast %3 : vector<64xf32> to vector<64x1xf32>
    %cst_2 = arith.constant 7.812500e-03 : f32
    %5 = vector.broadcast %cst_2 : f32 to vector<64x1xf32>
    %6 = arith.mulf %4, %5 : vector<64x1xf32>
    %7 = vector.broadcast %6 : vector<64x1xf32> to vector<64x128xf32>
    %8 = arith.subf %2, %7 : vector<64x128xf32>
    %9 = arith.mulf %8, %8 : vector<64x128xf32>
    %cst_3 = arith.constant dense<0.000000e+00> : vector<64xf32>
    %10 = vector.multi_reduction <add>, %9, %cst_3 [1] : vector<64x128xf32> to vector<64xf32>
    %11 = vector.shape_cast %10 : vector<64xf32> to vector<64x1xf32>
    %cst_4 = arith.constant 7.812500e-03 : f32
    %12 = vector.broadcast %cst_4 : f32 to vector<64x1xf32>
    %13 = arith.mulf %11, %12 : vector<64x1xf32>
    %cst_5 = arith.constant 9.99999974E-6 : f32
    %14 = vector.broadcast %cst_5 : f32 to vector<64x1xf32>
    %15 = arith.addf %13, %14 : vector<64x1xf32>
    %16 = math.rsqrt %15 : vector<64x1xf32>
    %c0_6 = arith.constant 0 : index
    %c0_7 = arith.constant 0 : index
    %17 = vector.load %arg2[%c0_6, %c0_7] : memref<1x128xf32, #tpu.memory_space<vmem>>, vector<1x128xf32>
    %18 = vector.broadcast %16 : vector<64x1xf32> to vector<64x128xf32>
    %19 = vector.broadcast %17 : vector<1x128xf32> to vector<64x128xf32>
    %20 = arith.mulf %18, %19 : vector<64x128xf32>
    %21 = arith.mulf %8, %20 : vector<64x128xf32>
    %c0_8 = arith.constant 0 : index
    %c0_9 = arith.constant 0 : index
    %22 = vector.load %arg3[%c0_8, %c0_9] : memref<1x128xf32, #tpu.memory_space<vmem>>, vector<1x128xf32>
    %23 = vector.broadcast %22 : vector<1x128xf32> to vector<64x128xf32>
    %24 = arith.addf %21, %23 : vector<64x128xf32>
    %25 = arith.truncf %24 : vector<64x128xf32> to vector<64x128xbf16>
    %c0_10 = arith.constant 0 : index
    %c0_11 = arith.constant 0 : index
    %26 = vector.load %arg4[%c0_10, %c0_11] : memref<128x384xbf16, #tpu.memory_space<vmem>>, vector<128x384xbf16>
    %cst_12 = arith.constant dense<0.000000e+00> : vector<64x384xf32>
    %27 = tpu.matmul %25, %26, %cst_12 {dimension_numbers = #tpu.dot_dimension_numbers<[1], [0], [0], [1], [0, 0, 1, 1], [], []>} : vector<64x128xbf16>, vector<128x384xbf16>, vector<64x384xf32> -> vector<64x384xf32>
    %c0_13 = arith.constant 0 : index
    %c0_14 = arith.constant 0 : index
    %28 = vector.load %arg5[%c0_13, %c0_14] : memref<1x384xf32, #tpu.memory_space<vmem>>, vector<1x384xf32>
    %29 = vector.broadcast %28 : vector<1x384xf32> to vector<64x384xf32>
    %30 = arith.addf %27, %29 : vector<64x384xf32>
    %31 = vector.shape_cast %30 : vector<64x384xf32> to vector<1x64x384xf32>
    %32 = arith.truncf %31 : vector<1x64x384xf32> to vector<1x64x384xbf16>
    %33 = vector.extract_strided_slice %32 {offsets = [0, 0, 0], sizes = [1, 64, 32], strides = [1, 1, 1]} : vector<1x64x384xbf16> to vector<1x64x32xbf16>
    %34 = vector.extract_strided_slice %32 {offsets = [0, 0, 128], sizes = [1, 64, 32], strides = [1, 1, 1]} : vector<1x64x384xbf16> to vector<1x64x32xbf16>
    %35 = vector.extract_strided_slice %32 {offsets = [0, 0, 256], sizes = [1, 64, 32], strides = [1, 1, 1]} : vector<1x64x384xbf16> to vector<1x64x32xbf16>
    "tpu.trace_start"() <{level = 10 : i32, message = "bnd,bmd->bnm"}> : () -> ()
    %cst_15 = arith.constant dense<0.000000e+00> : vector<1x64x64xf32>
    %36 = tpu.matmul %33, %34, %cst_15 {dimension_numbers = #tpu.dot_dimension_numbers<[2], [2], [1], [1], [0, 0, 0, 1, 1, 1], [0], [0]>} : vector<1x64x32xbf16>, vector<1x64x32xbf16>, vector<1x64x64xf32> -> vector<1x64x64xf32>
    "tpu.trace_stop"() : () -> ()
    %c0_16 = arith.constant 0 : index
    %c0_17 = arith.constant 0 : index
    %c0_18 = arith.constant 0 : index
    %37 = vector.load %arg6[%c0_16, %c0_17, %c0_18] : memref<4x64x64xf32, #tpu.memory_space<vmem>>, vector<1x64x64xf32>
    %38 = vector.shape_cast %37 : vector<1x64x64xf32> to vector<64x64xf32>
    %39 = vector.shape_cast %38 : vector<64x64xf32> to vector<1x64x64xf32>
    %40 = arith.addf %36, %39 : vector<1x64x64xf32>
    %cst_19 = arith.constant dense<0xFF800000> : vector<1x64xf32>
    %41 = vector.multi_reduction <maximumf>, %40, %cst_19 [2] : vector<1x64x64xf32> to vector<1x64xf32>
    %42 = vector.shape_cast %41 : vector<1x64xf32> to vector<1x64x1xf32>
    %43 = vector.broadcast %42 : vector<1x64x1xf32> to vector<1x64x64xf32>
    %44 = arith.subf %40, %43 : vector<1x64x64xf32>
    %45 = math.exp %44 : vector<1x64x64xf32>
    %cst_20 = arith.constant dense<0.000000e+00> : vector<1x64xf32>
    %46 = vector.multi_reduction <add>, %45, %cst_20 [2] : vector<1x64x64xf32> to vector<1x64xf32>
    %47 = vector.shape_cast %46 : vector<1x64xf32> to vector<1x64x1xf32>
    %48 = tpu.reciprocal %47 {approx = true} : vector<1x64x1xf32> -> vector<1x64x1xf32>
    %49 = vector.broadcast %48 : vector<1x64x1xf32> to vector<1x64x64xf32>
    %50 = arith.mulf %45, %49 : vector<1x64x64xf32>
    %51 = arith.truncf %50 : vector<1x64x64xf32> to vector<1x64x64xbf16>
    "tpu.trace_start"() <{level = 10 : i32, message = "bnm,bmd->bnd"}> : () -> ()
    %cst_21 = arith.constant dense<0.000000e+00> : vector<1x64x32xf32>
    %52 = tpu.matmul %51, %35, %cst_21 {dimension_numbers = #tpu.dot_dimension_numbers<[2], [1], [1], [2], [0, 0, 0, 1, 1, 2], [0], [0]>} : vector<1x64x64xbf16>, vector<1x64x32xbf16>, vector<1x64x32xf32> -> vector<1x64x32xf32>
    "tpu.trace_stop"() : () -> ()
    %53 = arith.truncf %52 : vector<1x64x32xf32> to vector<1x64x32xbf16>
    %54 = vector.extract_strided_slice %32 {offsets = [0, 0, 32], sizes = [1, 64, 32], strides = [1, 1, 1]} : vector<1x64x384xbf16> to vector<1x64x32xbf16>
    %55 = vector.extract_strided_slice %32 {offsets = [0, 0, 160], sizes = [1, 64, 32], strides = [1, 1, 1]} : vector<1x64x384xbf16> to vector<1x64x32xbf16>
    %56 = vector.extract_strided_slice %32 {offsets = [0, 0, 288], sizes = [1, 64, 32], strides = [1, 1, 1]} : vector<1x64x384xbf16> to vector<1x64x32xbf16>
    "tpu.trace_start"() <{level = 10 : i32, message = "bnd,bmd->bnm"}> : () -> ()
    %cst_22 = arith.constant dense<0.000000e+00> : vector<1x64x64xf32>
    %57 = tpu.matmul %54, %55, %cst_22 {dimension_numbers = #tpu.dot_dimension_numbers<[2], [2], [1], [1], [0, 0, 0, 1, 1, 1], [0], [0]>} : vector<1x64x32xbf16>, vector<1x64x32xbf16>, vector<1x64x64xf32> -> vector<1x64x64xf32>
    "tpu.trace_stop"() : () -> ()
    %c1 = arith.constant 1 : index
    %c0_23 = arith.constant 0 : index
    %c0_24 = arith.constant 0 : index
    %58 = vector.load %arg6[%c1, %c0_23, %c0_24] : memref<4x64x64xf32, #tpu.memory_space<vmem>>, vector<1x64x64xf32>
    %59 = vector.shape_cast %58 : vector<1x64x64xf32> to vector<64x64xf32>
    %60 = vector.shape_cast %59 : vector<64x64xf32> to vector<1x64x64xf32>
    %61 = arith.addf %57, %60 : vector<1x64x64xf32>
    %cst_25 = arith.constant dense<0xFF800000> : vector<1x64xf32>
    %62 = vector.multi_reduction <maximumf>, %61, %cst_25 [2] : vector<1x64x64xf32> to vector<1x64xf32>
    %63 = vector.shape_cast %62 : vector<1x64xf32> to vector<1x64x1xf32>
    %64 = vector.broadcast %63 : vector<1x64x1xf32> to vector<1x64x64xf32>
    %65 = arith.subf %61, %64 : vector<1x64x64xf32>
    %66 = math.exp %65 : vector<1x64x64xf32>
    %cst_26 = arith.constant dense<0.000000e+00> : vector<1x64xf32>
    %67 = vector.multi_reduction <add>, %66, %cst_26 [2] : vector<1x64x64xf32> to vector<1x64xf32>
    %68 = vector.shape_cast %67 : vector<1x64xf32> to vector<1x64x1xf32>
    %69 = tpu.reciprocal %68 {approx = true} : vector<1x64x1xf32> -> vector<1x64x1xf32>
    %70 = vector.broadcast %69 : vector<1x64x1xf32> to vector<1x64x64xf32>
    %71 = arith.mulf %66, %70 : vector<1x64x64xf32>
    %72 = arith.truncf %71 : vector<1x64x64xf32> to vector<1x64x64xbf16>
    "tpu.trace_start"() <{level = 10 : i32, message = "bnm,bmd->bnd"}> : () -> ()
    %cst_27 = arith.constant dense<0.000000e+00> : vector<1x64x32xf32>
    %73 = tpu.matmul %72, %56, %cst_27 {dimension_numbers = #tpu.dot_dimension_numbers<[2], [1], [1], [2], [0, 0, 0, 1, 1, 2], [0], [0]>} : vector<1x64x64xbf16>, vector<1x64x32xbf16>, vector<1x64x32xf32> -> vector<1x64x32xf32>
    "tpu.trace_stop"() : () -> ()
    %74 = arith.truncf %73 : vector<1x64x32xf32> to vector<1x64x32xbf16>
    %75 = vector.extract_strided_slice %32 {offsets = [0, 0, 64], sizes = [1, 64, 32], strides = [1, 1, 1]} : vector<1x64x384xbf16> to vector<1x64x32xbf16>
    %76 = vector.extract_strided_slice %32 {offsets = [0, 0, 192], sizes = [1, 64, 32], strides = [1, 1, 1]} : vector<1x64x384xbf16> to vector<1x64x32xbf16>
    %77 = vector.extract_strided_slice %32 {offsets = [0, 0, 320], sizes = [1, 64, 32], strides = [1, 1, 1]} : vector<1x64x384xbf16> to vector<1x64x32xbf16>
    "tpu.trace_start"() <{level = 10 : i32, message = "bnd,bmd->bnm"}> : () -> ()
    %cst_28 = arith.constant dense<0.000000e+00> : vector<1x64x64xf32>
    %78 = tpu.matmul %75, %76, %cst_28 {dimension_numbers = #tpu.dot_dimension_numbers<[2], [2], [1], [1], [0, 0, 0, 1, 1, 1], [0], [0]>} : vector<1x64x32xbf16>, vector<1x64x32xbf16>, vector<1x64x64xf32> -> vector<1x64x64xf32>
    "tpu.trace_stop"() : () -> ()
    %c2 = arith.constant 2 : index
    %c0_29 = arith.constant 0 : index
    %c0_30 = arith.constant 0 : index
    %79 = vector.load %arg6[%c2, %c0_29, %c0_30] : memref<4x64x64xf32, #tpu.memory_space<vmem>>, vector<1x64x64xf32>
    %80 = vector.shape_cast %79 : vector<1x64x64xf32> to vector<64x64xf32>
    %81 = vector.shape_cast %80 : vector<64x64xf32> to vector<1x64x64xf32>
    %82 = arith.addf %78, %81 : vector<1x64x64xf32>
    %cst_31 = arith.constant dense<0xFF800000> : vector<1x64xf32>
    %83 = vector.multi_reduction <maximumf>, %82, %cst_31 [2] : vector<1x64x64xf32> to vector<1x64xf32>
    %84 = vector.shape_cast %83 : vector<1x64xf32> to vector<1x64x1xf32>
    %85 = vector.broadcast %84 : vector<1x64x1xf32> to vector<1x64x64xf32>
    %86 = arith.subf %82, %85 : vector<1x64x64xf32>
    %87 = math.exp %86 : vector<1x64x64xf32>
    %cst_32 = arith.constant dense<0.000000e+00> : vector<1x64xf32>
    %88 = vector.multi_reduction <add>, %87, %cst_32 [2] : vector<1x64x64xf32> to vector<1x64xf32>
    %89 = vector.shape_cast %88 : vector<1x64xf32> to vector<1x64x1xf32>
    %90 = tpu.reciprocal %89 {approx = true} : vector<1x64x1xf32> -> vector<1x64x1xf32>
    %91 = vector.broadcast %90 : vector<1x64x1xf32> to vector<1x64x64xf32>
    %92 = arith.mulf %87, %91 : vector<1x64x64xf32>
    %93 = arith.truncf %92 : vector<1x64x64xf32> to vector<1x64x64xbf16>
    "tpu.trace_start"() <{level = 10 : i32, message = "bnm,bmd->bnd"}> : () -> ()
    %cst_33 = arith.constant dense<0.000000e+00> : vector<1x64x32xf32>
    %94 = tpu.matmul %93, %77, %cst_33 {dimension_numbers = #tpu.dot_dimension_numbers<[2], [1], [1], [2], [0, 0, 0, 1, 1, 2], [0], [0]>} : vector<1x64x64xbf16>, vector<1x64x32xbf16>, vector<1x64x32xf32> -> vector<1x64x32xf32>
    "tpu.trace_stop"() : () -> ()
    %95 = arith.truncf %94 : vector<1x64x32xf32> to vector<1x64x32xbf16>
    %96 = vector.extract_strided_slice %32 {offsets = [0, 0, 96], sizes = [1, 64, 32], strides = [1, 1, 1]} : vector<1x64x384xbf16> to vector<1x64x32xbf16>
    %97 = vector.extract_strided_slice %32 {offsets = [0, 0, 224], sizes = [1, 64, 32], strides = [1, 1, 1]} : vector<1x64x384xbf16> to vector<1x64x32xbf16>
    %98 = vector.extract_strided_slice %32 {offsets = [0, 0, 352], sizes = [1, 64, 32], strides = [1, 1, 1]} : vector<1x64x384xbf16> to vector<1x64x32xbf16>
    "tpu.trace_start"() <{level = 10 : i32, message = "bnd,bmd->bnm"}> : () -> ()
    %cst_34 = arith.constant dense<0.000000e+00> : vector<1x64x64xf32>
    %99 = tpu.matmul %96, %97, %cst_34 {dimension_numbers = #tpu.dot_dimension_numbers<[2], [2], [1], [1], [0, 0, 0, 1, 1, 1], [0], [0]>} : vector<1x64x32xbf16>, vector<1x64x32xbf16>, vector<1x64x64xf32> -> vector<1x64x64xf32>
    "tpu.trace_stop"() : () -> ()
    %c3 = arith.constant 3 : index
    %c0_35 = arith.constant 0 : index
    %c0_36 = arith.constant 0 : index
    %100 = vector.load %arg6[%c3, %c0_35, %c0_36] : memref<4x64x64xf32, #tpu.memory_space<vmem>>, vector<1x64x64xf32>
    %101 = vector.shape_cast %100 : vector<1x64x64xf32> to vector<64x64xf32>
    %102 = vector.shape_cast %101 : vector<64x64xf32> to vector<1x64x64xf32>
    %103 = arith.addf %99, %102 : vector<1x64x64xf32>
    %cst_37 = arith.constant dense<0xFF800000> : vector<1x64xf32>
    %104 = vector.multi_reduction <maximumf>, %103, %cst_37 [2] : vector<1x64x64xf32> to vector<1x64xf32>
    %105 = vector.shape_cast %104 : vector<1x64xf32> to vector<1x64x1xf32>
    %106 = vector.broadcast %105 : vector<1x64x1xf32> to vector<1x64x64xf32>
    %107 = arith.subf %103, %106 : vector<1x64x64xf32>
    %108 = math.exp %107 : vector<1x64x64xf32>
    %cst_38 = arith.constant dense<0.000000e+00> : vector<1x64xf32>
    %109 = vector.multi_reduction <add>, %108, %cst_38 [2] : vector<1x64x64xf32> to vector<1x64xf32>
    %110 = vector.shape_cast %109 : vector<1x64xf32> to vector<1x64x1xf32>
    %111 = tpu.reciprocal %110 {approx = true} : vector<1x64x1xf32> -> vector<1x64x1xf32>
    %112 = vector.broadcast %111 : vector<1x64x1xf32> to vector<1x64x64xf32>
    %113 = arith.mulf %108, %112 : vector<1x64x64xf32>
    %114 = arith.truncf %113 : vector<1x64x64xf32> to vector<1x64x64xbf16>
    "tpu.trace_start"() <{level = 10 : i32, message = "bnm,bmd->bnd"}> : () -> ()
    %cst_39 = arith.constant dense<0.000000e+00> : vector<1x64x32xf32>
    %115 = tpu.matmul %114, %98, %cst_39 {dimension_numbers = #tpu.dot_dimension_numbers<[2], [1], [1], [2], [0, 0, 0, 1, 1, 2], [0], [0]>} : vector<1x64x64xbf16>, vector<1x64x32xbf16>, vector<1x64x32xf32> -> vector<1x64x32xf32>
    "tpu.trace_stop"() : () -> ()
    %116 = arith.truncf %115 : vector<1x64x32xf32> to vector<1x64x32xbf16>
    %117 = tpu.concatenate %53, %74, %95, %116 in 2 : vector<1x64x32xbf16>, vector<1x64x32xbf16>, vector<1x64x32xbf16>, vector<1x64x32xbf16> -> vector<1x64x128xbf16>
    %118 = vector.shape_cast %117 : vector<1x64x128xbf16> to vector<64x128xbf16>
    %c0_40 = arith.constant 0 : index
    %c0_41 = arith.constant 0 : index
    %119 = vector.load %arg7[%c0_40, %c0_41] : memref<128x128xbf16, #tpu.memory_space<vmem>>, vector<128x128xbf16>
    %cst_42 = arith.constant dense<0.000000e+00> : vector<64x128xf32>
    %120 = tpu.matmul %118, %119, %cst_42 {dimension_numbers = #tpu.dot_dimension_numbers<[1], [0], [0], [1], [0, 0, 1, 1], [], []>} : vector<64x128xbf16>, vector<128x128xbf16>, vector<64x128xf32> -> vector<64x128xf32>
    %c0_43 = arith.constant 0 : index
    %c0_44 = arith.constant 0 : index
    %121 = vector.load %arg8[%c0_43, %c0_44] : memref<1x128xf32, #tpu.memory_space<vmem>>, vector<1x128xf32>
    %122 = vector.broadcast %121 : vector<1x128xf32> to vector<64x128xf32>
    %123 = arith.addf %120, %122 : vector<64x128xf32>
    %124 = vector.shape_cast %123 : vector<64x128xf32> to vector<1x64x128xf32>
    %125 = arith.addf %1, %124 : vector<1x64x128xf32>
    %126 = arith.truncf %125 : vector<1x64x128xf32> to vector<1x64x128xbf16>
    %c0_45 = arith.constant 0 : index
    %c0_46 = arith.constant 0 : index
    %c0_47 = arith.constant 0 : index
    %127 = vector.load %arg9[%c0_45, %c0_46, %c0_47] : memref<1x64x128xbf16, #tpu.memory_space<vmem>>, vector<1x64x128xbf16>
    tpu.vector_store %arg9[%c0_45, %c0_46, %c0_47], %126 {strides = array<i32>} : memref<1x64x128xbf16, #tpu.memory_space<vmem>>, vector<1x64x128xbf16>,
    return
  }
  func.func @transform_0(%arg0: i32) -> (i32, i32, i32) {
    %c0_i32 = arith.constant 0 : i32
    %c0_i32_0 = arith.constant 0 : i32
    %c0_i32_1 = arith.constant 0 : i32
    return %arg0, %c0_i32, %c0_i32_0 : i32, i32, i32
  }
  func.func @transform_1(%arg0: i32) -> (i32, i32) {
    %c0_i32 = arith.constant 0 : i32
    %c0_i32_0 = arith.constant 0 : i32
    %c0_i32_1 = arith.constant 0 : i32
    return %c0_i32, %c0_i32_0 : i32, i32
  }
  func.func @transform_2(%arg0: i32) -> (i32, i32) {
    %c0_i32 = arith.constant 0 : i32
    %c0_i32_0 = arith.constant 0 : i32
    %c0_i32_1 = arith.constant 0 : i32
    return %c0_i32, %c0_i32_0 : i32, i32
  }
  func.func @transform_3(%arg0: i32) -> (i32, i32) {
    %c0_i32 = arith.constant 0 : i32
    %c0_i32_0 = arith.constant 0 : i32
    %c0_i32_1 = arith.constant 0 : i32
    return %c0_i32, %c0_i32_0 : i32, i32
  }
  func.func @transform_4(%arg0: i32) -> (i32, i32) {
    %c0_i32 = arith.constant 0 : i32
    %c0_i32_0 = arith.constant 0 : i32
    %c0_i32_1 = arith.constant 0 : i32
    return %c0_i32, %c0_i32_0 : i32, i32
  }
  func.func @transform_5(%arg0: i32) -> (i32, i32, i32) {
    %c0_i32 = arith.constant 0 : i32
    %c0_i32_0 = arith.constant 0 : i32
    %c0_i32_1 = arith.constant 0 : i32
    %c0_i32_2 = arith.constant 0 : i32
    return %c0_i32, %c0_i32_0, %c0_i32_1 : i32, i32, i32
  }
  func.func @transform_6(%arg0: i32) -> (i32, i32) {
    %c0_i32 = arith.constant 0 : i32
    %c0_i32_0 = arith.constant 0 : i32
    %c0_i32_1 = arith.constant 0 : i32
    return %c0_i32, %c0_i32_0 : i32, i32
  }
  func.func @transform_7(%arg0: i32) -> (i32, i32) {
    %c0_i32 = arith.constant 0 : i32
    %c0_i32_0 = arith.constant 0 : i32
    %c0_i32_1 = arith.constant 0 : i32
    return %c0_i32, %c0_i32_0 : i32, i32
  }
  func.func @transform_8(%arg0: i32) -> (i32, i32, i32) {
    %c0_i32 = arith.constant 0 : i32
    %c0_i32_0 = arith.constant 0 : i32
    %c0_i32_1 = arith.constant 0 : i32
    return %arg0, %c0_i32, %c0_i32_0 : i32, i32, i32
  }
}

</mosaic_0001>

<llo_original>
// kernel: csa_block_forward.3
$region0: #{csa_block_forward.3}
  #allocation0 [shape = 'u32[]', space=smem, size = 0x4, offset = 0x4, fixed_abs, tag = 'smem constant byte address 0x4 - core index']
  #allocation1 [shape = 'u32[144,128]{1,0:T(1,128)}', space=vmem, size = 0x12000, scoped, tag = 'internal scratch']
  %s0 = inlined_call_operand.vmem [shape: bf16[128,128], index: 0, kind: input, shape index: {}]
  %s1 = inlined_call_operand.vmem [shape: f32[1,128], index: 1, kind: input, shape index: {}]
  %s2 = inlined_call_operand.vmem [shape: f32[1,128], index: 2, kind: input, shape index: {}]
  %s3 = inlined_call_operand.vmem [shape: bf16[128,512], index: 3, kind: input, shape index: {}]
  %s4 = inlined_call_operand.vmem [shape: f32[1,512], index: 4, kind: input, shape index: {}]
  %s5 = inlined_call_operand.vmem [shape: bf16[512,128], index: 5, kind: input, shape index: {}]
  %s6 = inlined_call_operand.vmem [shape: f32[1,128], index: 6, kind: input, shape index: {}]
  %s7 = inlined_call_operand.hbm [shape: f32[128,128], index: 7, kind: output, shape index: {}]
  %s8 = sld [smem:[#allocation0]]
  $region61: #{csa_block_forward.3} parent=0
    _
  %s10 = ssub.s32 1, %s8
  %s11 = scalar_select 0, %s10, %s8
  $region1: #{csa_block_forward.3} parent=0
    #allocation2 [shape = 'u8[65536]{0}', space=vmem, size = 0x10000, scoped, tag = 'output window, operand 0']
    #allocation3 [shape = 's32[2]{0}', space=sflag, size = 0x8, scoped, tag = 'scoped memory for csa_block_forward.3']
    %12 = vsyncpa [#allocation3], 0
    %s13 = scalar_lea.sflag [#allocation3], 1
    %14 = vsyncpa %s13, 0
    loop: start=0, step=1, limit=4
    $region2: #{csa_block_forward.3} parent=1 // loop_pre_header
      _
    $region3: #{csa_block_forward.3} parent=1 // loop_header
      %s16 = sphi 0, %s20
      %p17 = scmp.ge.s32.totalorder %s16, 4
      %s26 = sphi 0, %s28
      %s29 = sphi 0, %s26
      %s30 = sphi 0, %s29
      %s46 = sphi 0, %s30
      %s50 = sphi 0, %s50
      %s52 = sphi 0, %s50
      %s53 = sphi 0, %s52
      %s67 = sphi 0, %s53
      %s71 = sphi 0, %s71
      %s73 = sphi 0, %s71
      %s74 = sphi 0, %s73
      %s88 = sphi 0, %s74
      %s92 = sphi 0, %s92
      %s94 = sphi 0, %s92
      %s95 = sphi 0, %s94
      %s109 = sphi 0, %s95
      %s113 = sphi 0, %s113
      %s115 = sphi 0, %s113
      %s116 = sphi 0, %s115
      %s130 = sphi 0, %s116
      %s134 = sphi 0, %s134
      %s136 = sphi 0, %s134
      %s137 = sphi 0, %s136
      %s151 = sphi 0, %s137
      %s155 = sphi 0, %s155
      %s157 = sphi 0, %s155
      %s158 = sphi 0, %s157
      %s172 = sphi 0, %s158
      %s178 = sphi 0, %s180
      %s181 = sphi 0, %s178
      %s182 = sphi 0, %s181
      %s198 = sphi 0, %s182
    $region4: #{csa_block_forward.3} parent=1 // loop_header_branch
      %19 = sbr.rel (%p17) target = $region8
    $region5: #{csa_block_forward.3} parent=1 // loop_body
      %s21 = ssub.s32 %s16, 1
      %s22 = ssub.s32 %s16, 2
      %s23 = sadd.s32 %s16, 1
      %s24 = ssub.s32 %s16, %s23
      %p25 = scmp.eq.s32.totalorder %s24, 0
      %s27 = sadd.s32 %s26, 1
      %s28 = scalar_select %p25, %s26, %s27
      %p31 = pneg %p25
      %p32 = scmp.eq.s32.totalorder %s16, 1
      %p33 = por %p31, %p32
      %p34 = scmp.ne.s32.totalorder %s26, %s29
      %p35 = scmp.eq.s32.totalorder %s16, 0
      %p36 = por %p34, %p35
      %p37 = scmp.ne.s32.totalorder %s26, %s29
      %p38 = scmp.eq.s32.totalorder %s21, 1
      %p39 = por %p37, %p38
      %p40 = scmp.ne.s32.totalorder %s29, %s30
      %p41 = scmp.eq.s32.totalorder %s21, 0
      %p42 = por %p40, %p41
      %p43 = scmp.ne.s32.totalorder %s29, %s30
      %p44 = scmp.eq.s32.totalorder %s22, 1
      %p45 = por %p43, %p44
      %p47 = scmp.ne.s32.totalorder %s30, %s46
      %p48 = scmp.eq.s32.totalorder %s22, 0
      %p49 = por %p47, %p48
      %s51 = sadd.s32 %s50, 1
      %p54 = scmp.eq.s32.totalorder %s16, 1
      %p55 = scmp.ne.s32.totalorder %s50, %s52
      %p56 = scmp.eq.s32.totalorder %s16, 0
      %p57 = por %p55, %p56
      %p58 = scmp.ne.s32.totalorder %s50, %s52
      %p59 = scmp.eq.s32.totalorder %s21, 1
      %p60 = por %p58, %p59
      %p61 = scmp.ne.s32.totalorder %s52, %s53
      %p62 = scmp.eq.s32.totalorder %s21, 0
      %p63 = por %p61, %p62
      %p64 = scmp.ne.s32.totalorder %s52, %s53
      %p65 = scmp.eq.s32.totalorder %s22, 1
      %p66 = por %p64, %p65
      %p68 = scmp.ne.s32.totalorder %s53, %s67
      %p69 = scmp.eq.s32.totalorder %s22, 0
      %p70 = por %p68, %p69
      %s72 = sadd.s32 %s71, 1
      %p75 = scmp.eq.s32.totalorder %s16, 1
      %p76 = scmp.ne.s32.totalorder %s71, %s73
      %p77 = scmp.eq.s32.totalorder %s16, 0
      %p78 = por %p76, %p77
      %p79 = scmp.ne.s32.totalorder %s71, %s73
      %p80 = scmp.eq.s32.totalorder %s21, 1
      %p81 = por %p79, %p80
      %p82 = scmp.ne.s32.totalorder %s73, %s74
      %p83 = scmp.eq.s32.totalorder %s21, 0
      %p84 = por %p82, %p83
      %p85 = scmp.ne.s32.totalorder %s73, %s74
      %p86 = scmp.eq.s32.totalorder %s22, 1
      %p87 = por %p85, %p86
      %p89 = scmp.ne.s32.totalorder %s74, %s88
      %p90 = scmp.eq.s32.totalorder %s22, 0
      %p91 = por %p89, %p90
      %s93 = sadd.s32 %s92, 1
      %p96 = scmp.eq.s32.totalorder %s16, 1
      %p97 = scmp.ne.s32.totalorder %s92, %s94
      %p98 = scmp.eq.s32.totalorder %s16, 0
      %p99 = por %p97, %p98
      %p100 = scmp.ne.s32.totalorder %s92, %s94
      %p101 = scmp.eq.s32.totalorder %s21, 1
      %p102 = por %p100, %p101
      %p103 = scmp.ne.s32.totalorder %s94, %s95
      %p104 = scmp.eq.s32.totalorder %s21, 0
      %p105 = por %p103, %p104
      %p106 = scmp.ne.s32.totalorder %s94, %s95
      %p107 = scmp.eq.s32.totalorder %s22, 1
      %p108 = por %p106, %p107
      %p110 = scmp.ne.s32.totalorder %s95, %s109
      %p111 = scmp.eq.s32.totalorder %s22, 0
      %p112 = por %p110, %p111
      %s114 = sadd.s32 %s113, 1
      %p117 = scmp.eq.s32.totalorder %s16, 1
      %p118 = scmp.ne.s32.totalorder %s113, %s115
      %p119 = scmp.eq.s32.totalorder %s16, 0
      %p120 = por %p118, %p119
      %p121 = scmp.ne.s32.totalorder %s113, %s115
      %p122 = scmp.eq.s32.totalorder %s21, 1
      %p123 = por %p121, %p122
      %p124 = scmp.ne.s32.totalorder %s115, %s116
      %p125 = scmp.eq.s32.totalorder %s21, 0
      %p126 = por %p124, %p125
      %p127 = scmp.ne.s32.totalorder %s115, %s116
      %p128 = scmp.eq.s32.totalorder %s22, 1
      %p129 = por %p127, %p128
      %p131 = scmp.ne.s32.totalorder %s116, %s130
      %p132 = scmp.eq.s32.totalorder %s22, 0
      %p133 = por %p131, %p132
      %s135 = sadd.s32 %s134, 1
      %p138 = scmp.eq.s32.totalorder %s16, 1
      %p139 = scmp.ne.s32.totalorder %s134, %s136
      %p140 = scmp.eq.s32.totalorder %s16, 0
      %p141 = por %p139, %p140
      %p142 = scmp.ne.s32.totalorder %s134, %s136
      %p143 = scmp.eq.s32.totalorder %s21, 1
      %p144 = por %p142, %p143
      %p145 = scmp.ne.s32.totalorder %s136, %s137
      %p146 = scmp.eq.s32.totalorder %s21, 0
      %p147 = por %p145, %p146
      %p148 = scmp.ne.s32.totalorder %s136, %s137
      %p149 = scmp.eq.s32.totalorder %s22, 1
      %p150 = por %p148, %p149
      %p152 = scmp.ne.s32.totalorder %s137, %s151
      %p153 = scmp.eq.s32.totalorder %s22, 0
      %p154 = por %p152, %p153
      %s156 = sadd.s32 %s155, 1
      %p159 = scmp.eq.s32.totalorder %s16, 1
      %p160 = scmp.ne.s32.totalorder %s155, %s157
      %p161 = scmp.eq.s32.totalorder %s16, 0
      %p162 = por %p160, %p161
      %p163 = scmp.ne.s32.totalorder %s155, %s157
      %p164 = scmp.eq.s32.totalorder %s21, 1
      %p165 = por %p163, %p164
      %p166 = scmp.ne.s32.totalorder %s157, %s158
      %p167 = scmp.eq.s32.totalorder %s21, 0
      %p168 = por %p166, %p167
      %p169 = scmp.ne.s32.totalorder %s157, %s158
      %p170 = scmp.eq.s32.totalorder %s22, 1
      %p171 = por %p169, %p170
      %p173 = scmp.ne.s32.totalorder %s158, %s172
      %p174 = scmp.eq.s32.totalorder %s22, 0
      %p175 = por %p173, %p174
      %s176 = ssub.s32 %s16, %s23
      %p177 = scmp.eq.s32.totalorder %s176, 0
      %s179 = sadd.s32 %s178, 1
      %s180 = scalar_select %p177, %s178, %s179
      %p183 = pneg %p177
      %p184 = scmp.eq.s32.totalorder %s16, 1
      %p185 = por %p183, %p184
      %p186 = scmp.ne.s32.totalorder %s178, %s181
      %p187 = scmp.eq.s32.totalorder %s16, 0
      %p188 = por %p186, %p187
      %p189 = scmp.ne.s32.totalorder %s178, %s181
      %p190 = scmp.eq.s32.totalorder %s21, 1
      %p191 = por %p189, %p190
      %p192 = scmp.ne.s32.totalorder %s181, %s182
      %p193 = scmp.eq.s32.totalorder %s21, 0
      %p194 = por %p192, %p193
      %p195 = scmp.ne.s32.totalorder %s181, %s182
      %p196 = scmp.eq.s32.totalorder %s22, 1
      %p197 = por %p195, %p196
      %p199 = scmp.ne.s32.totalorder %s182, %s198
      %p200 = scmp.eq.s32.totalorder %s22, 0
      %p201 = por %p199, %p200
      %p202 = scmp.le.s32.totalorder 1, %s16
      %p203 = scmp.lt.s32.totalorder %s16, 3
      %p204 = pnand %p202, %p203
      %p205 = pneg %p204
      // Predicated region
      $region9: #{csa_block_forward.3} parent=5 // pred_check
        _
      $region10: #{csa_block_forward.3} parent=5 // pred_check_branch
        %207 = sbr.rel (%p204) target = $region12
      $region11: #{csa_block_forward.3} parent=5 // pred_region
        %s208 = ssub.s32 %s16, 1
        // Predicated region
        $region13: #{csa_block_forward.3} parent=11 // pred_check
          %p209 = pneg %p63
        $region14: #{csa_block_forward.3} parent=11 // pred_check_branch
          %211 = sbr.rel (%p209) target = $region16
        $region15: #{csa_block_forward.3} parent=11 // pred_region
          _
        $region16: #{csa_block_forward.3} parent=11 // pred_fallthru
          _
        // Predicated region
        $region17: #{csa_block_forward.3} parent=11 // pred_check
          %p212 = pneg %p84
        $region18: #{csa_block_forward.3} parent=11 // pred_check_branch
          %214 = sbr.rel (%p212) target = $region20
        $region19: #{csa_block_forward.3} parent=11 // pred_region
          _
        $region20: #{csa_block_forward.3} parent=11 // pred_fallthru
          _
        // Predicated region
        $region21: #{csa_block_forward.3} parent=11 // pred_check
          %p215 = pneg %p105
        $region22: #{csa_block_forward.3} parent=11 // pred_check_branch
          %217 = sbr.rel (%p215) target = $region24
        $region23: #{csa_block_forward.3} parent=11 // pred_region
          _
        $region24: #{csa_block_forward.3} parent=11 // pred_fallthru
          _
        // Predicated region
        $region25: #{csa_block_forward.3} parent=11 // pred_check
          %p218 = pneg %p126
        $region26: #{csa_block_forward.3} parent=11 // pred_check_branch
          %220 = sbr.rel (%p218) target = $region28
        $region27: #{csa_block_forward.3} parent=11 // pred_region
          _
        $region28: #{csa_block_forward.3} parent=11 // pred_fallthru
          _
        // Predicated region
        $region29: #{csa_block_forward.3} parent=11 // pred_check
          %p221 = pneg %p147
        $region30: #{csa_block_forward.3} parent=11 // pred_check_branch
          %223 = sbr.rel (%p221) target = $region32
        $region31: #{csa_block_forward.3} parent=11 // pred_region
          _
        $region32: #{csa_block_forward.3} parent=11 // pred_fallthru
          _
        // Predicated region
        $region33: #{csa_block_forward.3} parent=11 // pred_check
          %p224 = pneg %p168
        $region34: #{csa_block_forward.3} parent=11 // pred_check_branch
          %226 = sbr.rel (%p224) target = $region36
        $region35: #{csa_block_forward.3} parent=11 // pred_region
          _
        $region36: #{csa_block_forward.3} parent=11 // pred_fallthru
          _
      $region12: #{csa_block_forward.3} parent=5 // pred_fallthru
        _
      %p227 = scmp.lt.s32.totalorder %s16, 2
      // Predicated region
      $region37: #{csa_block_forward.3} parent=5 // pred_check
        %p228 = pneg %p227
      $region38: #{csa_block_forward.3} parent=5 // pred_check_branch
        %230 = sbr.rel (%p228) target = $region40
      $region39: #{csa_block_forward.3} parent=5 // pred_region
        // Predicated region
        $region41: #{csa_block_forward.3} parent=39 // pred_check
          %p231 = pneg %p36
        $region42: #{csa_block_forward.3} parent=39 // pred_check_branch
          %233 = sbr.rel (%p231) target = $region44
        $region43: #{csa_block_forward.3} parent=39 // pred_region
          %s234 = smul.u32 8, %s16
          %p235 = scmp.lt.s32.totalorder %s234, 15
          %s236 = scalar_select %p235, %s234, 15
          %s237 = smul.addr %s236, 4
          %s238 = scalar_lea.vmem %s0, %s237
          %s239 = smul.u32 8, %s16
        $region44: #{csa_block_forward.3} parent=39 // pred_fallthru
          _
      $region40: #{csa_block_forward.3} parent=5 // pred_fallthru
        _
      %p240 = scmp.le.s32.totalorder 1, %s16
      %p241 = scmp.lt.s32.totalorder %s16, 3
      %p242 = pnand %p240, %p241
      %p243 = pneg %p242
      // Predicated region
      $region45: #{csa_block_forward.3} parent=5 // pred_check
        _
      $region46: #{csa_block_forward.3} parent=5 // pred_check_branch
        %245 = sbr.rel (%p242) target = $region48
      $region47: #{csa_block_forward.3} parent=5 // pred_region
        %s246 = ssub.s32 %s16, 1
        %s247 = smul.u32 8, %s21
        %p248 = scmp.lt.s32.totalorder %s247, 15
        %s249 = scalar_select %p248, %s247, 15
        %s250 = smul.addr %s249, 4
        %s251 = scalar_lea.vmem %s0, %s250
        %p252 = pneg %p42
        %p253 = pneg %p39
        %p254 = pneg %p63
        %p255 = pneg %p60
        %p256 = pneg %p84
        %p257 = pneg %p81
        %p258 = pneg %p105
        %p259 = pneg %p102
        %p260 = pneg %p126
        %p261 = pneg %p123
        %p262 = pneg %p147
        %p263 = pneg %p144
        %p264 = pneg %p168
        %p265 = pneg %p165
        %p266 = pneg %p194
        %p267 = pneg %p191
        %s268 = sand.u32 %s181, 1
        %s269 = scalar_lea.sflag [#allocation3], %s268
        %s270 = sand.u32 %s181, 1
        %s271 = smul.addr %s270, 64
        %s272 = scalar_lea.vmem [#allocation2], %s271
        %s273 = smul.u32 8, %s21
        %p274 = scmp.lt.s32.totalorder %s273, 15
        %s275 = scalar_select %p274, %s273, 15
        %s276 = smul.addr %s275, 4
        %s277 = scalar_lea.vmem %s0, %s276
        %s278 = smul.u32 8, %s21
        %s279 = smul.u32 8, %s21
        %v281 = vld [vmem:[%s277] sm:$0xf]
        %v282 = vld [vmem:[%s277 + $0x4] sm:$0xf]
        %v283 = vld [vmem:[%s277 + $0x8] sm:$0xf]
        %v284 = vld [vmem:[%s277 + $0xc] sm:$0xf]
        %v285 = vld [vmem:[%s277 + $0x10] sm:$0xf]
        %v286 = vld [vmem:[%s277 + $0x14] sm:$0xf]
        %v287 = vld [vmem:[%s277 + $0x18] sm:$0xf]
        %v288 = vld [vmem:[%s277 + $0x1c] sm:$0xf]
        %v289 = vunpack.c.l.bf16 %v281
        %v290 = vunpack.c.l.bf16 %v282
        %v291 = vunpack.c.l.bf16 %v283
        %v292 = vunpack.c.l.bf16 %v284
        %v293 = vunpack.c.l.bf16 %v285
        %v294 = vunpack.c.l.bf16 %v286
        %v295 = vunpack.c.l.bf16 %v287
        %v296 = vunpack.c.l.bf16 %v288
        %297 = vadd.xlane.f32.xlu0 %v289
        %v298 = vpop.xlane.xlu0 %297
        %299 = vadd.xlane.f32.xlu0 %v290
        %v300 = vpop.xlane.xlu0 %299
        %301 = vadd.xlane.f32.xlu0 %v291
        %v302 = vpop.xlane.xlu0 %301
        %303 = vadd.xlane.f32.xlu0 %v292
        %v304 = vpop.xlane.xlu0 %303
        %305 = vadd.xlane.f32.xlu0 %v293
        %v306 = vpop.xlane.xlu0 %305
        %307 = vadd.xlane.f32.xlu0 %v294
        %v308 = vpop.xlane.xlu0 %307
        %309 = vadd.xlane.f32.xlu0 %v295
        %v310 = vpop.xlane.xlu0 %309
        %311 = vadd.xlane.f32.xlu0 %v296
        %v312 = vpop.xlane.xlu0 %311
        %v313 = vmul.f32 %v298, 0.0078125
        %v314 = vmul.f32 %v300, 0.0078125
        %v315 = vmul.f32 %v302, 0.0078125
        %v316 = vmul.f32 %v304, 0.0078125
        %v317 = vmul.f32 %v306, 0.0078125
        %v318 = vmul.f32 %v308, 0.0078125
        %v319 = vmul.f32 %v310, 0.0078125
        %v320 = vmul.f32 %v312, 0.0078125
        %v321 = vsub.f32 %v289, %v313
        %v322 = vsub.f32 %v290, %v314
        %v323 = vsub.f32 %v291, %v315
        %v324 = vsub.f32 %v292, %v316
        %v325 = vsub.f32 %v293, %v317
        %v326 = vsub.f32 %v294, %v318
        %v327 = vsub.f32 %v295, %v319
        %v328 = vsub.f32 %v296, %v320
        %v329 = vmul.f32 %v321, %v321
        %v330 = vmul.f32 %v322, %v322
        %v331 = vmul.f32 %v323, %v323
        %v332 = vmul.f32 %v324, %v324
        %v333 = vmul.f32 %v325, %v325
        %v334 = vmul.f32 %v326, %v326
        %v335 = vmul.f32 %v327, %v327
        %v336 = vmul.f32 %v328, %v328
        %337 = vadd.xlane.f32.xlu0 %v329
        %v338 = vpop.xlane.xlu0 %337
        %339 = vadd.xlane.f32.xlu0 %v330
        %v340 = vpop.xlane.xlu0 %339
        %341 = vadd.xlane.f32.xlu0 %v331
        %v342 = vpop.xlane.xlu0 %341
        %343 = vadd.xlane.f32.xlu0 %v332
        %v344 = vpop.xlane.xlu0 %343
        %345 = vadd.xlane.f32.xlu0 %v333
        %v346 = vpop.xlane.xlu0 %345
        %347 = vadd.xlane.f32.xlu0 %v334
        %v348 = vpop.xlane.xlu0 %347
        %349 = vadd.xlane.f32.xlu0 %v335
        %v350 = vpop.xlane.xlu0 %349
        %351 = vadd.xlane.f32.xlu0 %v336
        %v352 = vpop.xlane.xlu0 %351
        %v353 = vmul.f32 %v338, 0.0078125
        %v354 = vmul.f32 %v340, 0.0078125
        %v355 = vmul.f32 %v342, 0.0078125
        %v356 = vmul.f32 %v344, 0.0078125
        %v357 = vmul.f32 %v346, 0.0078125
        %v358 = vmul.f32 %v348, 0.0078125
        %v359 = vmul.f32 %v350, 0.0078125
        %v360 = vmul.f32 %v352, 0.0078125
        %v361 = vadd.f32 %v353, 1e-05
        %v362 = vadd.f32 %v354, 1e-05
        %v363 = vadd.f32 %v355, 1e-05
        %v364 = vadd.f32 %v356, 1e-05
        %v365 = vadd.f32 %v357, 1e-05
        %v366 = vadd.f32 %v358, 1e-05
        %v367 = vadd.f32 %v359, 1e-05
        %v368 = vadd.f32 %v360, 1e-05
        %v369 = vrsqrt.pop %v361
        %v370 = vrsqrt.pop %v362
        %v371 = vrsqrt.pop %v363
        %v372 = vrsqrt.pop %v364
        %v373 = vrsqrt.pop %v365
        %v374 = vrsqrt.pop %v366
        %v375 = vrsqrt.pop %v367
        %v376 = vrsqrt.pop %v368
        %v377 = vld [vmem:[%s1] sm:$0x1]
        %v379 = vlaneseq
        %v380 = vshrl.u32 %v379, 7
        %v381 = vsub.s32 0, %v380
        %v382 = vrot.slane %v377, %v381
        %v384 = vmul.f32 %v369, %v382
        %v385 = vmul.f32 %v370, %v382
        %v386 = vmul.f32 %v371, %v382
        %v387 = vmul.f32 %v372, %v382
        %v388 = vmul.f32 %v373, %v382
        %v389 = vmul.f32 %v374, %v382
        %v390 = vmul.f32 %v375, %v382
        %v391 = vmul.f32 %v376, %v382
        %v392 = vmul.f32 %v321, %v384
        %v393 = vmul.f32 %v322, %v385
        %v394 = vmul.f32 %v323, %v386
        %v395 = vmul.f32 %v324, %v387
        %v396 = vmul.f32 %v325, %v388
        %v397 = vmul.f32 %v326, %v389
        %v398 = vmul.f32 %v327, %v390
        %v399 = vmul.f32 %v328, %v391
        %v400 = vld [vmem:[%s2] sm:$0x1]
        %v402 = vlaneseq
        %v403 = vshrl.u32 %v402, 7
        %v404 = vsub.s32 0, %v403
        %v405 = vrot.slane %v400, %v404
        %v407 = vadd.f32 %v392, %v405
        %v408 = vadd.f32 %v393, %v405
        %v409 = vadd.f32 %v394, %v405
        %v410 = vadd.f32 %v395, %v405
        %v411 = vadd.f32 %v396, %v405
        %v412 = vadd.f32 %v397, %v405
        %v413 = vadd.f32 %v398, %v405
        %v414 = vadd.f32 %v399, %v405
        %v415 = vpack.c.bf16 %v408, %v407
        %v416 = vpack.c.bf16 %v410, %v409
        %v417 = vpack.c.bf16 %v412, %v411
        %v418 = vpack.c.bf16 %v414, %v413
        %v419 = vld [vmem:[%s3] sm:$0xff]
        %v420 = vld [vmem:[%s3 + $0x8] sm:$0xff]
        %v421 = vld [vmem:[%s3 + $0x10] sm:$0xff]
        %v422 = vld [vmem:[%s3 + $0x18] sm:$0xff]
        %v423 = vld [vmem:[%s3 + $0x20] sm:$0xff]
        %v424 = vld [vmem:[%s3 + $0x28] sm:$0xff]
        %v425 = vld [vmem:[%s3 + $0x30] sm:$0xff]
        %v426 = vld [vmem:[%s3 + $0x38] sm:$0xff]
        %v427 = vld [vmem:[%s3 + $0x40] sm:$0xff]
        %v428 = vld [vmem:[%s3 + $0x48] sm:$0xff]
        %v429 = vld [vmem:[%s3 + $0x50] sm:$0xff]
        %v430 = vld [vmem:[%s3 + $0x58] sm:$0xff]
        %v431 = vld [vmem:[%s3 + $0x60] sm:$0xff]
        %v432 = vld [vmem:[%s3 + $0x68] sm:$0xff]
        %v433 = vld [vmem:[%s3 + $0x70] sm:$0xff]
        %v434 = vld [vmem:[%s3 + $0x78] sm:$0xff]
        %v435 = vld [vmem:[%s3 + $0x80] sm:$0xff]
        %v436 = vld [vmem:[%s3 + $0x88] sm:$0xff]
        %v437 = vld [vmem:[%s3 + $0x90] sm:$0xff]
        %v438 = vld [vmem:[%s3 + $0x98] sm:$0xff]
        %v439 = vld [vmem:[%s3 + $0xa0] sm:$0xff]
        %v440 = vld [vmem:[%s3 + $0xa8] sm:$0xff]
        %v441 = vld [vmem:[%s3 + $0xb0] sm:$0xff]
        %v442 = vld [vmem:[%s3 + $0xb8] sm:$0xff]
        %v443 = vld [vmem:[%s3 + $0xc0] sm:$0xff]
        %v444 = vld [vmem:[%s3 + $0xc8] sm:$0xff]
        %v445 = vld [vmem:[%s3 + $0xd0] sm:$0xff]
        %v446 = vld [vmem:[%s3 + $0xd8] sm:$0xff]
        %v447 = vld [vmem:[%s3 + $0xe0] sm:$0xff]
        %v448 = vld [vmem:[%s3 + $0xe8] sm:$0xff]
        %v449 = vld [vmem:[%s3 + $0xf0] sm:$0xff]
        %v450 = vld [vmem:[%s3 + $0xf8] sm:$0xff]
        %v451 = vld [vmem:[%s4] sm:$0xf]
        %v453 = vlaneseq
        %v454 = vshrl.u32 %v453, 7
        %v455 = vsub.s32 0, %v454
        %v456 = vrot.slane %v451, %v455
        %v457 = vlaneseq
        %v458 = vshrl.u32 %v457, 7
        %v459 = vsub.s32 1, %v458
        %v460 = vrot.slane %v451, %v459
        %v461 = vlaneseq
        %v462 = vshrl.u32 %v461, 7
        %v463 = vsub.s32 2, %v462
        %v464 = vrot.slane %v451, %v463
        %v465 = vlaneseq
        %v466 = vshrl.u32 %v465, 7
        %v467 = vsub.s32 3, %v466
        %v468 = vrot.slane %v451, %v467
        %v505 = vunpack.c.l.b16 %v419
        %v506 = vunpack.c.h.b16 %v419
        %v507 = vunpack.c.l.b16 %v420
        %v508 = vunpack.c.h.b16 %v420
        %v509 = vunpack.c.l.b16 %v421
        %v510 = vunpack.c.h.b16 %v421
        %v511 = vunpack.c.l.b16 %v422
        %v512 = vunpack.c.h.b16 %v422
        %v513 = vunpack.c.l.b16 %v423
        %v514 = vunpack.c.h.b16 %v423
        %v515 = vunpack.c.l.b16 %v424
        %v516 = vunpack.c.h.b16 %v424
        %v517 = vunpack.c.l.b16 %v425
        %v518 = vunpack.c.h.b16 %v425
        %v519 = vunpack.c.l.b16 %v426
        %v520 = vunpack.c.h.b16 %v426
        %v521 = vunpack.c.l.b16 %v427
        %v522 = vunpack.c.h.b16 %v427
        %v523 = vunpack.c.l.b16 %v428
        %v524 = vunpack.c.h.b16 %v428
        %v525 = vunpack.c.l.b16 %v429
        %v526 = vunpack.c.h.b16 %v429
        %v527 = vunpack.c.l.b16 %v430
        %v528 = vunpack.c.h.b16 %v430
        %v529 = vunpack.c.l.b16 %v431
        %v530 = vunpack.c.h.b16 %v431
        %v531 = vunpack.c.l.b16 %v432
        %v532 = vunpack.c.h.b16 %v432
        %v533 = vunpack.c.l.b16 %v433
        %v534 = vunpack.c.h.b16 %v433
        %v535 = vunpack.c.l.b16 %v434
        %v536 = vunpack.c.h.b16 %v434
        %v537 = vunpack.c.l.b16 %v435
        %v538 = vunpack.c.h.b16 %v435
        %v539 = vunpack.c.l.b16 %v436
        %v540 = vunpack.c.h.b16 %v436
        %v541 = vunpack.c.l.b16 %v437
        %v542 = vunpack.c.h.b16 %v437
        %v543 = vunpack.c.l.b16 %v438
        %v544 = vunpack.c.h.b16 %v438
        %v545 = vunpack.c.l.b16 %v439
        %v546 = vunpack.c.h.b16 %v439
        %v547 = vunpack.c.l.b16 %v440
        %v548 = vunpack.c.h.b16 %v440
        %v549 = vunpack.c.l.b16 %v441
        %v550 = vunpack.c.h.b16 %v441
        %v551 = vunpack.c.l.b16 %v442
        %v552 = vunpack.c.h.b16 %v442
        %v553 = vunpack.c.l.b16 %v443
        %v554 = vunpack.c.h.b16 %v443
        %v555 = vunpack.c.l.b16 %v444
        %v556 = vunpack.c.h.b16 %v444
        %v557 = vunpack.c.l.b16 %v445
        %v558 = vunpack.c.h.b16 %v445
        %v559 = vunpack.c.l.b16 %v446
        %v560 = vunpack.c.h.b16 %v446
        %v561 = vunpack.c.l.b16 %v447
        %v562 = vunpack.c.h.b16 %v447
        %v563 = vunpack.c.l.b16 %v448
        %v564 = vunpack.c.h.b16 %v448
        %v565 = vunpack.c.l.b16 %v449
        %v566 = vunpack.c.h.b16 %v449
        %v567 = vunpack.c.l.b16 %v450
        %v568 = vunpack.c.h.b16 %v450
        %v569 = vpack.c.b16 %v509, %v505
        %v570 = vpack.c.b16 %v510, %v506
        %v571 = vpack.c.b16 %v511, %v507
        %v572 = vpack.c.b16 %v512, %v508
        %v573 = vpack.c.b16 %v517, %v513
        %v574 = vpack.c.b16 %v518, %v514
        %v575 = vpack.c.b16 %v519, %v515
        %v576 = vpack.c.b16 %v520, %v516
        %v577 = vpack.c.b16 %v525, %v521
        %v578 = vpack.c.b16 %v526, %v522
        %v579 = vpack.c.b16 %v527, %v523
        %v580 = vpack.c.b16 %v528, %v524
        %v581 = vpack.c.b16 %v533, %v529
        %v582 = vpack.c.b16 %v534, %v530
        %v583 = vpack.c.b16 %v535, %v531
        %v584 = vpack.c.b16 %v536, %v532
        %v585 = vpack.c.b16 %v541, %v537
        %v586 = vpack.c.b16 %v542, %v538
        %v587 = vpack.c.b16 %v543, %v539
        %v588 = vpack.c.b16 %v544, %v540
        %v589 = vpack.c.b16 %v549, %v545
        %v590 = vpack.c.b16 %v550, %v546
        %v591 = vpack.c.b16 %v551, %v547
        %v592 = vpack.c.b16 %v552, %v548
        %v593 = vpack.c.b16 %v557, %v553
        %v594 = vpack.c.b16 %v558, %v554
        %v595 = vpack.c.b16 %v559, %v555
        %v596 = vpack.c.b16 %v560, %v556
        %v597 = vpack.c.b16 %v565, %v561
        %v598 = vpack.c.b16 %v566, %v562
        %v599 = vpack.c.b16 %v567, %v563
        %v600 = vpack.c.b16 %v568, %v564
        %633 = vmatprep.subr.bf16.mxu0 %v570
        %634 = vmatpush1.bf16.msra.mxu0 %v569
        %635 = vmatprep.subr.bf16.mxu0 %v574
        %636 = vmatpush1.bf16.msra.mxu0 %v573
        %637 = vmatprep.subr.bf16.mxu0 %v578
        %638 = vmatpush1.bf16.msra.mxu0 %v577
        %639 = vmatprep.subr.bf16.mxu0 %v582
        %640 = vmatpush1.bf16.msra.mxu0 %v581
        %641 = vmatprep.subr.bf16.mxu0 %v586
        %642 = vmatpush1.bf16.msra.mxu0 %v585
        %643 = vmatprep.subr.bf16.mxu0 %v590
        %644 = vmatpush1.bf16.msra.mxu0 %v589
        %645 = vmatprep.subr.bf16.mxu0 %v594
        %646 = vmatpush1.bf16.msra.mxu0 %v593
        %647 = vmatprep.subr.bf16.mxu0 %v598
        %648 = vmatpush1.bf16.msra.mxu0 %v597
        %649 = vmatprep.subr.bf16.mxu0 0
        %650 = vmatpush1.bf16.msra.mxu0 0
        %651 = vmatprep.subr.bf16.mxu0 0
        %652 = vmatpush1.bf16.msra.mxu0 0
        %653 = vmatprep.subr.bf16.mxu0 0
        %654 = vmatpush1.bf16.msra.mxu0 0
        %655 = vmatprep.subr.bf16.mxu0 0
        %656 = vmatpush1.bf16.msra.mxu0 0
        %657 = vmatprep.subr.bf16.mxu0 0
        %658 = vmatpush1.bf16.msra.mxu0 0
        %659 = vmatprep.subr.bf16.mxu0 0
        %660 = vmatpush1.bf16.msra.mxu0 0
        %661 = vmatprep.subr.bf16.mxu0 0
        %662 = vmatpush1.bf16.msra.mxu0 0
        %663 = vmatprep.subr.bf16.mxu0 0
        %664 = vmatpush1.bf16.msra.mxu0 0
        %665 = vmatprep.mubr.bf16.mxu0 0
        %666 = vmatmul.mubr.bf16.gmra.mrb[0].mxu0 %v415
        %v667 = vpop.f32.mrb[0].mxu0
        %v668 = vadd.f32 %v456, %v667
        %v669 = vpop.f32.mrb[0].mxu0
        %v670 = vadd.f32 %v460, %v669
        %v671 = vpop.f32.mrb[0].mxu0
        %v672 = vadd.f32 %v456, %v671
        %v673 = vpop.f32.mrb[0].mxu0
        %v674 = vadd.f32 %v460, %v673
        %675 = vmatprep.mubr.bf16.mxu0 0
        %676 = vmatmul.mubr.bf16.gmra.mrb[0].mxu0 %v416
        %v677 = vpop.f32.mrb[0].mxu0
        %v678 = vadd.f32 %v456, %v677
        %v679 = vpop.f32.mrb[0].mxu0
        %v680 = vadd.f32 %v460, %v679
        %v681 = vpop.f32.mrb[0].mxu0
        %v682 = vadd.f32 %v456, %v681
        %v683 = vpop.f32.mrb[0].mxu0
        %v684 = vadd.f32 %v460, %v683
        %685 = vmatprep.mubr.bf16.mxu0 0
        %686 = vmatmul.mubr.bf16.gmra.mrb[0].mxu0 %v417
        %v687 = vpop.f32.mrb[0].mxu0
        %v688 = vadd.f32 %v456, %v687
        %v689 = vpop.f32.mrb[0].mxu0
        %v690 = vadd.f32 %v460, %v689
        %v691 = vpop.f32.mrb[0].mxu0
        %v692 = vadd.f32 %v456, %v691
        %v693 = vpop.f32.mrb[0].mxu0
        %v694 = vadd.f32 %v460, %v693
        %695 = vmatprep.mubr.bf16.mxu0 0
        %696 = vmatmul.mubr.bf16.gmra.mrb[0].mxu0 %v418
        %v697 = vpop.f32.mrb[0].mxu0
        %v698 = vadd.f32 %v456, %v697
        %v699 = vpop.f32.mrb[0].mxu0
        %v700 = vadd.f32 %v460, %v699
        %v701 = vpop.f32.mrb[0].mxu0
        %v702 = vadd.f32 %v456, %v701
        %v703 = vpop.f32.mrb[0].mxu0
        %v704 = vadd.f32 %v460, %v703
        %705 = vdwg.mxu0
        %706 = vmatprep.subr.bf16.mxu0 %v572
        %707 = vmatpush1.bf16.msra.mxu0 %v571
        %708 = vmatprep.subr.bf16.mxu0 %v576
        %709 = vmatpush1.bf16.msra.mxu0 %v575
        %710 = vmatprep.subr.bf16.mxu0 %v580
        %711 = vmatpush1.bf16.msra.mxu0 %v579
        %712 = vmatprep.subr.bf16.mxu0 %v584
        %713 = vmatpush1.bf16.msra.mxu0 %v583
        %714 = vmatprep.subr.bf16.mxu0 %v588
        %715 = vmatpush1.bf16.msra.mxu0 %v587
        %716 = vmatprep.subr.bf16.mxu0 %v592
        %717 = vmatpush1.bf16.msra.mxu0 %v591
        %718 = vmatprep.subr.bf16.mxu0 %v596
        %719 = vmatpush1.bf16.msra.mxu0 %v595
        %720 = vmatprep.subr.bf16.mxu0 %v600
        %721 = vmatpush1.bf16.msra.mxu0 %v599
        %722 = vmatprep.subr.bf16.mxu0 0
        %723 = vmatpush1.bf16.msra.mxu0 0
        %724 = vmatprep.subr.bf16.mxu0 0
        %725 = vmatpush1.bf16.msra.mxu0 0
        %726 = vmatprep.subr.bf16.mxu0 0
        %727 = vmatpush1.bf16.msra.mxu0 0
        %728 = vmatprep.subr.bf16.mxu0 0
        %729 = vmatpush1.bf16.msra.mxu0 0
        %730 = vmatprep.subr.bf16.mxu0 0
        %731 = vmatpush1.bf16.msra.mxu0 0
        %732 = vmatprep.subr.bf16.mxu0 0
        %733 = vmatpush1.bf16.msra.mxu0 0
        %734 = vmatprep.subr.bf16.mxu0 0
        %735 = vmatpush1.bf16.msra.mxu0 0
        %736 = vmatprep.subr.bf16.mxu0 0
        %737 = vmatpush1.bf16.msra.mxu0 0
        %738 = vmatprep.mubr.bf16.mxu0 0
        %739 = vmatmul.mubr.bf16.gmra.mrb[0].mxu0 %v415
        %v740 = vpop.f32.mrb[0].mxu0
        %v741 = vadd.f32 %v464, %v740
        %v742 = vpop.f32.mrb[0].mxu0
        %v743 = vadd.f32 %v468, %v742
        %v744 = vpop.f32.mrb[0].mxu0
        %v745 = vadd.f32 %v464, %v744
        %v746 = vpop.f32.mrb[0].mxu0
        %v747 = vadd.f32 %v468, %v746
        %748 = vmatprep.mubr.bf16.mxu0 0
        %749 = vmatmul.mubr.bf16.gmra.mrb[0].mxu0 %v416
        %v750 = vpop.f32.mrb[0].mxu0
        %v751 = vadd.f32 %v464, %v750
        %v752 = vpop.f32.mrb[0].mxu0
        %v753 = vadd.f32 %v468, %v752
        %v754 = vpop.f32.mrb[0].mxu0
        %v755 = vadd.f32 %v464, %v754
        %v756 = vpop.f32.mrb[0].mxu0
        %v757 = vadd.f32 %v468, %v756
        %758 = vmatprep.mubr.bf16.mxu0 0
        %759 = vmatmul.mubr.bf16.gmra.mrb[0].mxu0 %v417
        %v760 = vpop.f32.mrb[0].mxu0
        %v761 = vadd.f32 %v464, %v760
        %v762 = vpop.f32.mrb[0].mxu0
        %v763 = vadd.f32 %v468, %v762
        %v764 = vpop.f32.mrb[0].mxu0
        %v765 = vadd.f32 %v464, %v764
        %v766 = vpop.f32.mrb[0].mxu0
        %v767 = vadd.f32 %v468, %v766
        %768 = vmatprep.mubr.bf16.mxu0 0
        %769 = vmatmul.mubr.bf16.gmra.mrb[0].mxu0 %v418
        %v770 = vpop.f32.mrb[0].mxu0
        %v771 = vadd.f32 %v464, %v770
        %v772 = vpop.f32.mrb[0].mxu0
        %v773 = vadd.f32 %v468, %v772
        %v774 = vpop.f32.mrb[0].mxu0
        %v775 = vadd.f32 %v464, %v774
        %v776 = vpop.f32.mrb[0].mxu0
        %v777 = vadd.f32 %v468, %v776
        %778 = vdwg.mxu0
        %v779 = vmul.f32 %v668, 0.5
        %v780 = vmul.f32 %v670, 0.5
        %v781 = vmul.f32 %v741, 0.5
        %v782 = vmul.f32 %v743, 0.5
        %v783 = vmul.f32 %v672, 0.5
        %v784 = vmul.f32 %v674, 0.5
        %v785 = vmul.f32 %v745, 0.5
        %v786 = vmul.f32 %v747, 0.5
        %v787 = vmul.f32 %v678, 0.5
        %v788 = vmul.f32 %v680, 0.5
        %v789 = vmul.f32 %v751, 0.5
        %v790 = vmul.f32 %v753, 0.5
        %v791 = vmul.f32 %v682, 0.5
        %v792 = vmul.f32 %v684, 0.5
        %v793 = vmul.f32 %v755, 0.5
        %v794 = vmul.f32 %v757, 0.5
        %v795 = vmul.f32 %v688, 0.5
        %v796 = vmul.f32 %v690, 0.5
        %v797 = vmul.f32 %v761, 0.5
        %v798 = vmul.f32 %v763, 0.5
        %v799 = vmul.f32 %v692, 0.5
        %v800 = vmul.f32 %v694, 0.5
        %v801 = vmul.f32 %v765, 0.5
        %v802 = vmul.f32 %v767, 0.5
        %v803 = vmul.f32 %v698, 0.5
        %v804 = vmul.f32 %v700, 0.5
        %v805 = vmul.f32 %v771, 0.5
        %v806 = vmul.f32 %v773, 0.5
        %v807 = vmul.f32 %v702, 0.5
        %v808 = vmul.f32 %v704, 0.5
        %v809 = vmul.f32 %v775, 0.5
        %v810 = vmul.f32 %v777, 0.5
        %v811 = vmul.f32 %v668, 0.044715
        %v812 = vmul.f32 %v670, 0.044715
        %v813 = vmul.f32 %v741, 0.044715
        %v814 = vmul.f32 %v743, 0.044715
        %v815 = vmul.f32 %v672, 0.044715
        %v816 = vmul.f32 %v674, 0.044715
        %v817 = vmul.f32 %v745, 0.044715
        %v818 = vmul.f32 %v747, 0.044715
        %v819 = vmul.f32 %v678, 0.044715
        %v820 = vmul.f32 %v680, 0.044715
        %v821 = vmul.f32 %v751, 0.044715
        %v822 = vmul.f32 %v753, 0.044715
        %v823 = vmul.f32 %v682, 0.044715
        %v824 = vmul.f32 %v684, 0.044715
        %v825 = vmul.f32 %v755, 0.044715
        %v826 = vmul.f32 %v757, 0.044715
        %v827 = vmul.f32 %v688, 0.044715
        %v828 = vmul.f32 %v690, 0.044715
        %v829 = vmul.f32 %v761, 0.044715
        %v830 = vmul.f32 %v763, 0.044715
        %v831 = vmul.f32 %v692, 0.044715
        %v832 = vmul.f32 %v694, 0.044715
        %v833 = vmul.f32 %v765, 0.044715
        %v834 = vmul.f32 %v767, 0.044715
        %v835 = vmul.f32 %v698, 0.044715
        %v836 = vmul.f32 %v700, 0.044715
        %v837 = vmul.f32 %v771, 0.044715
        %v838 = vmul.f32 %v773, 0.044715
        %v839 = vmul.f32 %v702, 0.044715
        %v840 = vmul.f32 %v704, 0.044715
        %v841 = vmul.f32 %v775, 0.044715
        %v842 = vmul.f32 %v777, 0.044715
        %v843 = vmul.f32 %v811, %v668
        %v844 = vmul.f32 %v812, %v670
        %v845 = vmul.f32 %v813, %v741
        %v846 = vmul.f32 %v814, %v743
        %v847 = vmul.f32 %v815, %v672
        %v848 = vmul.f32 %v816, %v674
        %v849 = vmul.f32 %v817, %v745
        %v850 = vmul.f32 %v818, %v747
        %v851 = vmul.f32 %v819, %v678
        %v852 = vmul.f32 %v820, %v680
        %v853 = vmul.f32 %v821, %v751
        %v854 = vmul.f32 %v822, %v753
        %v855 = vmul.f32 %v823, %v682
        %v856 = vmul.f32 %v824, %v684
        %v857 = vmul.f32 %v825, %v755
        %v858 = vmul.f32 %v826, %v757
        %v859 = vmul.f32 %v827, %v688
        %v860 = vmul.f32 %v828, %v690
        %v861 = vmul.f32 %v829, %v761
        %v862 = vmul.f32 %v830, %v763
        %v863 = vmul.f32 %v831, %v692
        %v864 = vmul.f32 %v832, %v694
        %v865 = vmul.f32 %v833, %v765
        %v866 = vmul.f32 %v834, %v767
        %v867 = vmul.f32 %v835, %v698
        %v868 = vmul.f32 %v836, %v700
        %v869 = vmul.f32 %v837, %v771
        %v870 = vmul.f32 %v838, %v773
        %v871 = vmul.f32 %v839, %v702
        %v872 = vmul.f32 %v840, %v704
        %v873 = vmul.f32 %v841, %v775
        %v874 = vmul.f32 %v842, %v777
        %v875 = vmul.f32 %v843, %v668
        %v876 = vmul.f32 %v844, %v670
        %v877 = vmul.f32 %v845, %v741
        %v878 = vmul.f32 %v846, %v743
        %v879 = vmul.f32 %v847, %v672
        %v880 = vmul.f32 %v848, %v674
        %v881 = vmul.f32 %v849, %v745
        %v882 = vmul.f32 %v850, %v747
        %v883 = vmul.f32 %v851, %v678
        %v884 = vmul.f32 %v852, %v680
        %v885 = vmul.f32 %v853, %v751
        %v886 = vmul.f32 %v854, %v753
        %v887 = vmul.f32 %v855, %v682
        %v888 = vmul.f32 %v856, %v684
        %v889 = vmul.f32 %v857, %v755
        %v890 = vmul.f32 %v858, %v757
        %v891 = vmul.f32 %v859, %v688
        %v892 = vmul.f32 %v860, %v690
        %v893 = vmul.f32 %v861, %v761
        %v894 = vmul.f32 %v862, %v763
        %v895 = vmul.f32 %v863, %v692
        %v896 = vmul.f32 %v864, %v694
        %v897 = vmul.f32 %v865, %v765
        %v898 = vmul.f32 %v866, %v767
        %v899 = vmul.f32 %v867, %v698
        %v900 = vmul.f32 %v868, %v700
        %v901 = vmul.f32 %v869, %v771
        %v902 = vmul.f32 %v870, %v773
        %v903 = vmul.f32 %v871, %v702
        %v904 = vmul.f32 %v872, %v704
        %v905 = vmul.f32 %v873, %v775
        %v906 = vmul.f32 %v874, %v777
        %v907 = vadd.f32 %v668, %v875
        %v908 = vadd.f32 %v670, %v876
        %v909 = vadd.f32 %v741, %v877
        %v910 = vadd.f32 %v743, %v878
        %v911 = vadd.f32 %v672, %v879
        %v912 = vadd.f32 %v674, %v880
        %v913 = vadd.f32 %v745, %v881
        %v914 = vadd.f32 %v747, %v882
        %v915 = vadd.f32 %v678, %v883
        %v916 = vadd.f32 %v680, %v884
        %v917 = vadd.f32 %v751, %v885
        %v918 = vadd.f32 %v753, %v886
        %v919 = vadd.f32 %v682, %v887
        %v920 = vadd.f32 %v684, %v888
        %v921 = vadd.f32 %v755, %v889
        %v922 = vadd.f32 %v757, %v890
        %v923 = vadd.f32 %v688, %v891
        %v924 = vadd.f32 %v690, %v892
        %v925 = vadd.f32 %v761, %v893
        %v926 = vadd.f32 %v763, %v894
        %v927 = vadd.f32 %v692, %v895
        %v928 = vadd.f32 %v694, %v896
        %v929 = vadd.f32 %v765, %v897
        %v930 = vadd.f32 %v767, %v898
        %v931 = vadd.f32 %v698, %v899
        %v932 = vadd.f32 %v700, %v900
        %v933 = vadd.f32 %v771, %v901
        %v934 = vadd.f32 %v773, %v902
        %v935 = vadd.f32 %v702, %v903
        %v936 = vadd.f32 %v704, %v904
        %v937 = vadd.f32 %v775, %v905
        %v938 = vadd.f32 %v777, %v906
        %v939 = vmul.f32 %v907, 0.7978846
        %v940 = vmul.f32 %v908, 0.7978846
        %v941 = vmul.f32 %v909, 0.7978846
        %v942 = vmul.f32 %v910, 0.7978846
        %v943 = vmul.f32 %v911, 0.7978846
        %v944 = vmul.f32 %v912, 0.7978846
        %v945 = vmul.f32 %v913, 0.7978846
        %v946 = vmul.f32 %v914, 0.7978846
        %v947 = vmul.f32 %v915, 0.7978846
        %v948 = vmul.f32 %v916, 0.7978846
        %v949 = vmul.f32 %v917, 0.7978846
        %v950 = vmul.f32 %v918, 0.7978846
        %v951 = vmul.f32 %v919, 0.7978846
        %v952 = vmul.f32 %v920, 0.7978846
        %v953 = vmul.f32 %v921, 0.7978846
        %v954 = vmul.f32 %v922, 0.7978846
        %v955 = vmul.f32 %v923, 0.7978846
        %v956 = vmul.f32 %v924, 0.7978846
        %v957 = vmul.f32 %v925, 0.7978846
        %v958 = vmul.f32 %v926, 0.7978846
        %v959 = vmul.f32 %v927, 0.7978846
        %v960 = vmul.f32 %v928, 0.7978846
        %v961 = vmul.f32 %v929, 0.7978846
        %v962 = vmul.f32 %v930, 0.7978846
        %v963 = vmul.f32 %v931, 0.7978846
        %v964 = vmul.f32 %v932, 0.7978846
        %v965 = vmul.f32 %v933, 0.7978846
        %v966 = vmul.f32 %v934, 0.7978846
        %v967 = vmul.f32 %v935, 0.7978846
        %v968 = vmul.f32 %v936, 0.7978846
        %v969 = vmul.f32 %v937, 0.7978846
        %v970 = vmul.f32 %v938, 0.7978846
        %v971 = vtanh.pop %v939
        %v972 = vtanh.pop %v940
        %v973 = vtanh.pop %v941
        %v974 = vtanh.pop %v942
        %v975 = vtanh.pop %v943
        %v976 = vtanh.pop %v944
        %v977 = vtanh.pop %v945
        %v978 = vtanh.pop %v946
        %v979 = vtanh.pop %v947
        %v980 = vtanh.pop %v948
        %v981 = vtanh.pop %v949
        %v982 = vtanh.pop %v950
        %v983 = vtanh.pop %v951
        %v984 = vtanh.pop %v952
        %v985 = vtanh.pop %v953
        %v986 = vtanh.pop %v954
        %v987 = vtanh.pop %v955
        %v988 = vtanh.pop %v956
        %v989 = vtanh.pop %v957
        %v990 = vtanh.pop %v958
        %v991 = vtanh.pop %v959
        %v992 = vtanh.pop %v960
        %v993 = vtanh.pop %v961
        %v994 = vtanh.pop %v962
        %v995 = vtanh.pop %v963
        %v996 = vtanh.pop %v964
        %v997 = vtanh.pop %v965
        %v998 = vtanh.pop %v966
        %v999 = vtanh.pop %v967
        %v1000 = vtanh.pop %v968
        %v1001 = vtanh.pop %v969
        %v1002 = vtanh.pop %v970
        %v1003 = vadd.f32 %v971, 1.0
        %v1004 = vadd.f32 %v972, 1.0
        %v1005 = vadd.f32 %v973, 1.0
        %v1006 = vadd.f32 %v974, 1.0
        %v1007 = vadd.f32 %v975, 1.0
        %v1008 = vadd.f32 %v976, 1.0
        %v1009 = vadd.f32 %v977, 1.0
        %v1010 = vadd.f32 %v978, 1.0
        %v1011 = vadd.f32 %v979, 1.0
        %v1012 = vadd.f32 %v980, 1.0
        %v1013 = vadd.f32 %v981, 1.0
        %v1014 = vadd.f32 %v982, 1.0
        %v1015 = vadd.f32 %v983, 1.0
        %v1016 = vadd.f32 %v984, 1.0
        %v1017 = vadd.f32 %v985, 1.0
        %v1018 = vadd.f32 %v986, 1.0
        %v1019 = vadd.f32 %v987, 1.0
        %v1020 = vadd.f32 %v988, 1.0
        %v1021 = vadd.f32 %v989, 1.0
        %v1022 = vadd.f32 %v990, 1.0
        %v1023 = vadd.f32 %v991, 1.0
        %v1024 = vadd.f32 %v992, 1.0
        %v1025 = vadd.f32 %v993, 1.0
        %v1026 = vadd.f32 %v994, 1.0
        %v1027 = vadd.f32 %v995, 1.0
        %v1028 = vadd.f32 %v996, 1.0
        %v1029 = vadd.f32 %v997, 1.0
        %v1030 = vadd.f32 %v998, 1.0
        %v1031 = vadd.f32 %v999, 1.0
        %v1032 = vadd.f32 %v1000, 1.0
        %v1033 = vadd.f32 %v1001, 1.0
        %v1034 = vadd.f32 %v1002, 1.0
        %v1035 = vmul.f32 %v779, %v1003
        %v1036 = vmul.f32 %v780, %v1004
        %v1037 = vmul.f32 %v781, %v1005
        %v1038 = vmul.f32 %v782, %v1006
        %v1039 = vmul.f32 %v783, %v1007
        %v1040 = vmul.f32 %v784, %v1008
        %v1041 = vmul.f32 %v785, %v1009
        %v1042 = vmul.f32 %v786, %v1010
        %v1043 = vmul.f32 %v787, %v1011
        %v1044 = vmul.f32 %v788, %v1012
        %v1045 = vmul.f32 %v789, %v1013
        %v1046 = vmul.f32 %v790, %v1014
        %v1047 = vmul.f32 %v791, %v1015
        %v1048 = vmul.f32 %v792, %v1016
        %v1049 = vmul.f32 %v793, %v1017
        %v1050 = vmul.f32 %v794, %v1018
        %v1051 = vmul.f32 %v795, %v1019
        %v1052 = vmul.f32 %v796, %v1020
        %v1053 = vmul.f32 %v797, %v1021
        %v1054 = vmul.f32 %v798, %v1022
        %v1055 = vmul.f32 %v799, %v1023
        %v1056 = vmul.f32 %v800, %v1024
        %v1057 = vmul.f32 %v801, %v1025
        %v1058 = vmul.f32 %v802, %v1026
        %v1059 = vmul.f32 %v803, %v1027
        %v1060 = vmul.f32 %v804, %v1028
        %v1061 = vmul.f32 %v805, %v1029
        %v1062 = vmul.f32 %v806, %v1030
        %v1063 = vmul.f32 %v807, %v1031
        %v1064 = vmul.f32 %v808, %v1032
        %v1065 = vmul.f32 %v809, %v1033
        %v1066 = vmul.f32 %v810, %v1034
        %v1067 = vpack.c.bf16 %v1039, %v1035
        %v1068 = vpack.c.bf16 %v1040, %v1036
        %v1069 = vpack.c.bf16 %v1041, %v1037
        %v1070 = vpack.c.bf16 %v1042, %v1038
        %v1071 = vpack.c.bf16 %v1047, %v1043
        %v1072 = vpack.c.bf16 %v1048, %v1044
        %v1073 = vpack.c.bf16 %v1049, %v1045
        %v1074 = vpack.c.bf16 %v1050, %v1046
        %v1075 = vpack.c.bf16 %v1055, %v1051
        %v1076 = vpack.c.bf16 %v1056, %v1052
        %v1077 = vpack.c.bf16 %v1057, %v1053
        %v1078 = vpack.c.bf16 %v1058, %v1054
        %v1079 = vpack.c.bf16 %v1063, %v1059
        %v1080 = vpack.c.bf16 %v1064, %v1060
        %v1081 = vpack.c.bf16 %v1065, %v1061
        %v1082 = vpack.c.bf16 %v1066, %v1062
        %v1083 = vld [vmem:[%s5] sm:$0xf]
        %v1084 = vld [vmem:[%s5 + $0x4] sm:$0xf]
        %v1085 = vld [vmem:[%s5 + $0x8] sm:$0xf]
        %v1086 = vld [vmem:[%s5 + $0xc] sm:$0xf]
        %v1087 = vld [vmem:[%s5 + $0x10] sm:$0xf]
        %v1088 = vld [vmem:[%s5 + $0x14] sm:$0xf]
        %v1089 = vld [vmem:[%s5 + $0x18] sm:$0xf]
        %v1090 = vld [vmem:[%s5 + $0x1c] sm:$0xf]
        %v1091 = vld [vmem:[%s5 + $0x20] sm:$0xf]
        %v1092 = vld [vmem:[%s5 + $0x24] sm:$0xf]
        %v1093 = vld [vmem:[%s5 + $0x28] sm:$0xf]
        %v1094 = vld [vmem:[%s5 + $0x2c] sm:$0xf]
        %v1095 = vld [vmem:[%s5 + $0x30] sm:$0xf]
        %v1096 = vld [vmem:[%s5 + $0x34] sm:$0xf]
        %v1097 = vld [vmem:[%s5 + $0x38] sm:$0xf]
        %v1098 = vld [vmem:[%s5 + $0x3c] sm:$0xf]
        %v1099 = vld [vmem:[%s5 + $0x40] sm:$0xf]
        %v1100 = vld [vmem:[%s5 + $0x44] sm:$0xf]
        %v1101 = vld [vmem:[%s5 + $0x48] sm:$0xf]
        %v1102 = vld [vmem:[%s5 + $0x4c] sm:$0xf]
        %v1103 = vld [vmem:[%s5 + $0x50] sm:$0xf]
        %v1104 = vld [vmem:[%s5 + $0x54] sm:$0xf]
        %v1105 = vld [vmem:[%s5 + $0x58] sm:$0xf]
        %v1106 = vld [vmem:[%s5 + $0x5c] sm:$0xf]
        %v1107 = vld [vmem:[%s5 + $0x60] sm:$0xf]
        %v1108 = vld [vmem:[%s5 + $0x64] sm:$0xf]
        %v1109 = vld [vmem:[%s5 + $0x68] sm:$0xf]
        %v1110 = vld [vmem:[%s5 + $0x6c] sm:$0xf]
        %v1111 = vld [vmem:[%s5 + $0x70] sm:$0xf]
        %v1112 = vld [vmem:[%s5 + $0x74] sm:$0xf]
        %v1113 = vld [vmem:[%s5 + $0x78] sm:$0xf]
        %v1114 = vld [vmem:[%s5 + $0x7c] sm:$0xf]
        %v1115 = vld [vmem:[%s5 + $0x80] sm:$0xf]
        %v1116 = vld [vmem:[%s5 + $0x84] sm:$0xf]
        %v1117 = vld [vmem:[%s5 + $0x88] sm:$0xf]
        %v1118 = vld [vmem:[%s5 + $0x8c] sm:$0xf]
        %v1119 = vld [vmem:[%s5 + $0x90] sm:$0xf]
        %v1120 = vld [vmem:[%s5 + $0x94] sm:$0xf]
        %v1121 = vld [vmem:[%s5 + $0x98] sm:$0xf]
        %v1122 = vld [vmem:[%s5 + $0x9c] sm:$0xf]
        %v1123 = vld [vmem:[%s5 + $0xa0] sm:$0xf]
        %v1124 = vld [vmem:[%s5 + $0xa4] sm:$0xf]
        %v1125 = vld [vmem:[%s5 + $0xa8] sm:$0xf]
        %v1126 = vld [vmem:[%s5 + $0xac] sm:$0xf]
        %v1127 = vld [vmem:[%s5 + $0xb0] sm:$0xf]
        %v1128 = vld [vmem:[%s5 + $0xb4] sm:$0xf]
        %v1129 = vld [vmem:[%s5 + $0xb8] sm:$0xf]
        %v1130 = vld [vmem:[%s5 + $0xbc] sm:$0xf]
        %v1131 = vld [vmem:[%s5 + $0xc0] sm:$0xf]
        %v1132 = vld [vmem:[%s5 + $0xc4] sm:$0xf]
        %v1133 = vld [vmem:[%s5 + $0xc8] sm:$0xf]
        %v1134 = vld [vmem:[%s5 + $0xcc] sm:$0xf]
        %v1135 = vld [vmem:[%s5 + $0xd0] sm:$0xf]
        %v1136 = vld [vmem:[%s5 + $0xd4] sm:$0xf]
        %v1137 = vld [vmem:[%s5 + $0xd8] sm:$0xf]
        %v1138 = vld [vmem:[%s5 + $0xdc] sm:$0xf]
        %v1139 = vld [vmem:[%s5 + $0xe0] sm:$0xf]
        %v1140 = vld [vmem:[%s5 + $0xe4] sm:$0xf]
        %v1141 = vld [vmem:[%s5 + $0xe8] sm:$0xf]
        %v1142 = vld [vmem:[%s5 + $0xec] sm:$0xf]
        %v1143 = vld [vmem:[%s5 + $0xf0] sm:$0xf]
        %v1144 = vld [vmem:[%s5 + $0xf4] sm:$0xf]
        %v1145 = vld [vmem:[%s5 + $0xf8] sm:$0xf]
        %v1146 = vld [vmem:[%s5 + $0xfc] sm:$0xf]
        %v1147 = vld [vmem:[%s6] sm:$0x1]
        %v1149 = vlaneseq
        %v1150 = vshrl.u32 %v1149, 7
        %v1151 = vsub.s32 0, %v1150
        %v1152 = vrot.slane %v1147, %v1151
        %v1218 = vunpack.c.l.b16 %v1083
        %v1219 = vunpack.c.l.b16 %v1084
        %v1220 = vunpack.c.l.b16 %v1085
        %v1221 = vunpack.c.l.b16 %v1086
        %v1222 = vunpack.c.l.b16 %v1087
        %v1223 = vunpack.c.l.b16 %v1088
        %v1224 = vunpack.c.l.b16 %v1089
        %v1225 = vunpack.c.l.b16 %v1090
        %v1226 = vunpack.c.l.b16 %v1091
        %v1227 = vunpack.c.l.b16 %v1092
        %v1228 = vunpack.c.l.b16 %v1093
        %v1229 = vunpack.c.l.b16 %v1094
        %v1230 = vunpack.c.l.b16 %v1095
        %v1231 = vunpack.c.l.b16 %v1096
        %v1232 = vunpack.c.l.b16 %v1097
        %v1233 = vunpack.c.l.b16 %v1098
        %v1234 = vunpack.c.l.b16 %v1099
        %v1235 = vunpack.c.l.b16 %v1100
        %v1236 = vunpack.c.l.b16 %v1101
        %v1237 = vunpack.c.l.b16 %v1102
        %v1238 = vunpack.c.l.b16 %v1103
        %v1239 = vunpack.c.l.b16 %v1104
        %v1240 = vunpack.c.l.b16 %v1105
        %v1241 = vunpack.c.l.b16 %v1106
        %v1242 = vunpack.c.l.b16 %v1107
        %v1243 = vunpack.c.l.b16 %v1108
        %v1244 = vunpack.c.l.b16 %v1109
        %v1245 = vunpack.c.l.b16 %v1110
        %v1246 = vunpack.c.l.b16 %v1111
        %v1247 = vunpack.c.l.b16 %v1112
        %v1248 = vunpack.c.l.b16 %v1113
        %v1249 = vunpack.c.l.b16 %v1114
        %v1250 = vunpack.c.l.b16 %v1115
        %v1251 = vunpack.c.l.b16 %v1116
        %v1252 = vunpack.c.l.b16 %v1117
        %v1253 = vunpack.c.l.b16 %v1118
        %v1254 = vunpack.c.l.b16 %v1119
        %v1255 = vunpack.c.l.b16 %v1120
        %v1256 = vunpack.c.l.b16 %v1121
        %v1257 = vunpack.c.l.b16 %v1122
        %v1258 = vunpack.c.l.b16 %v1123
        %v1259 = vunpack.c.l.b16 %v1124
        %v1260 = vunpack.c.l.b16 %v1125
        %v1261 = vunpack.c.l.b16 %v1126
        %v1262 = vunpack.c.l.b16 %v1127
        %v1263 = vunpack.c.l.b16 %v1128
        %v1264 = vunpack.c.l.b16 %v1129
        %v1265 = vunpack.c.l.b16 %v1130
        %v1266 = vunpack.c.l.b16 %v1131
        %v1267 = vunpack.c.l.b16 %v1132
        %v1268 = vunpack.c.l.b16 %v1133
        %v1269 = vunpack.c.l.b16 %v1134
        %v1270 = vunpack.c.l.b16 %v1135
        %v1271 = vunpack.c.l.b16 %v1136
        %v1272 = vunpack.c.l.b16 %v1137
        %v1273 = vunpack.c.l.b16 %v1138
        %v1274 = vunpack.c.l.b16 %v1139
        %v1275 = vunpack.c.l.b16 %v1140
        %v1276 = vunpack.c.l.b16 %v1141
        %v1277 = vunpack.c.l.b16 %v1142
        %v1278 = vunpack.c.l.b16 %v1143
        %v1279 = vunpack.c.l.b16 %v1144
        %v1280 = vunpack.c.l.b16 %v1145
        %v1281 = vunpack.c.l.b16 %v1146
        %v1282 = vpack.c.b16 %v1219, %v1218
        %v1283 = vpack.c.b16 %v1221, %v1220
        %v1284 = vpack.c.b16 %v1223, %v1222
        %v1285 = vpack.c.b16 %v1225, %v1224
        %v1286 = vpack.c.b16 %v1227, %v1226
        %v1287 = vpack.c.b16 %v1229, %v1228
        %v1288 = vpack.c.b16 %v1231, %v1230
        %v1289 = vpack.c.b16 %v1233, %v1232
        %v1290 = vpack.c.b16 %v1235, %v1234
        %v1291 = vpack.c.b16 %v1237, %v1236
        %v1292 = vpack.c.b16 %v1239, %v1238
        %v1293 = vpack.c.b16 %v1241, %v1240
        %v1294 = vpack.c.b16 %v1243, %v1242
        %v1295 = vpack.c.b16 %v1245, %v1244
        %v1296 = vpack.c.b16 %v1247, %v1246
        %v1297 = vpack.c.b16 %v1249, %v1248
        %v1298 = vpack.c.b16 %v1251, %v1250
        %v1299 = vpack.c.b16 %v1253, %v1252
        %v1300 = vpack.c.b16 %v1255, %v1254
        %v1301 = vpack.c.b16 %v1257, %v1256
        %v1302 = vpack.c.b16 %v1259, %v1258
        %v1303 = vpack.c.b16 %v1261, %v1260
        %v1304 = vpack.c.b16 %v1263, %v1262
        %v1305 = vpack.c.b16 %v1265, %v1264
        %v1306 = vpack.c.b16 %v1267, %v1266
        %v1307 = vpack.c.b16 %v1269, %v1268
        %v1308 = vpack.c.b16 %v1271, %v1270
        %v1309 = vpack.c.b16 %v1273, %v1272
        %v1310 = vpack.c.b16 %v1275, %v1274
        %v1311 = vpack.c.b16 %v1277, %v1276
        %v1312 = vpack.c.b16 %v1279, %v1278
        %v1313 = vpack.c.b16 %v1281, %v1280
        %1346 = vmatprep.subr.bf16.mxu0 0
        %1347 = vmatpush1.bf16.msra.mxu0 %v1282
        %1348 = vmatprep.subr.bf16.mxu0 0
        %1349 = vmatpush1.bf16.msra.mxu0 %v1283
        %1350 = vmatprep.subr.bf16.mxu0 0
        %1351 = vmatpush1.bf16.msra.mxu0 %v1284
        %1352 = vmatprep.subr.bf16.mxu0 0
        %1353 = vmatpush1.bf16.msra.mxu0 %v1285
        %1354 = vmatprep.subr.bf16.mxu0 0
        %1355 = vmatpush1.bf16.msra.mxu0 %v1286
        %1356 = vmatprep.subr.bf16.mxu0 0
        %1357 = vmatpush1.bf16.msra.mxu0 %v1287
        %1358 = vmatprep.subr.bf16.mxu0 0
        %1359 = vmatpush1.bf16.msra.mxu0 %v1288
        %1360 = vmatprep.subr.bf16.mxu0 0
        %1361 = vmatpush1.bf16.msra.mxu0 %v1289
        %1362 = vmatprep.subr.bf16.mxu0 0
        %1363 = vmatpush1.bf16.msra.mxu0 %v1290
        %1364 = vmatprep.subr.bf16.mxu0 0
        %1365 = vmatpush1.bf16.msra.mxu0 %v1291
        %1366 = vmatprep.subr.bf16.mxu0 0
        %1367 = vmatpush1.bf16.msra.mxu0 %v1292
        %1368 = vmatprep.subr.bf16.mxu0 0
        %1369 = vmatpush1.bf16.msra.mxu0 %v1293
        %1370 = vmatprep.subr.bf16.mxu0 0
        %1371 = vmatpush1.bf16.msra.mxu0 %v1294
        %1372 = vmatprep.subr.bf16.mxu0 0
        %1373 = vmatpush1.bf16.msra.mxu0 %v1295
        %1374 = vmatprep.subr.bf16.mxu0 0
        %1375 = vmatpush1.bf16.msra.mxu0 %v1296
        %1376 = vmatprep.subr.bf16.mxu0 0
        %1377 = vmatpush1.bf16.msra.mxu0 %v1297
        %1378 = vmatprep.mubr.bf16.mxu0 %v1068
        %1379 = vmatmul.mubr.bf16.gmra.mrb[0].mxu0 %v1067
        %v1380 = vpop.f32.mrb[0].mxu0
        %v1381 = vadd.f32 %v1152, %v1380
        %v1382 = vpop.f32.mrb[0].mxu0
        %v1383 = vpop.f32.mrb[0].mxu0
        %v1384 = vadd.f32 %v1152, %v1383
        %v1385 = vpop.f32.mrb[0].mxu0
        %1386 = vmatprep.mubr.bf16.mxu0 %v1072
        %1387 = vmatmul.mubr.bf16.gmra.mrb[0].mxu0 %v1071
        %v1388 = vpop.f32.mrb[0].mxu0
        %v1389 = vadd.f32 %v1152, %v1388
        %v1390 = vpop.f32.mrb[0].mxu0
        %v1391 = vpop.f32.mrb[0].mxu0
        %v1392 = vadd.f32 %v1152, %v1391
        %v1393 = vpop.f32.mrb[0].mxu0
        %1394 = vmatprep.mubr.bf16.mxu0 %v1076
        %1395 = vmatmul.mubr.bf16.gmra.mrb[0].mxu0 %v1075
        %v1396 = vpop.f32.mrb[0].mxu0
        %v1397 = vadd.f32 %v1152, %v1396
        %v1398 = vpop.f32.mrb[0].mxu0
        %v1399 = vpop.f32.mrb[0].mxu0
        %v1400 = vadd.f32 %v1152, %v1399
        %v1401 = vpop.f32.mrb[0].mxu0
        %1402 = vmatprep.mubr.bf16.mxu0 %v1080
        %1403 = vmatmul.mubr.bf16.gmra.mrb[0].mxu0 %v1079
        %v1404 = vpop.f32.mrb[0].mxu0
        %v1405 = vadd.f32 %v1152, %v1404
        %v1406 = vpop.f32.mrb[0].mxu0
        %v1407 = vpop.f32.mrb[0].mxu0
        %v1408 = vadd.f32 %v1152, %v1407
        %v1409 = vpop.f32.mrb[0].mxu0
        %1410 = vdwg.mxu0
        %1411 = vmatprep.subr.bf16.mxu0 0
        %1412 = vmatpush1.bf16.msra.mxu0 %v1298
        %1413 = vmatprep.subr.bf16.mxu0 0
        %1414 = vmatpush1.bf16.msra.mxu0 %v1299
        %1415 = vmatprep.subr.bf16.mxu0 0
        %1416 = vmatpush1.bf16.msra.mxu0 %v1300
        %1417 = vmatprep.subr.bf16.mxu0 0
        %1418 = vmatpush1.bf16.msra.mxu0 %v1301
        %1419 = vmatprep.subr.bf16.mxu0 0
        %1420 = vmatpush1.bf16.msra.mxu0 %v1302
        %1421 = vmatprep.subr.bf16.mxu0 0
        %1422 = vmatpush1.bf16.msra.mxu0 %v1303
        %1423 = vmatprep.subr.bf16.mxu0 0
        %1424 = vmatpush1.bf16.msra.mxu0 %v1304
        %1425 = vmatprep.subr.bf16.mxu0 0
        %1426 = vmatpush1.bf16.msra.mxu0 %v1305
        %1427 = vmatprep.subr.bf16.mxu0 0
        %1428 = vmatpush1.bf16.msra.mxu0 %v1306
        %1429 = vmatprep.subr.bf16.mxu0 0
        %1430 = vmatpush1.bf16.msra.mxu0 %v1307
        %1431 = vmatprep.subr.bf16.mxu0 0
        %1432 = vmatpush1.bf16.msra.mxu0 %v1308
        %1433 = vmatprep.subr.bf16.mxu0 0
        %1434 = vmatpush1.bf16.msra.mxu0 %v1309
        %1435 = vmatprep.subr.bf16.mxu0 0
        %1436 = vmatpush1.bf16.msra.mxu0 %v1310
        %1437 = vmatprep.subr.bf16.mxu0 0
        %1438 = vmatpush1.bf16.msra.mxu0 %v1311
        %1439 = vmatprep.subr.bf16.mxu0 0
        %1440 = vmatpush1.bf16.msra.mxu0 %v1312
        %1441 = vmatprep.subr.bf16.mxu0 0
        %1442 = vmatpush1.bf16.msra.mxu0 %v1313
        %1443 = vmatprep.mubr.bf16.mxu0 %v1070
        %1444 = vmatmul.mubr.bf16.gmra.mrb[0].mxu0 %v1069
        %v1445 = vpop.f32.mrb[0].mxu0
        %v1446 = vadd.f32 %v1381, %v1445
        %v1447 = vpop.f32.mrb[0].mxu0
        %v1448 = vpop.f32.mrb[0].mxu0
        %v1449 = vadd.f32 %v1384, %v1448
        %v1450 = vpop.f32.mrb[0].mxu0
        %1451 = vmatprep.mubr.bf16.mxu0 %v1074
        %1452 = vmatmul.mubr.bf16.gmra.mrb[0].mxu0 %v1073
        %v1453 = vpop.f32.mrb[0].mxu0
        %v1454 = vadd.f32 %v1389, %v1453
        %v1455 = vpop.f32.mrb[0].mxu0
        %v1456 = vpop.f32.mrb[0].mxu0
        %v1457 = vadd.f32 %v1392, %v1456
        %v1458 = vpop.f32.mrb[0].mxu0
        %1459 = vmatprep.mubr.bf16.mxu0 %v1078
        %1460 = vmatmul.mubr.bf16.gmra.mrb[0].mxu0 %v1077
        %v1461 = vpop.f32.mrb[0].mxu0
        %v1462 = vadd.f32 %v1397, %v1461
        %v1463 = vpop.f32.mrb[0].mxu0
        %v1464 = vpop.f32.mrb[0].mxu0
        %v1465 = vadd.f32 %v1400, %v1464
        %v1466 = vpop.f32.mrb[0].mxu0
        %1467 = vmatprep.mubr.bf16.mxu0 %v1082
        %1468 = vmatmul.mubr.bf16.gmra.mrb[0].mxu0 %v1081
        %v1469 = vpop.f32.mrb[0].mxu0
        %v1470 = vadd.f32 %v1405, %v1469
        %v1471 = vpop.f32.mrb[0].mxu0
        %v1472 = vpop.f32.mrb[0].mxu0
        %v1473 = vadd.f32 %v1408, %v1472
        %v1474 = vpop.f32.mrb[0].mxu0
        %1475 = vdwg.mxu0
        %v1476 = vadd.f32 %v289, %v1446
        %v1477 = vadd.f32 %v290, %v1449
        %v1478 = vadd.f32 %v291, %v1454
        %v1479 = vadd.f32 %v292, %v1457
        %v1480 = vadd.f32 %v293, %v1462
        %v1481 = vadd.f32 %v294, %v1465
        %v1482 = vadd.f32 %v295, %v1470
        %v1483 = vadd.f32 %v296, %v1473
        %1484 = vst [vmem:[%s272] sm:$0xff] %v1476
        %1485 = vst [vmem:[%s272 + $0x8] sm:$0xff] %v1477
        %1486 = vst [vmem:[%s272 + $0x10] sm:$0xff] %v1478
        %1487 = vst [vmem:[%s272 + $0x18] sm:$0xff] %v1479
        %1488 = vst [vmem:[%s272 + $0x20] sm:$0xff] %v1480
        %1489 = vst [vmem:[%s272 + $0x28] sm:$0xff] %v1481
        %1490 = vst [vmem:[%s272 + $0x30] sm:$0xff] %v1482
        %1491 = vst [vmem:[%s272 + $0x38] sm:$0xff] %v1483
        %s1492 = sand.u32 %s181, 1
        %s1493 = scalar_lea.sflag [#allocation3], %s1492
        %s1494 = sand.u32 %s181, 1
        %s1495 = smul.addr %s1494, 64
        %s1496 = scalar_lea.vmem [#allocation2], %s1495
        // Predicated region
        $region49: #{csa_block_forward.3} parent=47 // pred_check
          %p1497 = pneg %p191
        $region50: #{csa_block_forward.3} parent=47 // pred_check_branch
          %1499 = sbr.rel (%p1497) target = $region52
        $region51: #{csa_block_forward.3} parent=47 // pred_region
          %s1500 = smul.u32 8, %s21
          %s1502 = ssub.s32 1024, 1024
          %1503 = vsyncadd %s1493, %s1502
          %s1504 = smul.addr %s1500, 128
          %s1505 = scalar_lea.hbm %s7, %s1504
          %s1506 = sshll.u32 %s1496, 4
          %s1507 = int_to_ptr.vmem [resolvable:$true] %s1506
          %1512 = dma.vmem_to_hbm [thread:$0]  %s1507, 1024, %s1505, %s1493, 128, 128, 8
        $region52: #{csa_block_forward.3} parent=47 // pred_fallthru
          _
      $region48: #{csa_block_forward.3} parent=5 // pred_fallthru
        _
      %p1513 = scmp.le.s32.totalorder 2, %s16
      // Predicated region
      $region53: #{csa_block_forward.3} parent=5 // pred_check
        %p1514 = pneg %p1513
      $region54: #{csa_block_forward.3} parent=5 // pred_check_branch
        %1516 = sbr.rel (%p1514) target = $region56
      $region55: #{csa_block_forward.3} parent=5 // pred_region
        %s1517 = ssub.s32 %s16, 2
        // Predicated region
        $region57: #{csa_block_forward.3} parent=55 // pred_check
          %p1518 = pneg %p197
        $region58: #{csa_block_forward.3} parent=55 // pred_check_branch
          %1520 = sbr.rel (%p1518) target = $region60
        $region59: #{csa_block_forward.3} parent=55 // pred_region
          %s1521 = sand.u32 %s182, 1
          %s1522 = scalar_lea.sflag [#allocation3], %s1521
          %s1523 = sand.u32 %s182, 1
          %s1524 = smul.addr %s1523, 64
          %s1525 = scalar_lea.vmem [#allocation2], %s1524
          %1526 = dma.done %s1522, 1024
        $region60: #{csa_block_forward.3} parent=55 // pred_fallthru
          _
      $region56: #{csa_block_forward.3} parent=5 // pred_fallthru
        _
    $region6: #{csa_block_forward.3} parent=1 // loop_footer
      %s20 = sadd.s32 1, %s16
    $region7: #{csa_block_forward.3} parent=1 // loop_footer_branch
      %15 = sbr.rel target = $region3
    $region8: #{csa_block_forward.3} parent=1 // loop_exit
      _
    %1527 = vsyncpa [#allocation3], 1
    %s1528 = scalar_lea.sflag [#allocation3], 1
    %1529 = vsyncpa %s1528, 1

// kernel: csa_block_forward.2
$region0: #{csa_block_forward.2}
  #allocation0 [shape = 'u32[]', space=smem, size = 0x4, offset = 0x4, fixed_abs, tag = 'smem constant byte address 0x4 - core index']
  #allocation1 [shape = 'u32[144,128]{1,0:T(1,128)}', space=vmem, size = 0x12000, scoped, tag = 'internal scratch']
  %s0 = inlined_call_operand.vmem [shape: bf16[2,64,128], index: 0, kind: input, shape index: {}]
  %s1 = inlined_call_operand.vmem [shape: f32[1,128], index: 1, kind: input, shape index: {}]
  %s2 = inlined_call_operand.vmem [shape: f32[1,128], index: 2, kind: input, shape index: {}]
  %s3 = inlined_call_operand.vmem [shape: bf16[128,384], index: 3, kind: input, shape index: {}]
  %s4 = inlined_call_operand.vmem [shape: f32[1,384], index: 4, kind: input, shape index: {}]
  %s5 = inlined_call_operand.hbm [shape: f32[4,64,64], index: 5, kind: input, shape index: {}]
  %s6 = inlined_call_operand.hbm [shape: bf16[128,128], index: 6, kind: input, shape index: {}]
  %s7 = inlined_call_operand.vmem [shape: f32[1,128], index: 7, kind: input, shape index: {}]
  %s8 = inlined_call_operand.vmem [shape: bf16[2,64,128], index: 8, kind: output, shape index: {}]
  %s9 = sld [smem:[#allocation0]]
  $region73: #{csa_block_forward.2} parent=0
    _
  %s11 = ssub.s32 1, %s9
  %s12 = scalar_select 0, %s11, %s9
  $region1: #{csa_block_forward.2} parent=0
    #allocation2 [shape = 'u8[131072]{0}', space=vmem, size = 0x20000, scoped, tag = 'input window, operand 5, single buffered']
    #allocation3 [shape = 's32[2]{0}', space=sflag, size = 0x8, scoped, tag = 'scoped memory for csa_block_forward.2']
    #allocation4 [shape = 'u8[32768]{0}', space=vmem, size = 0x8000, scoped, tag = 'input window, operand 6, single buffered']
    #allocation5 [shape = 's32[1]{0}', space=sflag, size = 0x4, scoped, tag = 'scoped memory for csa_block_forward.2']
    %13 = vsyncpa [#allocation3], 0
    %14 = vsyncpa [#allocation5], 0
    loop: start=0, step=1, limit=4
    $region2: #{csa_block_forward.2} parent=1 // loop_pre_header
      _
    $region3: #{csa_block_forward.2} parent=1 // loop_header
      %s16 = sphi 0, %s20
      %p17 = scmp.ge.s32.totalorder %s16, 4
      %s26 = sphi 0, %s28
      %s29 = sphi 0, %s26
      %s30 = sphi 0, %s29
      %s46 = sphi 0, %s30
      %s50 = sphi 0, %s50
      %s52 = sphi 0, %s50
      %s53 = sphi 0, %s52
      %s67 = sphi 0, %s53
      %s71 = sphi 0, %s71
      %s73 = sphi 0, %s71
      %s74 = sphi 0, %s73
      %s88 = sphi 0, %s74
      %s92 = sphi 0, %s92
      %s94 = sphi 0, %s92
      %s95 = sphi 0, %s94
      %s109 = sphi 0, %s95
      %s113 = sphi 0, %s113
      %s115 = sphi 0, %s113
      %s116 = sphi 0, %s115
      %s130 = sphi 0, %s116
      %s134 = sphi 0, %s134
      %s136 = sphi 0, %s134
      %s137 = sphi 0, %s136
      %s151 = sphi 0, %s137
      %s155 = sphi 0, %s155
      %s157 = sphi 0, %s155
      %s158 = sphi 0, %s157
      %s172 = sphi 0, %s158
      %s176 = sphi 0, %s176
      %s178 = sphi 0, %s176
      %s179 = sphi 0, %s178
      %s193 = sphi 0, %s179
      %s199 = sphi 0, %s201
      %s202 = sphi 0, %s199
      %s203 = sphi 0, %s202
      %s219 = sphi 0, %s203
    $region4: #{csa_block_forward.2} parent=1 // loop_header_branch
      %19 = sbr.rel (%p17) target = $region8
    $region5: #{csa_block_forward.2} parent=1 // loop_body
      %s21 = ssub.s32 %s16, 1
      %s22 = ssub.s32 %s16, 2
      %s23 = sadd.s32 %s16, 1
      %s24 = ssub.s32 %s16, %s23
      %p25 = scmp.eq.s32.totalorder %s24, 0
      %s27 = sadd.s32 %s26, 1
      %s28 = scalar_select %p25, %s26, %s27
      %p31 = pneg %p25
      %p32 = scmp.eq.s32.totalorder %s16, 1
      %p33 = por %p31, %p32
      %p34 = scmp.ne.s32.totalorder %s26, %s29
      %p35 = scmp.eq.s32.totalorder %s16, 0
      %p36 = por %p34, %p35
      %p37 = scmp.ne.s32.totalorder %s26, %s29
      %p38 = scmp.eq.s32.totalorder %s21, 1
      %p39 = por %p37, %p38
      %p40 = scmp.ne.s32.totalorder %s29, %s30
      %p41 = scmp.eq.s32.totalorder %s21, 0
      %p42 = por %p40, %p41
      %p43 = scmp.ne.s32.totalorder %s29, %s30
      %p44 = scmp.eq.s32.totalorder %s22, 1
      %p45 = por %p43, %p44
      %p47 = scmp.ne.s32.totalorder %s30, %s46
      %p48 = scmp.eq.s32.totalorder %s22, 0
      %p49 = por %p47, %p48
      %s51 = sadd.s32 %s50, 1
      %p54 = scmp.eq.s32.totalorder %s16, 1
      %p55 = scmp.ne.s32.totalorder %s50, %s52
      %p56 = scmp.eq.s32.totalorder %s16, 0
      %p57 = por %p55, %p56
      %p58 = scmp.ne.s32.totalorder %s50, %s52
      %p59 = scmp.eq.s32.totalorder %s21, 1
      %p60 = por %p58, %p59
      %p61 = scmp.ne.s32.totalorder %s52, %s53
      %p62 = scmp.eq.s32.totalorder %s21, 0
      %p63 = por %p61, %p62
      %p64 = scmp.ne.s32.totalorder %s52, %s53
      %p65 = scmp.eq.s32.totalorder %s22, 1
      %p66 = por %p64, %p65
      %p68 = scmp.ne.s32.totalorder %s53, %s67
      %p69 = scmp.eq.s32.totalorder %s22, 0
      %p70 = por %p68, %p69
      %s72 = sadd.s32 %s71, 1
      %p75 = scmp.eq.s32.totalorder %s16, 1
      %p76 = scmp.ne.s32.totalorder %s71, %s73
      %p77 = scmp.eq.s32.totalorder %s16, 0
      %p78 = por %p76, %p77
      %p79 = scmp.ne.s32.totalorder %s71, %s73
      %p80 = scmp.eq.s32.totalorder %s21, 1
      %p81 = por %p79, %p80
      %p82 = scmp.ne.s32.totalorder %s73, %s74
      %p83 = scmp.eq.s32.totalorder %s21, 0
      %p84 = por %p82, %p83
      %p85 = scmp.ne.s32.totalorder %s73, %s74
      %p86 = scmp.eq.s32.totalorder %s22, 1
      %p87 = por %p85, %p86
      %p89 = scmp.ne.s32.totalorder %s74, %s88
      %p90 = scmp.eq.s32.totalorder %s22, 0
      %p91 = por %p89, %p90
      %s93 = sadd.s32 %s92, 1
      %p96 = scmp.eq.s32.totalorder %s16, 1
      %p97 = scmp.ne.s32.totalorder %s92, %s94
      %p98 = scmp.eq.s32.totalorder %s16, 0
      %p99 = por %p97, %p98
      %p100 = scmp.ne.s32.totalorder %s92, %s94
      %p101 = scmp.eq.s32.totalorder %s21, 1
      %p102 = por %p100, %p101
      %p103 = scmp.ne.s32.totalorder %s94, %s95
      %p104 = scmp.eq.s32.totalorder %s21, 0
      %p105 = por %p103, %p104
      %p106 = scmp.ne.s32.totalorder %s94, %s95
      %p107 = scmp.eq.s32.totalorder %s22, 1
      %p108 = por %p106, %p107
      %p110 = scmp.ne.s32.totalorder %s95, %s109
      %p111 = scmp.eq.s32.totalorder %s22, 0
      %p112 = por %p110, %p111
      %s114 = sadd.s32 %s113, 1
      %p117 = scmp.eq.s32.totalorder %s16, 1
      %p118 = scmp.ne.s32.totalorder %s113, %s115
      %p119 = scmp.eq.s32.totalorder %s16, 0
      %p120 = por %p118, %p119
      %p121 = scmp.ne.s32.totalorder %s113, %s115
      %p122 = scmp.eq.s32.totalorder %s21, 1
      %p123 = por %p121, %p122
      %p124 = scmp.ne.s32.totalorder %s115, %s116
      %p125 = scmp.eq.s32.totalorder %s21, 0
      %p126 = por %p124, %p125
      %p127 = scmp.ne.s32.totalorder %s115, %s116
      %p128 = scmp.eq.s32.totalorder %s22, 1
      %p129 = por %p127, %p128
      %p131 = scmp.ne.s32.totalorder %s116, %s130
      %p132 = scmp.eq.s32.totalorder %s22, 0
      %p133 = por %p131, %p132
      %s135 = sadd.s32 %s134, 1
      %p138 = scmp.eq.s32.totalorder %s16, 1
      %p139 = scmp.ne.s32.totalorder %s134, %s136
      %p140 = scmp.eq.s32.totalorder %s16, 0
      %p141 = por %p139, %p140
      %p142 = scmp.ne.s32.totalorder %s134, %s136
      %p143 = scmp.eq.s32.totalorder %s21, 1
      %p144 = por %p142, %p143
      %p145 = scmp.ne.s32.totalorder %s136, %s137
      %p146 = scmp.eq.s32.totalorder %s21, 0
      %p147 = por %p145, %p146
      %p148 = scmp.ne.s32.totalorder %s136, %s137
      %p149 = scmp.eq.s32.totalorder %s22, 1
      %p150 = por %p148, %p149
      %p152 = scmp.ne.s32.totalorder %s137, %s151
      %p153 = scmp.eq.s32.totalorder %s22, 0
      %p154 = por %p152, %p153
      %s156 = sadd.s32 %s155, 1
      %p159 = scmp.eq.s32.totalorder %s16, 1
      %p160 = scmp.ne.s32.totalorder %s155, %s157
      %p161 = scmp.eq.s32.totalorder %s16, 0
      %p162 = por %p160, %p161
      %p163 = scmp.ne.s32.totalorder %s155, %s157
      %p164 = scmp.eq.s32.totalorder %s21, 1
      %p165 = por %p163, %p164
      %p166 = scmp.ne.s32.totalorder %s157, %s158
      %p167 = scmp.eq.s32.totalorder %s21, 0
      %p168 = por %p166, %p167
      %p169 = scmp.ne.s32.totalorder %s157, %s158
      %p170 = scmp.eq.s32.totalorder %s22, 1
      %p171 = por %p169, %p170
      %p173 = scmp.ne.s32.totalorder %s158, %s172
      %p174 = scmp.eq.s32.totalorder %s22, 0
      %p175 = por %p173, %p174
      %s177 = sadd.s32 %s176, 1
      %p180 = scmp.eq.s32.totalorder %s16, 1
      %p181 = scmp.ne.s32.totalorder %s176, %s178
      %p182 = scmp.eq.s32.totalorder %s16, 0
      %p183 = por %p181, %p182
      %p184 = scmp.ne.s32.totalorder %s176, %s178
      %p185 = scmp.eq.s32.totalorder %s21, 1
      %p186 = por %p184, %p185
      %p187 = scmp.ne.s32.totalorder %s178, %s179
      %p188 = scmp.eq.s32.totalorder %s21, 0
      %p189 = por %p187, %p188
      %p190 = scmp.ne.s32.totalorder %s178, %s179
      %p191 = scmp.eq.s32.totalorder %s22, 1
      %p192 = por %p190, %p191
      %p194 = scmp.ne.s32.totalorder %s179, %s193
      %p195 = scmp.eq.s32.totalorder %s22, 0
      %p196 = por %p194, %p195
      %s197 = ssub.s32 %s16, %s23
      %p198 = scmp.eq.s32.totalorder %s197, 0
      %s200 = sadd.s32 %s199, 1
      %s201 = scalar_select %p198, %s199, %s200
      %p204 = pneg %p198
      %p205 = scmp.eq.s32.totalorder %s16, 1
      %p206 = por %p204, %p205
      %p207 = scmp.ne.s32.totalorder %s199, %s202
      %p208 = scmp.eq.s32.totalorder %s16, 0
      %p209 = por %p207, %p208
      %p210 = scmp.ne.s32.totalorder %s199, %s202
      %p211 = scmp.eq.s32.totalorder %s21, 1
      %p212 = por %p210, %p211
      %p213 = scmp.ne.s32.totalorder %s202, %s203
      %p214 = scmp.eq.s32.totalorder %s21, 0
      %p215 = por %p213, %p214
      %p216 = scmp.ne.s32.totalorder %s202, %s203
      %p217 = scmp.eq.s32.totalorder %s22, 1
      %p218 = por %p216, %p217
      %p220 = scmp.ne.s32.totalorder %s203, %s219
      %p221 = scmp.eq.s32.totalorder %s22, 0
      %p222 = por %p220, %p221
      %p223 = scmp.le.s32.totalorder 1, %s16
      %p224 = scmp.lt.s32.totalorder %s16, 3
      %p225 = pnand %p223, %p224
      %p226 = pneg %p225
      // Predicated region
      $region9: #{csa_block_forward.2} parent=5 // pred_check
        _
      $region10: #{csa_block_forward.2} parent=5 // pred_check_branch
        %228 = sbr.rel (%p225) target = $region12
      $region11: #{csa_block_forward.2} parent=5 // pred_region
        %s229 = ssub.s32 %s16, 1
        // Predicated region
        $region13: #{csa_block_forward.2} parent=11 // pred_check
          %p230 = pneg %p63
        $region14: #{csa_block_forward.2} parent=11 // pred_check_branch
          %232 = sbr.rel (%p230) target = $region16
        $region15: #{csa_block_forward.2} parent=11 // pred_region
          _
        $region16: #{csa_block_forward.2} parent=11 // pred_fallthru
          _
        // Predicated region
        $region17: #{csa_block_forward.2} parent=11 // pred_check
          %p233 = pneg %p84
        $region18: #{csa_block_forward.2} parent=11 // pred_check_branch
          %235 = sbr.rel (%p233) target = $region20
        $region19: #{csa_block_forward.2} parent=11 // pred_region
          _
        $region20: #{csa_block_forward.2} parent=11 // pred_fallthru
          _
        // Predicated region
        $region21: #{csa_block_forward.2} parent=11 // pred_check
          %p236 = pneg %p105
        $region22: #{csa_block_forward.2} parent=11 // pred_check_branch
          %238 = sbr.rel (%p236) target = $region24
        $region23: #{csa_block_forward.2} parent=11 // pred_region
          _
        $region24: #{csa_block_forward.2} parent=11 // pred_fallthru
          _
        // Predicated region
        $region25: #{csa_block_forward.2} parent=11 // pred_check
          %p239 = pneg %p126
        $region26: #{csa_block_forward.2} parent=11 // pred_check_branch
          %241 = sbr.rel (%p239) target = $region28
        $region27: #{csa_block_forward.2} parent=11 // pred_region
          _
        $region28: #{csa_block_forward.2} parent=11 // pred_fallthru
          _
        // Predicated region
        $region29: #{csa_block_forward.2} parent=11 // pred_check
          %p242 = pneg %p147
        $region30: #{csa_block_forward.2} parent=11 // pred_check_branch
          %244 = sbr.rel (%p242) target = $region32
        $region31: #{csa_block_forward.2} parent=11 // pred_region
          %s246 = ssub.s32 4096, 4096
          %247 = vsyncadd [#allocation3], %s246
          %s248 = sshll.u32 [#allocation2], 4
          %s249 = int_to_ptr.vmem [resolvable:$true] %s248
          %254 = dma.hbm_to_vmem [thread:$0]  %s5, 4096, %s249, [#allocation3], 128, 128, 8
        $region32: #{csa_block_forward.2} parent=11 // pred_fallthru
          _
        // Predicated region
        $region33: #{csa_block_forward.2} parent=11 // pred_check
          %p255 = pneg %p168
        $region34: #{csa_block_forward.2} parent=11 // pred_check_branch
          %257 = sbr.rel (%p255) target = $region36
        $region35: #{csa_block_forward.2} parent=11 // pred_region
          %s259 = ssub.s32 1024, 1024
          %260 = vsyncadd [#allocation5], %s259
          %s261 = sshll.u32 [#allocation4], 4
          %s262 = int_to_ptr.vmem [resolvable:$true] %s261
          %267 = dma.hbm_to_vmem [thread:$0]  %s6, 1024, %s262, [#allocation5], 64, 64, 4
        $region36: #{csa_block_forward.2} parent=11 // pred_fallthru
          _
        // Predicated region
        $region37: #{csa_block_forward.2} parent=11 // pred_check
          %p268 = pneg %p189
        $region38: #{csa_block_forward.2} parent=11 // pred_check_branch
          %270 = sbr.rel (%p268) target = $region40
        $region39: #{csa_block_forward.2} parent=11 // pred_region
          _
        $region40: #{csa_block_forward.2} parent=11 // pred_fallthru
          _
      $region12: #{csa_block_forward.2} parent=5 // pred_fallthru
        _
      %p271 = scmp.lt.s32.totalorder %s16, 2
      // Predicated region
      $region41: #{csa_block_forward.2} parent=5 // pred_check
        %p272 = pneg %p271
      $region42: #{csa_block_forward.2} parent=5 // pred_check_branch
        %274 = sbr.rel (%p272) target = $region44
      $region43: #{csa_block_forward.2} parent=5 // pred_region
        // Predicated region
        $region45: #{csa_block_forward.2} parent=43 // pred_check
          %p275 = pneg %p36
        $region46: #{csa_block_forward.2} parent=43 // pred_check_branch
          %277 = sbr.rel (%p275) target = $region48
        $region47: #{csa_block_forward.2} parent=43 // pred_region
          %p278 = scmp.lt.s32.totalorder %s16, 1
          %s279 = scalar_select %p278, %s16, 1
          %s280 = smul.addr %s279, 8
          %s281 = smul.addr %s280, 4
          %s282 = scalar_lea.vmem %s0, %s281
        $region48: #{csa_block_forward.2} parent=43 // pred_fallthru
          _
      $region44: #{csa_block_forward.2} parent=5 // pred_fallthru
        _
      %p283 = scmp.le.s32.totalorder 1, %s16
      %p284 = scmp.lt.s32.totalorder %s16, 3
      %p285 = pnand %p283, %p284
      %p286 = pneg %p285
      // Predicated region
      $region49: #{csa_block_forward.2} parent=5 // pred_check
        _
      $region50: #{csa_block_forward.2} parent=5 // pred_check_branch
        %288 = sbr.rel (%p285) target = $region52
      $region51: #{csa_block_forward.2} parent=5 // pred_region
        %s289 = ssub.s32 %s16, 1
        // Predicated region
        $region53: #{csa_block_forward.2} parent=51 // pred_check
          %p290 = pneg %p147
        $region54: #{csa_block_forward.2} parent=51 // pred_check_branch
          %292 = sbr.rel (%p290) target = $region56
        $region55: #{csa_block_forward.2} parent=51 // pred_region
          %293 = dma.done [#allocation3], 4096
        $region56: #{csa_block_forward.2} parent=51 // pred_fallthru
          _
        // Predicated region
        $region57: #{csa_block_forward.2} parent=51 // pred_check
          %p294 = pneg %p168
        $region58: #{csa_block_forward.2} parent=51 // pred_check_branch
          %296 = sbr.rel (%p294) target = $region60
        $region59: #{csa_block_forward.2} parent=51 // pred_region
          %297 = dma.done [#allocation5], 1024
        $region60: #{csa_block_forward.2} parent=51 // pred_fallthru
          _
        %p298 = scmp.lt.s32.totalorder %s21, 1
        %s299 = scalar_select %p298, %s21, 1
        %s300 = smul.addr %s299, 8
        %s301 = smul.addr %s300, 4
        %s302 = scalar_lea.vmem %s0, %s301
        %p303 = pneg %p42
        %p304 = pneg %p39
        %p305 = pneg %p63
        %p306 = pneg %p60
        %p307 = pneg %p84
        %p308 = pneg %p81
        %p309 = pneg %p105
        %p310 = pneg %p102
        %p311 = pneg %p126
        %p312 = pneg %p123
        %p313 = pneg %p147
        %p314 = pneg %p144
        %p315 = pneg %p168
        %p316 = pneg %p165
        %p317 = pneg %p189
        %p318 = pneg %p186
        %p319 = pneg %p215
        %p320 = pneg %p212
        %p321 = scmp.lt.s32.totalorder %s21, 1
        %s322 = scalar_select %p321, %s21, 1
        %s323 = smul.addr %s322, 8
        %s324 = smul.addr %s323, 4
        %s325 = scalar_lea.vmem %s8, %s324
        %p326 = scmp.lt.s32.totalorder %s21, 1
        %s327 = scalar_select %p326, %s21, 1
        %s328 = smul.addr %s327, 8
        %s329 = smul.addr %s328, 4
        %s330 = scalar_lea.vmem %s0, %s329
        %p331 = scmp.lt.s32.totalorder %s21, 1
        %s332 = scalar_select %p331, %s21, 1
        %s333 = smul.addr %s332, 8
        %s334 = smul.addr %s333, 4
        %s335 = scalar_lea.vmem %s8, %s334
        %v337 = vld [vmem:[%s330] sm:$0xf]
        %v338 = vld [vmem:[%s330 + $0x4] sm:$0xf]
        %v339 = vld [vmem:[%s330 + $0x8] sm:$0xf]
        %v340 = vld [vmem:[%s330 + $0xc] sm:$0xf]
        %v341 = vld [vmem:[%s330 + $0x10] sm:$0xf]
        %v342 = vld [vmem:[%s330 + $0x14] sm:$0xf]
        %v343 = vld [vmem:[%s330 + $0x18] sm:$0xf]
        %v344 = vld [vmem:[%s330 + $0x1c] sm:$0xf]
        %v345 = vunpack.c.l.bf16 %v337
        %v346 = vunpack.c.l.bf16 %v338
        %v347 = vunpack.c.l.bf16 %v339
        %v348 = vunpack.c.l.bf16 %v340
        %v349 = vunpack.c.l.bf16 %v341
        %v350 = vunpack.c.l.bf16 %v342
        %v351 = vunpack.c.l.bf16 %v343
        %v352 = vunpack.c.l.bf16 %v344
        %353 = vadd.xlane.f32.xlu0 %v345
        %v354 = vpop.xlane.xlu0 %353
        %355 = vadd.xlane.f32.xlu0 %v346
        %v356 = vpop.xlane.xlu0 %355
        %357 = vadd.xlane.f32.xlu0 %v347
        %v358 = vpop.xlane.xlu0 %357
        %359 = vadd.xlane.f32.xlu0 %v348
        %v360 = vpop.xlane.xlu0 %359
        %361 = vadd.xlane.f32.xlu0 %v349
        %v362 = vpop.xlane.xlu0 %361
        %363 = vadd.xlane.f32.xlu0 %v350
        %v364 = vpop.xlane.xlu0 %363
        %365 = vadd.xlane.f32.xlu0 %v351
        %v366 = vpop.xlane.xlu0 %365
        %367 = vadd.xlane.f32.xlu0 %v352
        %v368 = vpop.xlane.xlu0 %367
        %v369 = vmul.f32 %v354, 0.0078125
        %v370 = vmul.f32 %v356, 0.0078125
        %v371 = vmul.f32 %v358, 0.0078125
        %v372 = vmul.f32 %v360, 0.0078125
        %v373 = vmul.f32 %v362, 0.0078125
        %v374 = vmul.f32 %v364, 0.0078125
        %v375 = vmul.f32 %v366, 0.0078125
        %v376 = vmul.f32 %v368, 0.0078125
        %v377 = vsub.f32 %v345, %v369
        %v378 = vsub.f32 %v346, %v370
        %v379 = vsub.f32 %v347, %v371
        %v380 = vsub.f32 %v348, %v372
        %v381 = vsub.f32 %v349, %v373
        %v382 = vsub.f32 %v350, %v374
        %v383 = vsub.f32 %v351, %v375
        %v384 = vsub.f32 %v352, %v376
        %v385 = vmul.f32 %v377, %v377
        %v386 = vmul.f32 %v378, %v378
        %v387 = vmul.f32 %v379, %v379
        %v388 = vmul.f32 %v380, %v380
        %v389 = vmul.f32 %v381, %v381
        %v390 = vmul.f32 %v382, %v382
        %v391 = vmul.f32 %v383, %v383
        %v392 = vmul.f32 %v384, %v384
        %393 = vadd.xlane.f32.xlu0 %v385
        %v394 = vpop.xlane.xlu0 %393
        %395 = vadd.xlane.f32.xlu0 %v386
        %v396 = vpop.xlane.xlu0 %395
        %397 = vadd.xlane.f32.xlu0 %v387
        %v398 = vpop.xlane.xlu0 %397
        %399 = vadd.xlane.f32.xlu0 %v388
        %v400 = vpop.xlane.xlu0 %399
        %401 = vadd.xlane.f32.xlu0 %v389
        %v402 = vpop.xlane.xlu0 %401
        %403 = vadd.xlane.f32.xlu0 %v390
        %v404 = vpop.xlane.xlu0 %403
        %405 = vadd.xlane.f32.xlu0 %v391
        %v406 = vpop.xlane.xlu0 %405
        %407 = vadd.xlane.f32.xlu0 %v392
        %v408 = vpop.xlane.xlu0 %407
        %v409 = vmul.f32 %v394, 0.0078125
        %v410 = vmul.f32 %v396, 0.0078125
        %v411 = vmul.f32 %v398, 0.0078125
        %v412 = vmul.f32 %v400, 0.0078125
        %v413 = vmul.f32 %v402, 0.0078125
        %v414 = vmul.f32 %v404, 0.0078125
        %v415 = vmul.f32 %v406, 0.0078125
        %v416 = vmul.f32 %v408, 0.0078125
        %v417 = vadd.f32 %v409, 1e-05
        %v418 = vadd.f32 %v410, 1e-05
        %v419 = vadd.f32 %v411, 1e-05
        %v420 = vadd.f32 %v412, 1e-05
        %v421 = vadd.f32 %v413, 1e-05
        %v422 = vadd.f32 %v414, 1e-05
        %v423 = vadd.f32 %v415, 1e-05
        %v424 = vadd.f32 %v416, 1e-05
        %v425 = vrsqrt.pop %v417
        %v426 = vrsqrt.pop %v418
        %v427 = vrsqrt.pop %v419
        %v428 = vrsqrt.pop %v420
        %v429 = vrsqrt.pop %v421
        %v430 = vrsqrt.pop %v422
        %v431 = vrsqrt.pop %v423
        %v432 = vrsqrt.pop %v424
        %v433 = vld [vmem:[%s1] sm:$0x1]
        %v435 = vlaneseq
        %v436 = vshrl.u32 %v435, 7
        %v437 = vsub.s32 0, %v436
        %v438 = vrot.slane %v433, %v437
        %v440 = vmul.f32 %v425, %v438
        %v441 = vmul.f32 %v426, %v438
        %v442 = vmul.f32 %v427, %v438
        %v443 = vmul.f32 %v428, %v438
        %v444 = vmul.f32 %v429, %v438
        %v445 = vmul.f32 %v430, %v438
        %v446 = vmul.f32 %v431, %v438
        %v447 = vmul.f32 %v432, %v438
        %v448 = vmul.f32 %v377, %v440
        %v449 = vmul.f32 %v378, %v441
        %v450 = vmul.f32 %v379, %v442
        %v451 = vmul.f32 %v380, %v443
        %v452 = vmul.f32 %v381, %v444
        %v453 = vmul.f32 %v382, %v445
        %v454 = vmul.f32 %v383, %v446
        %v455 = vmul.f32 %v384, %v447
        %v456 = vld [vmem:[%s2] sm:$0x1]
        %v458 = vlaneseq
        %v459 = vshrl.u32 %v458, 7
        %v460 = vsub.s32 0, %v459
        %v461 = vrot.slane %v456, %v460
        %v463 = vadd.f32 %v448, %v461
        %v464 = vadd.f32 %v449, %v461
        %v465 = vadd.f32 %v450, %v461
        %v466 = vadd.f32 %v451, %v461
        %v467 = vadd.f32 %v452, %v461
        %v468 = vadd.f32 %v453, %v461
        %v469 = vadd.f32 %v454, %v461
        %v470 = vadd.f32 %v455, %v461
        %v471 = vpack.c.bf16 %v464, %v463
        %v472 = vpack.c.bf16 %v466, %v465
        %v473 = vpack.c.bf16 %v468, %v467
        %v474 = vpack.c.bf16 %v470, %v469
        %v475 = vld [vmem:[%s3] sm:$0xff]
        %v476 = vld [vmem:[%s3 + $0x8] sm:$0xf]
        %v477 = vld [vmem:[%s3 + $0xc] sm:$0xff]
        %v478 = vld [vmem:[%s3 + $0x14] sm:$0xf]
        %v479 = vld [vmem:[%s3 + $0x18] sm:$0xff]
        %v480 = vld [vmem:[%s3 + $0x20] sm:$0xf]
        %v481 = vld [vmem:[%s3 + $0x24] sm:$0xff]
        %v482 = vld [vmem:[%s3 + $0x2c] sm:$0xf]
        %v483 = vld [vmem:[%s3 + $0x30] sm:$0xff]
        %v484 = vld [vmem:[%s3 + $0x38] sm:$0xf]
        %v485 = vld [vmem:[%s3 + $0x3c] sm:$0xff]
        %v486 = vld [vmem:[%s3 + $0x44] sm:$0xf]
        %v487 = vld [vmem:[%s3 + $0x48] sm:$0xff]
        %v488 = vld [vmem:[%s3 + $0x50] sm:$0xf]
        %v489 = vld [vmem:[%s3 + $0x54] sm:$0xff]
        %v490 = vld [vmem:[%s3 + $0x5c] sm:$0xf]
        %v491 = vld [vmem:[%s3 + $0x60] sm:$0xff]
        %v492 = vld [vmem:[%s3 + $0x68] sm:$0xf]
        %v493 = vld [vmem:[%s3 + $0x6c] sm:$0xff]
        %v494 = vld [vmem:[%s3 + $0x74] sm:$0xf]
        %v495 = vld [vmem:[%s3 + $0x78] sm:$0xff]
        %v496 = vld [vmem:[%s3 + $0x80] sm:$0xf]
        %v497 = vld [vmem:[%s3 + $0x84] sm:$0xff]
        %v498 = vld [vmem:[%s3 + $0x8c] sm:$0xf]
        %v499 = vld [vmem:[%s3 + $0x90] sm:$0xff]
        %v500 = vld [vmem:[%s3 + $0x98] sm:$0xf]
        %v501 = vld [vmem:[%s3 + $0x9c] sm:$0xff]
        %v502 = vld [vmem:[%s3 + $0xa4] sm:$0xf]
        %v503 = vld [vmem:[%s3 + $0xa8] sm:$0xff]
        %v504 = vld [vmem:[%s3 + $0xb0] sm:$0xf]
        %v505 = vld [vmem:[%s3 + $0xb4] sm:$0xff]
        %v506 = vld [vmem:[%s3 + $0xbc] sm:$0xf]
        %v507 = vld [vmem:[%s4] sm:$0x7]
        %v509 = vlaneseq
        %v510 = vshrl.u32 %v509, 7
        %v511 = vsub.s32 0, %v510
        %v512 = vrot.slane %v507, %v511
        %v513 = vlaneseq
        %v514 = vshrl.u32 %v513, 7
        %v515 = vsub.s32 1, %v514
        %v516 = vrot.slane %v507, %v515
        %v517 = vlaneseq
        %v518 = vshrl.u32 %v517, 7
        %v519 = vsub.s32 2, %v518
        %v520 = vrot.slane %v507, %v519
        %v556 = vunpack.c.l.b16 %v475
        %v557 = vunpack.c.h.b16 %v475
        %v558 = vunpack.c.l.b16 %v476
        %v559 = vunpack.c.l.b16 %v477
        %v560 = vunpack.c.h.b16 %v477
        %v561 = vunpack.c.l.b16 %v478
        %v562 = vunpack.c.l.b16 %v479
        %v563 = vunpack.c.h.b16 %v479
        %v564 = vunpack.c.l.b16 %v480
        %v565 = vunpack.c.l.b16 %v481
        %v566 = vunpack.c.h.b16 %v481
        %v567 = vunpack.c.l.b16 %v482
        %v568 = vunpack.c.l.b16 %v483
        %v569 = vunpack.c.h.b16 %v483
        %v570 = vunpack.c.l.b16 %v484
        %v571 = vunpack.c.l.b16 %v485
        %v572 = vunpack.c.h.b16 %v485
        %v573 = vunpack.c.l.b16 %v486
        %v574 = vunpack.c.l.b16 %v487
        %v575 = vunpack.c.h.b16 %v487
        %v576 = vunpack.c.l.b16 %v488
        %v577 = vunpack.c.l.b16 %v489
        %v578 = vunpack.c.h.b16 %v489
        %v579 = vunpack.c.l.b16 %v490
        %v580 = vunpack.c.l.b16 %v491
        %v581 = vunpack.c.h.b16 %v491
        %v582 = vunpack.c.l.b16 %v492
        %v583 = vunpack.c.l.b16 %v493
        %v584 = vunpack.c.h.b16 %v493
        %v585 = vunpack.c.l.b16 %v494
        %v586 = vunpack.c.l.b16 %v495
        %v587 = vunpack.c.h.b16 %v495
        %v588 = vunpack.c.l.b16 %v496
        %v589 = vunpack.c.l.b16 %v497
        %v590 = vunpack.c.h.b16 %v497
        %v591 = vunpack.c.l.b16 %v498
        %v592 = vunpack.c.l.b16 %v499
        %v593 = vunpack.c.h.b16 %v499
        %v594 = vunpack.c.l.b16 %v500
        %v595 = vunpack.c.l.b16 %v501
        %v596 = vunpack.c.h.b16 %v501
        %v597 = vunpack.c.l.b16 %v502
        %v598 = vunpack.c.l.b16 %v503
        %v599 = vunpack.c.h.b16 %v503
        %v600 = vunpack.c.l.b16 %v504
        %v601 = vunpack.c.l.b16 %v505
        %v602 = vunpack.c.h.b16 %v505
        %v603 = vunpack.c.l.b16 %v506
        %v604 = vpack.c.b16 %v559, %v556
        %v605 = vpack.c.b16 %v560, %v557
        %v606 = vpack.c.b16 %v561, %v558
        %v607 = vpack.c.b16 %v565, %v562
        %v608 = vpack.c.b16 %v566, %v563
        %v609 = vpack.c.b16 %v567, %v564
        %v610 = vpack.c.b16 %v571, %v568
        %v611 = vpack.c.b16 %v572, %v569
        %v612 = vpack.c.b16 %v573, %v570
        %v613 = vpack.c.b16 %v577, %v574
        %v614 = vpack.c.b16 %v578, %v575
        %v615 = vpack.c.b16 %v579, %v576
        %v616 = vpack.c.b16 %v583, %v580
        %v617 = vpack.c.b16 %v584, %v581
        %v618 = vpack.c.b16 %v585, %v582
        %v619 = vpack.c.b16 %v589, %v586
        %v620 = vpack.c.b16 %v590, %v587
        %v621 = vpack.c.b16 %v591, %v588
        %v622 = vpack.c.b16 %v595, %v592
        %v623 = vpack.c.b16 %v596, %v593
        %v624 = vpack.c.b16 %v597, %v594
        %v625 = vpack.c.b16 %v601, %v598
        %v626 = vpack.c.b16 %v602, %v599
        %v627 = vpack.c.b16 %v603, %v600
        %652 = vmatprep.subr.bf16.mxu0 %v605
        %653 = vmatpush1.bf16.msra.mxu0 %v604
        %654 = vmatprep.subr.bf16.mxu0 %v608
        %655 = vmatpush1.bf16.msra.mxu0 %v607
        %656 = vmatprep.subr.bf16.mxu0 %v611
        %657 = vmatpush1.bf16.msra.mxu0 %v610
        %658 = vmatprep.subr.bf16.mxu0 %v614
        %659 = vmatpush1.bf16.msra.mxu0 %v613
        %660 = vmatprep.subr.bf16.mxu0 %v617
        %661 = vmatpush1.bf16.msra.mxu0 %v616
        %662 = vmatprep.subr.bf16.mxu0 %v620
        %663 = vmatpush1.bf16.msra.mxu0 %v619
        %664 = vmatprep.subr.bf16.mxu0 %v623
        %665 = vmatpush1.bf16.msra.mxu0 %v622
        %666 = vmatprep.subr.bf16.mxu0 %v626
        %667 = vmatpush1.bf16.msra.mxu0 %v625
        %668 = vmatprep.subr.bf16.mxu0 0
        %669 = vmatpush1.bf16.msra.mxu0 0
        %670 = vmatprep.subr.bf16.mxu0 0
        %671 = vmatpush1.bf16.msra.mxu0 0
        %672 = vmatprep.subr.bf16.mxu0 0
        %673 = vmatpush1.bf16.msra.mxu0 0
        %674 = vmatprep.subr.bf16.mxu0 0
        %675 = vmatpush1.bf16.msra.mxu0 0
        %676 = vmatprep.subr.bf16.mxu0 0
        %677 = vmatpush1.bf16.msra.mxu0 0
        %678 = vmatprep.subr.bf16.mxu0 0
        %679 = vmatpush1.bf16.msra.mxu0 0
        %680 = vmatprep.subr.bf16.mxu0 0
        %681 = vmatpush1.bf16.msra.mxu0 0
        %682 = vmatprep.subr.bf16.mxu0 0
        %683 = vmatpush1.bf16.msra.mxu0 0
        %684 = vmatprep.mubr.bf16.mxu0 0
        %685 = vmatmul.mubr.bf16.gmra.mrb[0].mxu0 %v471
        %v686 = vpop.f32.mrb[0].mxu0
        %v687 = vadd.f32 %v512, %v686
        %v688 = vpop.f32.mrb[0].mxu0
        %v689 = vadd.f32 %v516, %v688
        %v690 = vpop.f32.mrb[0].mxu0
        %v691 = vadd.f32 %v512, %v690
        %v692 = vpop.f32.mrb[0].mxu0
        %v693 = vadd.f32 %v516, %v692
        %694 = vmatprep.mubr.bf16.mxu0 0
        %695 = vmatmul.mubr.bf16.gmra.mrb[0].mxu0 %v472
        %v696 = vpop.f32.mrb[0].mxu0
        %v697 = vadd.f32 %v512, %v696
        %v698 = vpop.f32.mrb[0].mxu0
        %v699 = vadd.f32 %v516, %v698
        %v700 = vpop.f32.mrb[0].mxu0
        %v701 = vadd.f32 %v512, %v700
        %v702 = vpop.f32.mrb[0].mxu0
        %v703 = vadd.f32 %v516, %v702
        %704 = vmatprep.mubr.bf16.mxu0 0
        %705 = vmatmul.mubr.bf16.gmra.mrb[0].mxu0 %v473
        %v706 = vpop.f32.mrb[0].mxu0
        %v707 = vadd.f32 %v512, %v706
        %v708 = vpop.f32.mrb[0].mxu0
        %v709 = vadd.f32 %v516, %v708
        %v710 = vpop.f32.mrb[0].mxu0
        %v711 = vadd.f32 %v512, %v710
        %v712 = vpop.f32.mrb[0].mxu0
        %v713 = vadd.f32 %v516, %v712
        %714 = vmatprep.mubr.bf16.mxu0 0
        %715 = vmatmul.mubr.bf16.gmra.mrb[0].mxu0 %v474
        %v716 = vpop.f32.mrb[0].mxu0
        %v717 = vadd.f32 %v512, %v716
        %v718 = vpop.f32.mrb[0].mxu0
        %v719 = vadd.f32 %v516, %v718
        %v720 = vpop.f32.mrb[0].mxu0
        %v721 = vadd.f32 %v512, %v720
        %v722 = vpop.f32.mrb[0].mxu0
        %v723 = vadd.f32 %v516, %v722
        %724 = vdwg.mxu0
        %725 = vmatprep.subr.bf16.mxu0 0
        %726 = vmatpush1.bf16.msra.mxu0 %v606
        %727 = vmatprep.subr.bf16.mxu0 0
        %728 = vmatpush1.bf16.msra.mxu0 %v609
        %729 = vmatprep.subr.bf16.mxu0 0
        %730 = vmatpush1.bf16.msra.mxu0 %v612
        %731 = vmatprep.subr.bf16.mxu0 0
        %732 = vmatpush1.bf16.msra.mxu0 %v615
        %733 = vmatprep.subr.bf16.mxu0 0
        %734 = vmatpush1.bf16.msra.mxu0 %v618
        %735 = vmatprep.subr.bf16.mxu0 0
        %736 = vmatpush1.bf16.msra.mxu0 %v621
        %737 = vmatprep.subr.bf16.mxu0 0
        %738 = vmatpush1.bf16.msra.mxu0 %v624
        %739 = vmatprep.subr.bf16.mxu0 0
        %740 = vmatpush1.bf16.msra.mxu0 %v627
        %741 = vmatprep.subr.bf16.mxu0 0
        %742 = vmatpush1.bf16.msra.mxu0 0
        %743 = vmatprep.subr.bf16.mxu0 0
        %744 = vmatpush1.bf16.msra.mxu0 0
        %745 = vmatprep.subr.bf16.mxu0 0
        %746 = vmatpush1.bf16.msra.mxu0 0
        %747 = vmatprep.subr.bf16.mxu0 0
        %748 = vmatpush1.bf16.msra.mxu0 0
        %749 = vmatprep.subr.bf16.mxu0 0
        %750 = vmatpush1.bf16.msra.mxu0 0
        %751 = vmatprep.subr.bf16.mxu0 0
        %752 = vmatpush1.bf16.msra.mxu0 0
        %753 = vmatprep.subr.bf16.mxu0 0
        %754 = vmatpush1.bf16.msra.mxu0 0
        %755 = vmatprep.subr.bf16.mxu0 0
        %756 = vmatpush1.bf16.msra.mxu0 0
        %757 = vmatprep.mubr.bf16.mxu0 0
        %758 = vmatmul.mubr.bf16.gmra.mrb[0].mxu0 %v471
        %v759 = vpop.f32.mrb[0].mxu0
        %v760 = vadd.f32 %v520, %v759
        %v761 = vpop.f32.mrb[0].mxu0
        %v762 = vpop.f32.mrb[0].mxu0
        %v763 = vadd.f32 %v520, %v762
        %v764 = vpop.f32.mrb[0].mxu0
        %765 = vmatprep.mubr.bf16.mxu0 0
        %766 = vmatmul.mubr.bf16.gmra.mrb[0].mxu0 %v472
        %v767 = vpop.f32.mrb[0].mxu0
        %v768 = vadd.f32 %v520, %v767
        %v769 = vpop.f32.mrb[0].mxu0
        %v770 = vpop.f32.mrb[0].mxu0
        %v771 = vadd.f32 %v520, %v770
        %v772 = vpop.f32.mrb[0].mxu0
        %773 = vmatprep.mubr.bf16.mxu0 0
        %774 = vmatmul.mubr.bf16.gmra.mrb[0].mxu0 %v473
        %v775 = vpop.f32.mrb[0].mxu0
        %v776 = vadd.f32 %v520, %v775
        %v777 = vpop.f32.mrb[0].mxu0
        %v778 = vpop.f32.mrb[0].mxu0
        %v779 = vadd.f32 %v520, %v778
        %v780 = vpop.f32.mrb[0].mxu0
        %781 = vmatprep.mubr.bf16.mxu0 0
        %782 = vmatmul.mubr.bf16.gmra.mrb[0].mxu0 %v474
        %v783 = vpop.f32.mrb[0].mxu0
        %v784 = vadd.f32 %v520, %v783
        %v785 = vpop.f32.mrb[0].mxu0
        %v786 = vpop.f32.mrb[0].mxu0
        %v787 = vadd.f32 %v520, %v786
        %v788 = vpop.f32.mrb[0].mxu0
        %789 = vdwg.mxu0
        %v790 = vpack.c.bf16 %v691, %v687
        %v791 = vpack.c.bf16 %v693, %v689
        %v792 = vpack.c.bf16 %v763, %v760
        %v793 = vpack.c.bf16 %v701, %v697
        %v794 = vpack.c.bf16 %v703, %v699
        %v795 = vpack.c.bf16 %v771, %v768
        %v796 = vpack.c.bf16 %v711, %v707
        %v797 = vpack.c.bf16 %v713, %v709
        %v798 = vpack.c.bf16 %v779, %v776
        %v799 = vpack.c.bf16 %v721, %v717
        %v800 = vpack.c.bf16 %v723, %v719
        %v801 = vpack.c.bf16 %v787, %v784
        %v802 = vld [vmem:[#allocation2] sm:$0xff]
        %v803 = vld [vmem:[#allocation2 + $0x8] sm:$0xff]
        %v804 = vld [vmem:[#allocation2 + $0x10] sm:$0xff]
        %v805 = vld [vmem:[#allocation2 + $0x18] sm:$0xff]
        %v806 = vld [vmem:[#allocation2 + $0x20] sm:$0xff]
        %v807 = vld [vmem:[#allocation2 + $0x28] sm:$0xff]
        %v808 = vld [vmem:[#allocation2 + $0x30] sm:$0xff]
        %v809 = vld [vmem:[#allocation2 + $0x38] sm:$0xff]
        %vm810 = vcmask 261120
        %v812 = vsel %vm810, %v790, 0
        %v815 = vsel %vm810, %v793, 0
        %v818 = vsel %vm810, %v796, 0
        %v821 = vsel %vm810, %v799, 0
        %v824 = vsel %vm810, %v791, 0
        %v827 = vsel %vm810, %v794, 0
        %v830 = vsel %vm810, %v797, 0
        %v833 = vsel %vm810, %v800, 0
        %835 = vmatprep.subr.bf16.mxu0 0
        %836 = vmatpush1.bf16.xpose.msra.mxu0 %v824
        %837 = vmatprep.subr.bf16.mxu0 0
        %838 = vmatpush1.bf16.xpose.msra.mxu0 %v827
        %839 = vmatprep.subr.bf16.mxu0 0
        %840 = vmatpush1.bf16.xpose.msra.mxu0 %v830
        %841 = vmatprep.subr.bf16.mxu0 0
        %842 = vmatpush1.bf16.xpose.msra.mxu0 %v833
        %843 = vmatprep.subr.bf16.mxu0 0
        %844 = vmatpush1.bf16.xpose.msra.mxu0 0
        %845 = vmatprep.subr.bf16.mxu0 0
        %846 = vmatpush1.bf16.xpose.msra.mxu0 0
        %847 = vmatprep.subr.bf16.mxu0 0
        %848 = vmatpush1.bf16.xpose.msra.mxu0 0
        %849 = vmatprep.subr.bf16.mxu0 0
        %850 = vmatpush1.bf16.xpose.msra.mxu0 0
        %851 = vmatprep.subr.bf16.mxu0 0
        %852 = vmatpush1.bf16.xpose.msra.mxu0 0
        %853 = vmatprep.subr.bf16.mxu0 0
        %854 = vmatpush1.bf16.xpose.msra.mxu0 0
        %855 = vmatprep.subr.bf16.mxu0 0
        %856 = vmatpush1.bf16.xpose.msra.mxu0 0
        %857 = vmatprep.subr.bf16.mxu0 0
        %858 = vmatpush1.bf16.xpose.msra.mxu0 0
        %859 = vmatprep.subr.bf16.mxu0 0
        %860 = vmatpush1.bf16.xpose.msra.mxu0 0
        %861 = vmatprep.subr.bf16.mxu0 0
        %862 = vmatpush1.bf16.xpose.msra.mxu0 0
        %863 = vmatprep.subr.bf16.mxu0 0
        %864 = vmatpush1.bf16.xpose.msra.mxu0 0
        %865 = vmatprep.subr.bf16.mxu0 0
        %866 = vmatpush1.bf16.xpose.msra.mxu0 0
        %867 = vmatprep.mubr.bf16.mxu0 0
        %868 = vmatmul.mubr.bf16.gmra.mrb[0].mxu0 %v812
        %v869 = vpop.f32.mrb[0].mxu0
        %v870 = vadd.f32 %v802, %v869
        %v871 = vpop.f32.mrb[0].mxu0
        %v872 = vpop.f32.mrb[0].mxu0
        %v873 = vadd.f32 %v803, %v872
        %v874 = vpop.f32.mrb[0].mxu0
        %875 = vmatprep.mubr.bf16.mxu0 0
        %876 = vmatmul.mubr.bf16.gmra.mrb[0].mxu0 %v815
        %v877 = vpop.f32.mrb[0].mxu0
        %v878 = vadd.f32 %v804, %v877
        %v879 = vpop.f32.mrb[0].mxu0
        %v880 = vpop.f32.mrb[0].mxu0
        %v881 = vadd.f32 %v805, %v880
        %v882 = vpop.f32.mrb[0].mxu0
        %883 = vmatprep.mubr.bf16.mxu0 0
        %884 = vmatmul.mubr.bf16.gmra.mrb[0].mxu0 %v818
        %v885 = vpop.f32.mrb[0].mxu0
        %v886 = vadd.f32 %v806, %v885
        %v887 = vpop.f32.mrb[0].mxu0
        %v888 = vpop.f32.mrb[0].mxu0
        %v889 = vadd.f32 %v807, %v888
        %v890 = vpop.f32.mrb[0].mxu0
        %891 = vmatprep.mubr.bf16.mxu0 0
        %892 = vmatmul.mubr.bf16.gmra.mrb[0].mxu0 %v821
        %v893 = vpop.f32.mrb[0].mxu0
        %v894 = vadd.f32 %v808, %v893
        %v895 = vpop.f32.mrb[0].mxu0
        %v896 = vpop.f32.mrb[0].mxu0
        %v897 = vadd.f32 %v809, %v896
        %v898 = vpop.f32.mrb[0].mxu0
        %899 = vdwg.mxu0
        %vm900 = vcmask 523264
        %v901 = vsel %vm900, %v870, -inf
        %902 = vmax.xlane.f32.xlu0 %v901
        %v903 = vpop.xlane.xlu0 %902
        %v904 = vsel %vm900, %v873, -inf
        %905 = vmax.xlane.f32.xlu0 %v904
        %v906 = vpop.xlane.xlu0 %905
        %v907 = vsel %vm900, %v878, -inf
        %908 = vmax.xlane.f32.xlu0 %v907
        %v909 = vpop.xlane.xlu0 %908
        %v910 = vsel %vm900, %v881, -inf
        %911 = vmax.xlane.f32.xlu0 %v910
        %v912 = vpop.xlane.xlu0 %911
        %v913 = vsel %vm900, %v886, -inf
        %914 = vmax.xlane.f32.xlu0 %v913
        %v915 = vpop.xlane.xlu0 %914
        %v916 = vsel %vm900, %v889, -inf
        %917 = vmax.xlane.f32.xlu0 %v916
        %v918 = vpop.xlane.xlu0 %917
        %v919 = vsel %vm900, %v894, -inf
        %920 = vmax.xlane.f32.xlu0 %v919
        %v921 = vpop.xlane.xlu0 %920
        %v922 = vsel %vm900, %v897, -inf
        %923 = vmax.xlane.f32.xlu0 %v922
        %v924 = vpop.xlane.xlu0 %923
        %v925 = vsub.f32 %v870, %v903
        %v926 = vsub.f32 %v873, %v906
        %v927 = vsub.f32 %v878, %v909
        %v928 = vsub.f32 %v881, %v912
        %v929 = vsub.f32 %v886, %v915
        %v930 = vsub.f32 %v889, %v918
        %v931 = vsub.f32 %v894, %v921
        %v932 = vsub.f32 %v897, %v924
        %v933 = vmul.f32 %v925, 1.442695
        %v934 = vpow.pop %v933
        %v935 = vmul.f32 %v926, 1.442695
        %v936 = vpow.pop %v935
        %v937 = vmul.f32 %v927, 1.442695
        %v938 = vpow.pop %v937
        %v939 = vmul.f32 %v928, 1.442695
        %v940 = vpow.pop %v939
        %v941 = vmul.f32 %v929, 1.442695
        %v942 = vpow.pop %v941
        %v943 = vmul.f32 %v930, 1.442695
        %v944 = vpow.pop %v943
        %v945 = vmul.f32 %v931, 1.442695
        %v946 = vpow.pop %v945
        %v947 = vmul.f32 %v932, 1.442695
        %v948 = vpow.pop %v947
        %v949 = vsel %vm900, %v934, 0.0
        %950 = vadd.xlane.f32.xlu0 %v949
        %v951 = vpop.xlane.xlu0 %950
        %v952 = vsel %vm900, %v936, 0.0
        %953 = vadd.xlane.f32.xlu0 %v952
        %v954 = vpop.xlane.xlu0 %953
        %v955 = vsel %vm900, %v938, 0.0
        %956 = vadd.xlane.f32.xlu0 %v955
        %v957 = vpop.xlane.xlu0 %956
        %v958 = vsel %vm900, %v940, 0.0
        %959 = vadd.xlane.f32.xlu0 %v958
        %v960 = vpop.xlane.xlu0 %959
        %v961 = vsel %vm900, %v942, 0.0
        %962 = vadd.xlane.f32.xlu0 %v961
        %v963 = vpop.xlane.xlu0 %962
        %v964 = vsel %vm900, %v944, 0.0
        %965 = vadd.xlane.f32.xlu0 %v964
        %v966 = vpop.xlane.xlu0 %965
        %v967 = vsel %vm900, %v946, 0.0
        %968 = vadd.xlane.f32.xlu0 %v967
        %v969 = vpop.xlane.xlu0 %968
        %v970 = vsel %vm900, %v948, 0.0
        %971 = vadd.xlane.f32.xlu0 %v970
        %v972 = vpop.xlane.xlu0 %971
        %v973 = vrcp.pop %v951
        %v974 = vrcp.pop %v954
        %v975 = vrcp.pop %v957
        %v976 = vrcp.pop %v960
        %v977 = vrcp.pop %v963
        %v978 = vrcp.pop %v966
        %v979 = vrcp.pop %v969
        %v980 = vrcp.pop %v972
        %v981 = vmul.f32 %v934, %v973
        %v982 = vmul.f32 %v936, %v974
        %v983 = vmul.f32 %v938, %v975
        %v984 = vmul.f32 %v940, %v976
        %v985 = vmul.f32 %v942, %v977
        %v986 = vmul.f32 %v944, %v978
        %v987 = vmul.f32 %v946, %v979
        %v988 = vmul.f32 %v948, %v980
        %v989 = vpack.c.bf16 %v982, %v981
        %v990 = vpack.c.bf16 %v984, %v983
        %v991 = vpack.c.bf16 %v986, %v985
        %v992 = vpack.c.bf16 %v988, %v987
        %v994 = vsel %vm900, %v989, 0
        %v997 = vsel %vm900, %v990, 0
        %v1000 = vsel %vm900, %v991, 0
        %v1003 = vsel %vm900, %v992, 0
        %1005 = vmatprep.subr.bf16.mxu0 0
        %1006 = vmatpush1.bf16.msra.mxu0 %v792
        %1007 = vmatprep.subr.bf16.mxu0 0
        %1008 = vmatpush1.bf16.msra.mxu0 %v795
        %1009 = vmatprep.subr.bf16.mxu0 0
        %1010 = vmatpush1.bf16.msra.mxu0 %v798
        %1011 = vmatprep.subr.bf16.mxu0 0
        %1012 = vmatpush1.bf16.msra.mxu0 %v801
        %1013 = vmatprep.subr.bf16.mxu0 0
        %1014 = vmatpush1.bf16.msra.mxu0 0
        %1015 = vmatprep.subr.bf16.mxu0 0
        %1016 = vmatpush1.bf16.msra.mxu0 0
        %1017 = vmatprep.subr.bf16.mxu0 0
        %1018 = vmatpush1.bf16.msra.mxu0 0
        %1019 = vmatprep.subr.bf16.mxu0 0
        %1020 = vmatpush1.bf16.msra.mxu0 0
        %1021 = vmatprep.subr.bf16.mxu0 0
        %1022 = vmatpush1.bf16.msra.mxu0 0
        %1023 = vmatprep.subr.bf16.mxu0 0
        %1024 = vmatpush1.bf16.msra.mxu0 0
        %1025 = vmatprep.subr.bf16.mxu0 0
        %1026 = vmatpush1.bf16.msra.mxu0 0
        %1027 = vmatprep.subr.bf16.mxu0 0
        %1028 = vmatpush1.bf16.msra.mxu0 0
        %1029 = vmatprep.subr.bf16.mxu0 0
        %1030 = vmatpush1.bf16.msra.mxu0 0
        %1031 = vmatprep.subr.bf16.mxu0 0
        %1032 = vmatpush1.bf16.msra.mxu0 0
        %1033 = vmatprep.subr.bf16.mxu0 0
        %1034 = vmatpush1.bf16.msra.mxu0 0
        %1035 = vmatprep.subr.bf16.mxu0 0
        %1036 = vmatpush1.bf16.msra.mxu0 0
        %1037 = vmatprep.mubr.bf16.mxu0 0
        %1038 = vmatmul.mubr.bf16.gmra.mrb[0].mxu0 %v994
        %v1039 = vpop.f32.mrb[0].mxu0
        %v1040 = vadd.f32 0.0, %v1039
        %v1041 = vpop.f32.mrb[0].mxu0
        %v1042 = vpop.f32.mrb[0].mxu0
        %v1043 = vadd.f32 0.0, %v1042
        %v1044 = vpop.f32.mrb[0].mxu0
        %1045 = vmatprep.mubr.bf16.mxu0 0
        %1046 = vmatmul.mubr.bf16.gmra.mrb[0].mxu0 %v997
        %v1047 = vpop.f32.mrb[0].mxu0
        %v1048 = vadd.f32 0.0, %v1047
        %v1049 = vpop.f32.mrb[0].mxu0
        %v1050 = vpop.f32.mrb[0].mxu0
        %v1051 = vadd.f32 0.0, %v1050
        %v1052 = vpop.f32.mrb[0].mxu0
        %1053 = vmatprep.mubr.bf16.mxu0 0
        %1054 = vmatmul.mubr.bf16.gmra.mrb[0].mxu0 %v1000
        %v1055 = vpop.f32.mrb[0].mxu0
        %v1056 = vadd.f32 0.0, %v1055
        %v1057 = vpop.f32.mrb[0].mxu0
        %v1058 = vpop.f32.mrb[0].mxu0
        %v1059 = vadd.f32 0.0, %v1058
        %v1060 = vpop.f32.mrb[0].mxu0
        %1061 = vmatprep.mubr.bf16.mxu0 0
        %1062 = vmatmul.mubr.bf16.gmra.mrb[0].mxu0 %v1003
        %v1063 = vpop.f32.mrb[0].mxu0
        %v1064 = vadd.f32 0.0, %v1063
        %v1065 = vpop.f32.mrb[0].mxu0
        %v1066 = vpop.f32.mrb[0].mxu0
        %v1067 = vadd.f32 0.0, %v1066
        %v1068 = vpop.f32.mrb[0].mxu0
        %1069 = vdwg.mxu0
        %v1070 = vpack.c.bf16 %v1043, %v1040
        %v1071 = vpack.c.bf16 %v1051, %v1048
        %v1072 = vpack.c.bf16 %v1059, %v1056
        %v1073 = vpack.c.bf16 %v1067, %v1064
        %s1074 = scalar_lea.vmem [#allocation2], 64
        %v1075 = vld [vmem:[%s1074] sm:$0xff]
        %v1076 = vld [vmem:[%s1074 + $0x8] sm:$0xff]
        %v1077 = vld [vmem:[%s1074 + $0x10] sm:$0xff]
        %v1078 = vld [vmem:[%s1074 + $0x18] sm:$0xff]
        %v1079 = vld [vmem:[%s1074 + $0x20] sm:$0xff]
        %v1080 = vld [vmem:[%s1074 + $0x28] sm:$0xff]
        %v1081 = vld [vmem:[%s1074 + $0x30] sm:$0xff]
        %v1082 = vld [vmem:[%s1074 + $0x38] sm:$0xff]
        %1087 = vrot.lane.b32.xlu0 %v790, 96
        %v1088 = vpop.permute.xlu0 %1087
        %1089 = vrot.lane.b32.xlu0 %v793, 96
        %v1090 = vpop.permute.xlu0 %1089
        %1091 = vrot.lane.b32.xlu0 %v796, 96
        %v1092 = vpop.permute.xlu0 %1091
        %1093 = vrot.lane.b32.xlu0 %v799, 96
        %v1094 = vpop.permute.xlu0 %1093
        %1099 = vrot.lane.b32.xlu0 %v791, 96
        %v1100 = vpop.permute.xlu0 %1099
        %1101 = vrot.lane.b32.xlu0 %v794, 96
        %v1102 = vpop.permute.xlu0 %1101
        %1103 = vrot.lane.b32.xlu0 %v797, 96
        %v1104 = vpop.permute.xlu0 %1103
        %1105 = vrot.lane.b32.xlu0 %v800, 96
        %v1106 = vpop.permute.xlu0 %1105
        %v1108 = vsel %vm810, %v1088, 0
        %v1111 = vsel %vm810, %v1090, 0
        %v1114 = vsel %vm810, %v1092, 0
        %v1117 = vsel %vm810, %v1094, 0
        %v1120 = vsel %vm810, %v1100, 0
        %v1123 = vsel %vm810, %v1102, 0
        %v1126 = vsel %vm810, %v1104, 0
        %v1129 = vsel %vm810, %v1106, 0
        %1131 = vmatprep.subr.bf16.mxu0 0
        %1132 = vmatpush1.bf16.xpose.msra.mxu0 %v1120
        %1133 = vmatprep.subr.bf16.mxu0 0
        %1134 = vmatpush1.bf16.xpose.msra.mxu0 %v1123
        %1135 = vmatprep.subr.bf16.mxu0 0
        %1136 = vmatpush1.bf16.xpose.msra.mxu0 %v1126
        %1137 = vmatprep.subr.bf16.mxu0 0
        %1138 = vmatpush1.bf16.xpose.msra.mxu0 %v1129
        %1139 = vmatprep.subr.bf16.mxu0 0
        %1140 = vmatpush1.bf16.xpose.msra.mxu0 0
        %1141 = vmatprep.subr.bf16.mxu0 0
        %1142 = vmatpush1.bf16.xpose.msra.mxu0 0
        %1143 = vmatprep.subr.bf16.mxu0 0
        %1144 = vmatpush1.bf16.xpose.msra.mxu0 0
        %1145 = vmatprep.subr.bf16.mxu0 0
        %1146 = vmatpush1.bf16.xpose.msra.mxu0 0
        %1147 = vmatprep.subr.bf16.mxu0 0
        %1148 = vmatpush1.bf16.xpose.msra.mxu0 0
        %1149 = vmatprep.subr.bf16.mxu0 0
        %1150 = vmatpush1.bf16.xpose.msra.mxu0 0
        %1151 = vmatprep.subr.bf16.mxu0 0
        %1152 = vmatpush1.bf16.xpose.msra.mxu0 0
        %1153 = vmatprep.subr.bf16.mxu0 0
        %1154 = vmatpush1.bf16.xpose.msra.mxu0 0
        %1155 = vmatprep.subr.bf16.mxu0 0
        %1156 = vmatpush1.bf16.xpose.msra.mxu0 0
        %1157 = vmatprep.subr.bf16.mxu0 0
        %1158 = vmatpush1.bf16.xpose.msra.mxu0 0
        %1159 = vmatprep.subr.bf16.mxu0 0
        %1160 = vmatpush1.bf16.xpose.msra.mxu0 0
        %1161 = vmatprep.subr.bf16.mxu0 0
        %1162 = vmatpush1.bf16.xpose.msra.mxu0 0
        %1163 = vmatprep.mubr.bf16.mxu0 0
        %1164 = vmatmul.mubr.bf16.gmra.mrb[0].mxu0 %v1108
        %v1165 = vpop.f32.mrb[0].mxu0
        %v1166 = vadd.f32 %v1075, %v1165
        %v1167 = vpop.f32.mrb[0].mxu0
        %v1168 = vpop.f32.mrb[0].mxu0
        %v1169 = vadd.f32 %v1076, %v1168
        %v1170 = vpop.f32.mrb[0].mxu0
        %1171 = vmatprep.mubr.bf16.mxu0 0
        %1172 = vmatmul.mubr.bf16.gmra.mrb[0].mxu0 %v1111
        %v1173 = vpop.f32.mrb[0].mxu0
        %v1174 = vadd.f32 %v1077, %v1173
        %v1175 = vpop.f32.mrb[0].mxu0
        %v1176 = vpop.f32.mrb[0].mxu0
        %v1177 = vadd.f32 %v1078, %v1176
        %v1178 = vpop.f32.mrb[0].mxu0
        %1179 = vmatprep.mubr.bf16.mxu0 0
        %1180 = vmatmul.mubr.bf16.gmra.mrb[0].mxu0 %v1114
        %v1181 = vpop.f32.mrb[0].mxu0
        %v1182 = vadd.f32 %v1079, %v1181
        %v1183 = vpop.f32.mrb[0].mxu0
        %v1184 = vpop.f32.mrb[0].mxu0
        %v1185 = vadd.f32 %v1080, %v1184
        %v1186 = vpop.f32.mrb[0].mxu0
        %1187 = vmatprep.mubr.bf16.mxu0 0
        %1188 = vmatmul.mubr.bf16.gmra.mrb[0].mxu0 %v1117
        %v1189 = vpop.f32.mrb[0].mxu0
        %v1190 = vadd.f32 %v1081, %v1189
        %v1191 = vpop.f32.mrb[0].mxu0
        %v1192 = vpop.f32.mrb[0].mxu0
        %v1193 = vadd.f32 %v1082, %v1192
        %v1194 = vpop.f32.mrb[0].mxu0
        %1195 = vdwg.mxu0
        %v1196 = vsel %vm900, %v1166, -inf
        %1197 = vmax.xlane.f32.xlu0 %v1196
        %v1198 = vpop.xlane.xlu0 %1197
        %v1199 = vsel %vm900, %v1169, -inf
        %1200 = vmax.xlane.f32.xlu0 %v1199
        %v1201 = vpop.xlane.xlu0 %1200
        %v1202 = vsel %vm900, %v1174, -inf
        %1203 = vmax.xlane.f32.xlu0 %v1202
        %v1204 = vpop.xlane.xlu0 %1203
        %v1205 = vsel %vm900, %v1177, -inf
        %1206 = vmax.xlane.f32.xlu0 %v1205
        %v1207 = vpop.xlane.xlu0 %1206
        %v1208 = vsel %vm900, %v1182, -inf
        %1209 = vmax.xlane.f32.xlu0 %v1208
        %v1210 = vpop.xlane.xlu0 %1209
        %v1211 = vsel %vm900, %v1185, -inf
        %1212 = vmax.xlane.f32.xlu0 %v1211
        %v1213 = vpop.xlane.xlu0 %1212
        %v1214 = vsel %vm900, %v1190, -inf
        %1215 = vmax.xlane.f32.xlu0 %v1214
        %v1216 = vpop.xlane.xlu0 %1215
        %v1217 = vsel %vm900, %v1193, -inf
        %1218 = vmax.xlane.f32.xlu0 %v1217
        %v1219 = vpop.xlane.xlu0 %1218
        %v1220 = vsub.f32 %v1166, %v1198
        %v1221 = vsub.f32 %v1169, %v1201
        %v1222 = vsub.f32 %v1174, %v1204
        %v1223 = vsub.f32 %v1177, %v1207
        %v1224 = vsub.f32 %v1182, %v1210
        %v1225 = vsub.f32 %v1185, %v1213
        %v1226 = vsub.f32 %v1190, %v1216
        %v1227 = vsub.f32 %v1193, %v1219
        %v1228 = vmul.f32 %v1220, 1.442695
        %v1229 = vpow.pop %v1228
        %v1230 = vmul.f32 %v1221, 1.442695
        %v1231 = vpow.pop %v1230
        %v1232 = vmul.f32 %v1222, 1.442695
        %v1233 = vpow.pop %v1232
        %v1234 = vmul.f32 %v1223, 1.442695
        %v1235 = vpow.pop %v1234
        %v1236 = vmul.f32 %v1224, 1.442695
        %v1237 = vpow.pop %v1236
        %v1238 = vmul.f32 %v1225, 1.442695
        %v1239 = vpow.pop %v1238
        %v1240 = vmul.f32 %v1226, 1.442695
        %v1241 = vpow.pop %v1240
        %v1242 = vmul.f32 %v1227, 1.442695
        %v1243 = vpow.pop %v1242
        %v1244 = vsel %vm900, %v1229, 0.0
        %1245 = vadd.xlane.f32.xlu0 %v1244
        %v1246 = vpop.xlane.xlu0 %1245
        %v1247 = vsel %vm900, %v1231, 0.0
        %1248 = vadd.xlane.f32.xlu0 %v1247
        %v1249 = vpop.xlane.xlu0 %1248
        %v1250 = vsel %vm900, %v1233, 0.0
        %1251 = vadd.xlane.f32.xlu0 %v1250
        %v1252 = vpop.xlane.xlu0 %1251
        %v1253 = vsel %vm900, %v1235, 0.0
        %1254 = vadd.xlane.f32.xlu0 %v1253
        %v1255 = vpop.xlane.xlu0 %1254
        %v1256 = vsel %vm900, %v1237, 0.0
        %1257 = vadd.xlane.f32.xlu0 %v1256
        %v1258 = vpop.xlane.xlu0 %1257
        %v1259 = vsel %vm900, %v1239, 0.0
        %1260 = vadd.xlane.f32.xlu0 %v1259
        %v1261 = vpop.xlane.xlu0 %1260
        %v1262 = vsel %vm900, %v1241, 0.0
        %1263 = vadd.xlane.f32.xlu0 %v1262
        %v1264 = vpop.xlane.xlu0 %1263
        %v1265 = vsel %vm900, %v1243, 0.0
        %1266 = vadd.xlane.f32.xlu0 %v1265
        %v1267 = vpop.xlane.xlu0 %1266
        %v1268 = vrcp.pop %v1246
        %v1269 = vrcp.pop %v1249
        %v1270 = vrcp.pop %v1252
        %v1271 = vrcp.pop %v1255
        %v1272 = vrcp.pop %v1258
        %v1273 = vrcp.pop %v1261
        %v1274 = vrcp.pop %v1264
        %v1275 = vrcp.pop %v1267
        %v1276 = vmul.f32 %v1229, %v1268
        %v1277 = vmul.f32 %v1231, %v1269
        %v1278 = vmul.f32 %v1233, %v1270
        %v1279 = vmul.f32 %v1235, %v1271
        %v1280 = vmul.f32 %v1237, %v1272
        %v1281 = vmul.f32 %v1239, %v1273
        %v1282 = vmul.f32 %v1241, %v1274
        %v1283 = vmul.f32 %v1243, %v1275
        %v1284 = vpack.c.bf16 %v1277, %v1276
        %v1285 = vpack.c.bf16 %v1279, %v1278
        %v1286 = vpack.c.bf16 %v1281, %v1280
        %v1287 = vpack.c.bf16 %v1283, %v1282
        %1292 = vrot.lane.b32.xlu0 %v792, 96
        %v1293 = vpop.permute.xlu0 %1292
        %1294 = vrot.lane.b32.xlu0 %v795, 96
        %v1295 = vpop.permute.xlu0 %1294
        %1296 = vrot.lane.b32.xlu0 %v798, 96
        %v1297 = vpop.permute.xlu0 %1296
        %1298 = vrot.lane.b32.xlu0 %v801, 96
        %v1299 = vpop.permute.xlu0 %1298
        %v1305 = vsel %vm900, %v1284, 0
        %v1308 = vsel %vm900, %v1285, 0
        %v1311 = vsel %vm900, %v1286, 0
        %v1314 = vsel %vm900, %v1287, 0
        %1316 = vmatprep.subr.bf16.mxu0 0
        %1317 = vmatpush1.bf16.msra.mxu0 %v1293
        %1318 = vmatprep.subr.bf16.mxu0 0
        %1319 = vmatpush1.bf16.msra.mxu0 %v1295
        %1320 = vmatprep.subr.bf16.mxu0 0
        %1321 = vmatpush1.bf16.msra.mxu0 %v1297
        %1322 = vmatprep.subr.bf16.mxu0 0
        %1323 = vmatpush1.bf16.msra.mxu0 %v1299
        %1324 = vmatprep.subr.bf16.mxu0 0
        %1325 = vmatpush1.bf16.msra.mxu0 0
        %1326 = vmatprep.subr.bf16.mxu0 0
        %1327 = vmatpush1.bf16.msra.mxu0 0
        %1328 = vmatprep.subr.bf16.mxu0 0
        %1329 = vmatpush1.bf16.msra.mxu0 0
        %1330 = vmatprep.subr.bf16.mxu0 0
        %1331 = vmatpush1.bf16.msra.mxu0 0
        %1332 = vmatprep.subr.bf16.mxu0 0
        %1333 = vmatpush1.bf16.msra.mxu0 0
        %1334 = vmatprep.subr.bf16.mxu0 0
        %1335 = vmatpush1.bf16.msra.mxu0 0
        %1336 = vmatprep.subr.bf16.mxu0 0
        %1337 = vmatpush1.bf16.msra.mxu0 0
        %1338 = vmatprep.subr.bf16.mxu0 0
        %1339 = vmatpush1.bf16.msra.mxu0 0
        %1340 = vmatprep.subr.bf16.mxu0 0
        %1341 = vmatpush1.bf16.msra.mxu0 0
        %1342 = vmatprep.subr.bf16.mxu0 0
        %1343 = vmatpush1.bf16.msra.mxu0 0
        %1344 = vmatprep.subr.bf16.mxu0 0
        %1345 = vmatpush1.bf16.msra.mxu0 0
        %1346 = vmatprep.subr.bf16.mxu0 0
        %1347 = vmatpush1.bf16.msra.mxu0 0
        %1348 = vmatprep.mubr.bf16.mxu0 0
        %1349 = vmatmul.mubr.bf16.gmra.mrb[0].mxu0 %v1305
        %v1350 = vpop.f32.mrb[0].mxu0
        %v1351 = vadd.f32 0.0, %v1350
        %v1352 = vpop.f32.mrb[0].mxu0
        %v1353 = vpop.f32.mrb[0].mxu0
        %v1354 = vadd.f32 0.0, %v1353
        %v1355 = vpop.f32.mrb[0].mxu0
        %1356 = vmatprep.mubr.bf16.mxu0 0
        %1357 = vmatmul.mubr.bf16.gmra.mrb[0].mxu0 %v1308
        %v1358 = vpop.f32.mrb[0].mxu0
        %v1359 = vadd.f32 0.0, %v1358
        %v1360 = vpop.f32.mrb[0].mxu0
        %v1361 = vpop.f32.mrb[0].mxu0
        %v1362 = vadd.f32 0.0, %v1361
        %v1363 = vpop.f32.mrb[0].mxu0
        %1364 = vmatprep.mubr.bf16.mxu0 0
        %1365 = vmatmul.mubr.bf16.gmra.mrb[0].mxu0 %v1311
        %v1366 = vpop.f32.mrb[0].mxu0
        %v1367 = vadd.f32 0.0, %v1366
        %v1368 = vpop.f32.mrb[0].mxu0
        %v1369 = vpop.f32.mrb[0].mxu0
        %v1370 = vadd.f32 0.0, %v1369
        %v1371 = vpop.f32.mrb[0].mxu0
        %1372 = vmatprep.mubr.bf16.mxu0 0
        %1373 = vmatmul.mubr.bf16.gmra.mrb[0].mxu0 %v1314
        %v1374 = vpop.f32.mrb[0].mxu0
        %v1375 = vadd.f32 0.0, %v1374
        %v1376 = vpop.f32.mrb[0].mxu0
        %v1377 = vpop.f32.mrb[0].mxu0
        %v1378 = vadd.f32 0.0, %v1377
        %v1379 = vpop.f32.mrb[0].mxu0
        %1380 = vdwg.mxu0
        %v1381 = vpack.c.bf16 %v1354, %v1351
        %v1382 = vpack.c.bf16 %v1362, %v1359
        %v1383 = vpack.c.bf16 %v1370, %v1367
        %v1384 = vpack.c.bf16 %v1378, %v1375
        %s1385 = scalar_lea.vmem [#allocation2], 128
        %v1386 = vld [vmem:[%s1385] sm:$0xff]
        %v1387 = vld [vmem:[%s1385 + $0x8] sm:$0xff]
        %v1388 = vld [vmem:[%s1385 + $0x10] sm:$0xff]
        %v1389 = vld [vmem:[%s1385 + $0x18] sm:$0xff]
        %v1390 = vld [vmem:[%s1385 + $0x20] sm:$0xff]
        %v1391 = vld [vmem:[%s1385 + $0x28] sm:$0xff]
        %v1392 = vld [vmem:[%s1385 + $0x30] sm:$0xff]
        %v1393 = vld [vmem:[%s1385 + $0x38] sm:$0xff]
        %1394 = vrot.lane.b32.xlu0 %v790, 64
        %v1395 = vpop.permute.xlu0 %1394
        %1396 = vrot.lane.b32.xlu0 %v793, 64
        %v1397 = vpop.permute.xlu0 %1396
        %1398 = vrot.lane.b32.xlu0 %v796, 64
        %v1399 = vpop.permute.xlu0 %1398
        %1400 = vrot.lane.b32.xlu0 %v799, 64
        %v1401 = vpop.permute.xlu0 %1400
        %1402 = vrot.lane.b32.xlu0 %v791, 64
        %v1403 = vpop.permute.xlu0 %1402
        %1404 = vrot.lane.b32.xlu0 %v794, 64
        %v1405 = vpop.permute.xlu0 %1404
        %1406 = vrot.lane.b32.xlu0 %v797, 64
        %v1407 = vpop.permute.xlu0 %1406
        %1408 = vrot.lane.b32.xlu0 %v800, 64
        %v1409 = vpop.permute.xlu0 %1408
        %v1411 = vsel %vm810, %v1395, 0
        %v1414 = vsel %vm810, %v1397, 0
        %v1417 = vsel %vm810, %v1399, 0
        %v1420 = vsel %vm810, %v1401, 0
        %v1423 = vsel %vm810, %v1403, 0
        %v1426 = vsel %vm810, %v1405, 0
        %v1429 = vsel %vm810, %v1407, 0
        %v1432 = vsel %vm810, %v1409, 0
        %1434 = vmatprep.subr.bf16.mxu0 0
        %1435 = vmatpush1.bf16.xpose.msra.mxu0 %v1423
        %1436 = vmatprep.subr.bf16.mxu0 0
        %1437 = vmatpush1.bf16.xpose.msra.mxu0 %v1426
        %1438 = vmatprep.subr.bf16.mxu0 0
        %1439 = vmatpush1.bf16.xpose.msra.mxu0 %v1429
        %1440 = vmatprep.subr.bf16.mxu0 0
        %1441 = vmatpush1.bf16.xpose.msra.mxu0 %v1432
        %1442 = vmatprep.subr.bf16.mxu0 0
        %1443 = vmatpush1.bf16.xpose.msra.mxu0 0
        %1444 = vmatprep.subr.bf16.mxu0 0
        %1445 = vmatpush1.bf16.xpose.msra.mxu0 0
        %1446 = vmatprep.subr.bf16.mxu0 0
        %1447 = vmatpush1.bf16.xpose.msra.mxu0 0
        %1448 = vmatprep.subr.bf16.mxu0 0
        %1449 = vmatpush1.bf16.xpose.msra.mxu0 0
        %1450 = vmatprep.subr.bf16.mxu0 0
        %1451 = vmatpush1.bf16.xpose.msra.mxu0 0
        %1452 = vmatprep.subr.bf16.mxu0 0
        %1453 = vmatpush1.bf16.xpose.msra.mxu0 0
        %1454 = vmatprep.subr.bf16.mxu0 0
        %1455 = vmatpush1.bf16.xpose.msra.mxu0 0
        %1456 = vmatprep.subr.bf16.mxu0 0
        %1457 = vmatpush1.bf16.xpose.msra.mxu0 0
        %1458 = vmatprep.subr.bf16.mxu0 0
        %1459 = vmatpush1.bf16.xpose.msra.mxu0 0
        %1460 = vmatprep.subr.bf16.mxu0 0
        %1461 = vmatpush1.bf16.xpose.msra.mxu0 0
        %1462 = vmatprep.subr.bf16.mxu0 0
        %1463 = vmatpush1.bf16.xpose.msra.mxu0 0
        %1464 = vmatprep.subr.bf16.mxu0 0
        %1465 = vmatpush1.bf16.xpose.msra.mxu0 0
        %1466 = vmatprep.mubr.bf16.mxu0 0
        %1467 = vmatmul.mubr.bf16.gmra.mrb[0].mxu0 %v1411
        %v1468 = vpop.f32.mrb[0].mxu0
        %v1469 = vadd.f32 %v1386, %v1468
        %v1470 = vpop.f32.mrb[0].mxu0
        %v1471 = vpop.f32.mrb[0].mxu0
        %v1472 = vadd.f32 %v1387, %v1471
        %v1473 = vpop.f32.mrb[0].mxu0
        %1474 = vmatprep.mubr.bf16.mxu0 0
        %1475 = vmatmul.mubr.bf16.gmra.mrb[0].mxu0 %v1414
        %v1476 = vpop.f32.mrb[0].mxu0
        %v1477 = vadd.f32 %v1388, %v1476
        %v1478 = vpop.f32.mrb[0].mxu0
        %v1479 = vpop.f32.mrb[0].mxu0
        %v1480 = vadd.f32 %v1389, %v1479
        %v1481 = vpop.f32.mrb[0].mxu0
        %1482 = vmatprep.mubr.bf16.mxu0 0
        %1483 = vmatmul.mubr.bf16.gmra.mrb[0].mxu0 %v1417
        %v1484 = vpop.f32.mrb[0].mxu0
        %v1485 = vadd.f32 %v1390, %v1484
        %v1486 = vpop.f32.mrb[0].mxu0
        %v1487 = vpop.f32.mrb[0].mxu0
        %v1488 = vadd.f32 %v1391, %v1487
        %v1489 = vpop.f32.mrb[0].mxu0
        %1490 = vmatprep.mubr.bf16.mxu0 0
        %1491 = vmatmul.mubr.bf16.gmra.mrb[0].mxu0 %v1420
        %v1492 = vpop.f32.mrb[0].mxu0
        %v1493 = vadd.f32 %v1392, %v1492
        %v1494 = vpop.f32.mrb[0].mxu0
        %v1495 = vpop.f32.mrb[0].mxu0
        %v1496 = vadd.f32 %v1393, %v1495
        %v1497 = vpop.f32.mrb[0].mxu0
        %1498 = vdwg.mxu0
        %v1499 = vsel %vm900, %v1469, -inf
        %1500 = vmax.xlane.f32.xlu0 %v1499
        %v1501 = vpop.xlane.xlu0 %1500
        %v1502 = vsel %vm900, %v1472, -inf
        %1503 = vmax.xlane.f32.xlu0 %v1502
        %v1504 = vpop.xlane.xlu0 %1503
        %v1505 = vsel %vm900, %v1477, -inf
        %1506 = vmax.xlane.f32.xlu0 %v1505
        %v1507 = vpop.xlane.xlu0 %1506
        %v1508 = vsel %vm900, %v1480, -inf
        %1509 = vmax.xlane.f32.xlu0 %v1508
        %v1510 = vpop.xlane.xlu0 %1509
        %v1511 = vsel %vm900, %v1485, -inf
        %1512 = vmax.xlane.f32.xlu0 %v1511
        %v1513 = vpop.xlane.xlu0 %1512
        %v1514 = vsel %vm900, %v1488, -inf
        %1515 = vmax.xlane.f32.xlu0 %v1514
        %v1516 = vpop.xlane.xlu0 %1515
        %v1517 = vsel %vm900, %v1493, -inf
        %1518 = vmax.xlane.f32.xlu0 %v1517
        %v1519 = vpop.xlane.xlu0 %1518
        %v1520 = vsel %vm900, %v1496, -inf
        %1521 = vmax.xlane.f32.xlu0 %v1520
        %v1522 = vpop.xlane.xlu0 %1521
        %v1523 = vsub.f32 %v1469, %v1501
        %v1524 = vsub.f32 %v1472, %v1504
        %v1525 = vsub.f32 %v1477, %v1507
        %v1526 = vsub.f32 %v1480, %v1510
        %v1527 = vsub.f32 %v1485, %v1513
        %v1528 = vsub.f32 %v1488, %v1516
        %v1529 = vsub.f32 %v1493, %v1519
        %v1530 = vsub.f32 %v1496, %v1522
        %v1531 = vmul.f32 %v1523, 1.442695
        %v1532 = vpow.pop %v1531
        %v1533 = vmul.f32 %v1524, 1.442695
        %v1534 = vpow.pop %v1533
        %v1535 = vmul.f32 %v1525, 1.442695
        %v1536 = vpow.pop %v1535
        %v1537 = vmul.f32 %v1526, 1.442695
        %v1538 = vpow.pop %v1537
        %v1539 = vmul.f32 %v1527, 1.442695
        %v1540 = vpow.pop %v1539
        %v1541 = vmul.f32 %v1528, 1.442695
        %v1542 = vpow.pop %v1541
        %v1543 = vmul.f32 %v1529, 1.442695
        %v1544 = vpow.pop %v1543
        %v1545 = vmul.f32 %v1530, 1.442695
        %v1546 = vpow.pop %v1545
        %v1547 = vsel %vm900, %v1532, 0.0
        %1548 = vadd.xlane.f32.xlu0 %v1547
        %v1549 = vpop.xlane.xlu0 %1548
        %v1550 = vsel %vm900, %v1534, 0.0
        %1551 = vadd.xlane.f32.xlu0 %v1550
        %v1552 = vpop.xlane.xlu0 %1551
        %v1553 = vsel %vm900, %v1536, 0.0
        %1554 = vadd.xlane.f32.xlu0 %v1553
        %v1555 = vpop.xlane.xlu0 %1554
        %v1556 = vsel %vm900, %v1538, 0.0
        %1557 = vadd.xlane.f32.xlu0 %v1556
        %v1558 = vpop.xlane.xlu0 %1557
        %v1559 = vsel %vm900, %v1540, 0.0
        %1560 = vadd.xlane.f32.xlu0 %v1559
        %v1561 = vpop.xlane.xlu0 %1560
        %v1562 = vsel %vm900, %v1542, 0.0
        %1563 = vadd.xlane.f32.xlu0 %v1562
        %v1564 = vpop.xlane.xlu0 %1563
        %v1565 = vsel %vm900, %v1544, 0.0
        %1566 = vadd.xlane.f32.xlu0 %v1565
        %v1567 = vpop.xlane.xlu0 %1566
        %v1568 = vsel %vm900, %v1546, 0.0
        %1569 = vadd.xlane.f32.xlu0 %v1568
        %v1570 = vpop.xlane.xlu0 %1569
        %v1571 = vrcp.pop %v1549
        %v1572 = vrcp.pop %v1552
        %v1573 = vrcp.pop %v1555
        %v1574 = vrcp.pop %v1558
        %v1575 = vrcp.pop %v1561
        %v1576 = vrcp.pop %v1564
        %v1577 = vrcp.pop %v1567
        %v1578 = vrcp.pop %v1570
        %v1579 = vmul.f32 %v1532, %v1571
        %v1580 = vmul.f32 %v1534, %v1572
        %v1581 = vmul.f32 %v1536, %v1573
        %v1582 = vmul.f32 %v1538, %v1574
        %v1583 = vmul.f32 %v1540, %v1575
        %v1584 = vmul.f32 %v1542, %v1576
        %v1585 = vmul.f32 %v1544, %v1577
        %v1586 = vmul.f32 %v1546, %v1578
        %v1587 = vpack.c.bf16 %v1580, %v1579
        %v1588 = vpack.c.bf16 %v1582, %v1581
        %v1589 = vpack.c.bf16 %v1584, %v1583
        %v1590 = vpack.c.bf16 %v1586, %v1585
        %1591 = vrot.lane.b32.xlu0 %v792, 64
        %v1592 = vpop.permute.xlu0 %1591
        %1593 = vrot.lane.b32.xlu0 %v795, 64
        %v1594 = vpop.permute.xlu0 %1593
        %1595 = vrot.lane.b32.xlu0 %v798, 64
        %v1596 = vpop.permute.xlu0 %1595
        %1597 = vrot.lane.b32.xlu0 %v801, 64
        %v1598 = vpop.permute.xlu0 %1597
        %v1604 = vsel %vm900, %v1587, 0
        %v1607 = vsel %vm900, %v1588, 0
        %v1610 = vsel %vm900, %v1589, 0
        %v1613 = vsel %vm900, %v1590, 0
        %1615 = vmatprep.subr.bf16.mxu0 0
        %1616 = vmatpush1.bf16.msra.mxu0 %v1592
        %1617 = vmatprep.subr.bf16.mxu0 0
        %1618 = vmatpush1.bf16.msra.mxu0 %v1594
        %1619 = vmatprep.subr.bf16.mxu0 0
        %1620 = vmatpush1.bf16.msra.mxu0 %v1596
        %1621 = vmatprep.subr.bf16.mxu0 0
        %1622 = vmatpush1.bf16.msra.mxu0 %v1598
        %1623 = vmatprep.subr.bf16.mxu0 0
        %1624 = vmatpush1.bf16.msra.mxu0 0
        %1625 = vmatprep.subr.bf16.mxu0 0
        %1626 = vmatpush1.bf16.msra.mxu0 0
        %1627 = vmatprep.subr.bf16.mxu0 0
        %1628 = vmatpush1.bf16.msra.mxu0 0
        %1629 = vmatprep.subr.bf16.mxu0 0
        %1630 = vmatpush1.bf16.msra.mxu0 0
        %1631 = vmatprep.subr.bf16.mxu0 0
        %1632 = vmatpush1.bf16.msra.mxu0 0
        %1633 = vmatprep.subr.bf16.mxu0 0
        %1634 = vmatpush1.bf16.msra.mxu0 0
        %1635 = vmatprep.subr.bf16.mxu0 0
        %1636 = vmatpush1.bf16.msra.mxu0 0
        %1637 = vmatprep.subr.bf16.mxu0 0
        %1638 = vmatpush1.bf16.msra.mxu0 0
        %1639 = vmatprep.subr.bf16.mxu0 0
        %1640 = vmatpush1.bf16.msra.mxu0 0
        %1641 = vmatprep.subr.bf16.mxu0 0
        %1642 = vmatpush1.bf16.msra.mxu0 0
        %1643 = vmatprep.subr.bf16.mxu0 0
        %1644 = vmatpush1.bf16.msra.mxu0 0
        %1645 = vmatprep.subr.bf16.mxu0 0
        %1646 = vmatpush1.bf16.msra.mxu0 0
        %1647 = vmatprep.mubr.bf16.mxu0 0
        %1648 = vmatmul.mubr.bf16.gmra.mrb[0].mxu0 %v1604
        %v1649 = vpop.f32.mrb[0].mxu0
        %v1650 = vadd.f32 0.0, %v1649
        %v1651 = vpop.f32.mrb[0].mxu0
        %v1652 = vpop.f32.mrb[0].mxu0
        %v1653 = vadd.f32 0.0, %v1652
        %v1654 = vpop.f32.mrb[0].mxu0
        %1655 = vmatprep.mubr.bf16.mxu0 0
        %1656 = vmatmul.mubr.bf16.gmra.mrb[0].mxu0 %v1607
        %v1657 = vpop.f32.mrb[0].mxu0
        %v1658 = vadd.f32 0.0, %v1657
        %v1659 = vpop.f32.mrb[0].mxu0
        %v1660 = vpop.f32.mrb[0].mxu0
        %v1661 = vadd.f32 0.0, %v1660
        %v1662 = vpop.f32.mrb[0].mxu0
        %1663 = vmatprep.mubr.bf16.mxu0 0
        %1664 = vmatmul.mubr.bf16.gmra.mrb[0].mxu0 %v1610
        %v1665 = vpop.f32.mrb[0].mxu0
        %v1666 = vadd.f32 0.0, %v1665
        %v1667 = vpop.f32.mrb[0].mxu0
        %v1668 = vpop.f32.mrb[0].mxu0
        %v1669 = vadd.f32 0.0, %v1668
        %v1670 = vpop.f32.mrb[0].mxu0
        %1671 = vmatprep.mubr.bf16.mxu0 0
        %1672 = vmatmul.mubr.bf16.gmra.mrb[0].mxu0 %v1613
        %v1673 = vpop.f32.mrb[0].mxu0
        %v1674 = vadd.f32 0.0, %v1673
        %v1675 = vpop.f32.mrb[0].mxu0
        %v1676 = vpop.f32.mrb[0].mxu0
        %v1677 = vadd.f32 0.0, %v1676
        %v1678 = vpop.f32.mrb[0].mxu0
        %1679 = vdwg.mxu0
        %v1680 = vpack.c.bf16 %v1653, %v1650
        %v1681 = vpack.c.bf16 %v1661, %v1658
        %v1682 = vpack.c.bf16 %v1669, %v1666
        %v1683 = vpack.c.bf16 %v1677, %v1674
        %s1684 = scalar_lea.vmem [#allocation2], 192
        %v1685 = vld [vmem:[%s1684] sm:$0xff]
        %v1686 = vld [vmem:[%s1684 + $0x8] sm:$0xff]
        %v1687 = vld [vmem:[%s1684 + $0x10] sm:$0xff]
        %v1688 = vld [vmem:[%s1684 + $0x18] sm:$0xff]
        %v1689 = vld [vmem:[%s1684 + $0x20] sm:$0xff]
        %v1690 = vld [vmem:[%s1684 + $0x28] sm:$0xff]
        %v1691 = vld [vmem:[%s1684 + $0x30] sm:$0xff]
        %v1692 = vld [vmem:[%s1684 + $0x38] sm:$0xff]
        %1693 = vrot.lane.b32.xlu0 %v790, 32
        %v1694 = vpop.permute.xlu0 %1693
        %1695 = vrot.lane.b32.xlu0 %v793, 32
        %v1696 = vpop.permute.xlu0 %1695
        %1697 = vrot.lane.b32.xlu0 %v796, 32
        %v1698 = vpop.permute.xlu0 %1697
        %1699 = vrot.lane.b32.xlu0 %v799, 32
        %v1700 = vpop.permute.xlu0 %1699
        %1701 = vrot.lane.b32.xlu0 %v791, 32
        %v1702 = vpop.permute.xlu0 %1701
        %1703 = vrot.lane.b32.xlu0 %v794, 32
        %v1704 = vpop.permute.xlu0 %1703
        %1705 = vrot.lane.b32.xlu0 %v797, 32
        %v1706 = vpop.permute.xlu0 %1705
        %1707 = vrot.lane.b32.xlu0 %v800, 32
        %v1708 = vpop.permute.xlu0 %1707
        %v1710 = vsel %vm810, %v1694, 0
        %v1713 = vsel %vm810, %v1696, 0
        %v1716 = vsel %vm810, %v1698, 0
        %v1719 = vsel %vm810, %v1700, 0
        %v1722 = vsel %vm810, %v1702, 0
        %v1725 = vsel %vm810, %v1704, 0
        %v1728 = vsel %vm810, %v1706, 0
        %v1731 = vsel %vm810, %v1708, 0
        %1733 = vmatprep.subr.bf16.mxu0 0
        %1734 = vmatpush1.bf16.xpose.msra.mxu0 %v1722
        %1735 = vmatprep.subr.bf16.mxu0 0
        %1736 = vmatpush1.bf16.xpose.msra.mxu0 %v1725
        %1737 = vmatprep.subr.bf16.mxu0 0
        %1738 = vmatpush1.bf16.xpose.msra.mxu0 %v1728
        %1739 = vmatprep.subr.bf16.mxu0 0
        %1740 = vmatpush1.bf16.xpose.msra.mxu0 %v1731
        %1741 = vmatprep.subr.bf16.mxu0 0
        %1742 = vmatpush1.bf16.xpose.msra.mxu0 0
        %1743 = vmatprep.subr.bf16.mxu0 0
        %1744 = vmatpush1.bf16.xpose.msra.mxu0 0
        %1745 = vmatprep.subr.bf16.mxu0 0
        %1746 = vmatpush1.bf16.xpose.msra.mxu0 0
        %1747 = vmatprep.subr.bf16.mxu0 0
        %1748 = vmatpush1.bf16.xpose.msra.mxu0 0
        %1749 = vmatprep.subr.bf16.mxu0 0
        %1750 = vmatpush1.bf16.xpose.msra.mxu0 0
        %1751 = vmatprep.subr.bf16.mxu0 0
        %1752 = vmatpush1.bf16.xpose.msra.mxu0 0
        %1753 = vmatprep.subr.bf16.mxu0 0
        %1754 = vmatpush1.bf16.xpose.msra.mxu0 0
        %1755 = vmatprep.subr.bf16.mxu0 0
        %1756 = vmatpush1.bf16.xpose.msra.mxu0 0
        %1757 = vmatprep.subr.bf16.mxu0 0
        %1758 = vmatpush1.bf16.xpose.msra.mxu0 0
        %1759 = vmatprep.subr.bf16.mxu0 0
        %1760 = vmatpush1.bf16.xpose.msra.mxu0 0
        %1761 = vmatprep.subr.bf16.mxu0 0
        %1762 = vmatpush1.bf16.xpose.msra.mxu0 0
        %1763 = vmatprep.subr.bf16.mxu0 0
        %1764 = vmatpush1.bf16.xpose.msra.mxu0 0
        %1765 = vmatprep.mubr.bf16.mxu0 0
        %1766 = vmatmul.mubr.bf16.gmra.mrb[0].mxu0 %v1710
        %v1767 = vpop.f32.mrb[0].mxu0
        %v1768 = vadd.f32 %v1685, %v1767
        %v1769 = vpop.f32.mrb[0].mxu0
        %v1770 = vpop.f32.mrb[0].mxu0
        %v1771 = vadd.f32 %v1686, %v1770
        %v1772 = vpop.f32.mrb[0].mxu0
        %1773 = vmatprep.mubr.bf16.mxu0 0
        %1774 = vmatmul.mubr.bf16.gmra.mrb[0].mxu0 %v1713
        %v1775 = vpop.f32.mrb[0].mxu0
        %v1776 = vadd.f32 %v1687, %v1775
        %v1777 = vpop.f32.mrb[0].mxu0
        %v1778 = vpop.f32.mrb[0].mxu0
        %v1779 = vadd.f32 %v1688, %v1778
        %v1780 = vpop.f32.mrb[0].mxu0
        %1781 = vmatprep.mubr.bf16.mxu0 0
        %1782 = vmatmul.mubr.bf16.gmra.mrb[0].mxu0 %v1716
        %v1783 = vpop.f32.mrb[0].mxu0
        %v1784 = vadd.f32 %v1689, %v1783
        %v1785 = vpop.f32.mrb[0].mxu0
        %v1786 = vpop.f32.mrb[0].mxu0
        %v1787 = vadd.f32 %v1690, %v1786
        %v1788 = vpop.f32.mrb[0].mxu0
        %1789 = vmatprep.mubr.bf16.mxu0 0
        %1790 = vmatmul.mubr.bf16.gmra.mrb[0].mxu0 %v1719
        %v1791 = vpop.f32.mrb[0].mxu0
        %v1792 = vadd.f32 %v1691, %v1791
        %v1793 = vpop.f32.mrb[0].mxu0
        %v1794 = vpop.f32.mrb[0].mxu0
        %v1795 = vadd.f32 %v1692, %v1794
        %v1796 = vpop.f32.mrb[0].mxu0
        %1797 = vdwg.mxu0
        %v1798 = vsel %vm900, %v1768, -inf
        %1799 = vmax.xlane.f32.xlu0 %v1798
        %v1800 = vpop.xlane.xlu0 %1799
        %v1801 = vsel %vm900, %v1771, -inf
        %1802 = vmax.xlane.f32.xlu0 %v1801
        %v1803 = vpop.xlane.xlu0 %1802
        %v1804 = vsel %vm900, %v1776, -inf
        %1805 = vmax.xlane.f32.xlu0 %v1804
        %v1806 = vpop.xlane.xlu0 %1805
        %v1807 = vsel %vm900, %v1779, -inf
        %1808 = vmax.xlane.f32.xlu0 %v1807
        %v1809 = vpop.xlane.xlu0 %1808
        %v1810 = vsel %vm900, %v1784, -inf
        %1811 = vmax.xlane.f32.xlu0 %v1810
        %v1812 = vpop.xlane.xlu0 %1811
        %v1813 = vsel %vm900, %v1787, -inf
        %1814 = vmax.xlane.f32.xlu0 %v1813
        %v1815 = vpop.xlane.xlu0 %1814
        %v1816 = vsel %vm900, %v1792, -inf
        %1817 = vmax.xlane.f32.xlu0 %v1816
        %v1818 = vpop.xlane.xlu0 %1817
        %v1819 = vsel %vm900, %v1795, -inf
        %1820 = vmax.xlane.f32.xlu0 %v1819
        %v1821 = vpop.xlane.xlu0 %1820
        %v1822 = vsub.f32 %v1768, %v1800
        %v1823 = vsub.f32 %v1771, %v1803
        %v1824 = vsub.f32 %v1776, %v1806
        %v1825 = vsub.f32 %v1779, %v1809
        %v1826 = vsub.f32 %v1784, %v1812
        %v1827 = vsub.f32 %v1787, %v1815
        %v1828 = vsub.f32 %v1792, %v1818
        %v1829 = vsub.f32 %v1795, %v1821
        %v1830 = vmul.f32 %v1822, 1.442695
        %v1831 = vpow.pop %v1830
        %v1832 = vmul.f32 %v1823, 1.442695
        %v1833 = vpow.pop %v1832
        %v1834 = vmul.f32 %v1824, 1.442695
        %v1835 = vpow.pop %v1834
        %v1836 = vmul.f32 %v1825, 1.442695
        %v1837 = vpow.pop %v1836
        %v1838 = vmul.f32 %v1826, 1.442695
        %v1839 = vpow.pop %v1838
        %v1840 = vmul.f32 %v1827, 1.442695
        %v1841 = vpow.pop %v1840
        %v1842 = vmul.f32 %v1828, 1.442695
        %v1843 = vpow.pop %v1842
        %v1844 = vmul.f32 %v1829, 1.442695
        %v1845 = vpow.pop %v1844
        %v1846 = vsel %vm900, %v1831, 0.0
        %1847 = vadd.xlane.f32.xlu0 %v1846
        %v1848 = vpop.xlane.xlu0 %1847
        %v1849 = vsel %vm900, %v1833, 0.0
        %1850 = vadd.xlane.f32.xlu0 %v1849
        %v1851 = vpop.xlane.xlu0 %1850
        %v1852 = vsel %vm900, %v1835, 0.0
        %1853 = vadd.xlane.f32.xlu0 %v1852
        %v1854 = vpop.xlane.xlu0 %1853
        %v1855 = vsel %vm900, %v1837, 0.0
        %1856 = vadd.xlane.f32.xlu0 %v1855
        %v1857 = vpop.xlane.xlu0 %1856
        %v1858 = vsel %vm900, %v1839, 0.0
        %1859 = vadd.xlane.f32.xlu0 %v1858
        %v1860 = vpop.xlane.xlu0 %1859
        %v1861 = vsel %vm900, %v1841, 0.0
        %1862 = vadd.xlane.f32.xlu0 %v1861
        %v1863 = vpop.xlane.xlu0 %1862
        %v1864 = vsel %vm900, %v1843, 0.0
        %1865 = vadd.xlane.f32.xlu0 %v1864
        %v1866 = vpop.xlane.xlu0 %1865
        %v1867 = vsel %vm900, %v1845, 0.0
        %1868 = vadd.xlane.f32.xlu0 %v1867
        %v1869 = vpop.xlane.xlu0 %1868
        %v1870 = vrcp.pop %v1848
        %v1871 = vrcp.pop %v1851
        %v1872 = vrcp.pop %v1854
        %v1873 = vrcp.pop %v1857
        %v1874 = vrcp.pop %v1860
        %v1875 = vrcp.pop %v1863
        %v1876 = vrcp.pop %v1866
        %v1877 = vrcp.pop %v1869
        %v1878 = vmul.f32 %v1831, %v1870
        %v1879 = vmul.f32 %v1833, %v1871
        %v1880 = vmul.f32 %v1835, %v1872
        %v1881 = vmul.f32 %v1837, %v1873
        %v1882 = vmul.f32 %v1839, %v1874
        %v1883 = vmul.f32 %v1841, %v1875
        %v1884 = vmul.f32 %v1843, %v1876
        %v1885 = vmul.f32 %v1845, %v1877
        %v1886 = vpack.c.bf16 %v1879, %v1878
        %v1887 = vpack.c.bf16 %v1881, %v1880
        %v1888 = vpack.c.bf16 %v1883, %v1882
        %v1889 = vpack.c.bf16 %v1885, %v1884
        %1890 = vrot.lane.b32.xlu0 %v792, 32
        %v1891 = vpop.permute.xlu0 %1890
        %1892 = vrot.lane.b32.xlu0 %v795, 32
        %v1893 = vpop.permute.xlu0 %1892
        %1894 = vrot.lane.b32.xlu0 %v798, 32
        %v1895 = vpop.permute.xlu0 %1894
        %1896 = vrot.lane.b32.xlu0 %v801, 32
        %v1897 = vpop.permute.xlu0 %1896
        %v1903 = vsel %vm900, %v1886, 0
        %v1906 = vsel %vm900, %v1887, 0
        %v1909 = vsel %vm900, %v1888, 0
        %v1912 = vsel %vm900, %v1889, 0
        %1914 = vmatprep.subr.bf16.mxu0 0
        %1915 = vmatpush1.bf16.msra.mxu0 %v1891
        %1916 = vmatprep.subr.bf16.mxu0 0
        %1917 = vmatpush1.bf16.msra.mxu0 %v1893
        %1918 = vmatprep.subr.bf16.mxu0 0
        %1919 = vmatpush1.bf16.msra.mxu0 %v1895
        %1920 = vmatprep.subr.bf16.mxu0 0
        %1921 = vmatpush1.bf16.msra.mxu0 %v1897
        %1922 = vmatprep.subr.bf16.mxu0 0
        %1923 = vmatpush1.bf16.msra.mxu0 0
        %1924 = vmatprep.subr.bf16.mxu0 0
        %1925 = vmatpush1.bf16.msra.mxu0 0
        %1926 = vmatprep.subr.bf16.mxu0 0
        %1927 = vmatpush1.bf16.msra.mxu0 0
        %1928 = vmatprep.subr.bf16.mxu0 0
        %1929 = vmatpush1.bf16.msra.mxu0 0
        %1930 = vmatprep.subr.bf16.mxu0 0
        %1931 = vmatpush1.bf16.msra.mxu0 0
        %1932 = vmatprep.subr.bf16.mxu0 0
        %1933 = vmatpush1.bf16.msra.mxu0 0
        %1934 = vmatprep.subr.bf16.mxu0 0
        %1935 = vmatpush1.bf16.msra.mxu0 0
        %1936 = vmatprep.subr.bf16.mxu0 0
        %1937 = vmatpush1.bf16.msra.mxu0 0
        %1938 = vmatprep.subr.bf16.mxu0 0
        %1939 = vmatpush1.bf16.msra.mxu0 0
        %1940 = vmatprep.subr.bf16.mxu0 0
        %1941 = vmatpush1.bf16.msra.mxu0 0
        %1942 = vmatprep.subr.bf16.mxu0 0
        %1943 = vmatpush1.bf16.msra.mxu0 0
        %1944 = vmatprep.subr.bf16.mxu0 0
        %1945 = vmatpush1.bf16.msra.mxu0 0
        %1946 = vmatprep.mubr.bf16.mxu0 0
        %1947 = vmatmul.mubr.bf16.gmra.mrb[0].mxu0 %v1903
        %v1948 = vpop.f32.mrb[0].mxu0
        %v1949 = vadd.f32 0.0, %v1948
        %v1950 = vpop.f32.mrb[0].mxu0
        %v1951 = vpop.f32.mrb[0].mxu0
        %v1952 = vadd.f32 0.0, %v1951
        %v1953 = vpop.f32.mrb[0].mxu0
        %1954 = vmatprep.mubr.bf16.mxu0 0
        %1955 = vmatmul.mubr.bf16.gmra.mrb[0].mxu0 %v1906
        %v1956 = vpop.f32.mrb[0].mxu0
        %v1957 = vadd.f32 0.0, %v1956
        %v1958 = vpop.f32.mrb[0].mxu0
        %v1959 = vpop.f32.mrb[0].mxu0
        %v1960 = vadd.f32 0.0, %v1959
        %v1961 = vpop.f32.mrb[0].mxu0
        %1962 = vmatprep.mubr.bf16.mxu0 0
        %1963 = vmatmul.mubr.bf16.gmra.mrb[0].mxu0 %v1909
        %v1964 = vpop.f32.mrb[0].mxu0
        %v1965 = vadd.f32 0.0, %v1964
        %v1966 = vpop.f32.mrb[0].mxu0
        %v1967 = vpop.f32.mrb[0].mxu0
        %v1968 = vadd.f32 0.0, %v1967
        %v1969 = vpop.f32.mrb[0].mxu0
        %1970 = vmatprep.mubr.bf16.mxu0 0
        %1971 = vmatmul.mubr.bf16.gmra.mrb[0].mxu0 %v1912
        %v1972 = vpop.f32.mrb[0].mxu0
        %v1973 = vadd.f32 0.0, %v1972
        %v1974 = vpop.f32.mrb[0].mxu0
        %v1975 = vpop.f32.mrb[0].mxu0
        %v1976 = vadd.f32 0.0, %v1975
        %v1977 = vpop.f32.mrb[0].mxu0
        %1978 = vdwg.mxu0
        %v1979 = vpack.c.bf16 %v1952, %v1949
        %v1980 = vpack.c.bf16 %v1960, %v1957
        %v1981 = vpack.c.bf16 %v1968, %v1965
        %v1982 = vpack.c.bf16 %v1976, %v1973
        %1987 = vrot.lane.b32.xlu0 %v1381, 32
        %v1988 = vpop.permute.xlu0 %1987
        %1989 = vrot.lane.b32.xlu0 %v1382, 32
        %v1990 = vpop.permute.xlu0 %1989
        %1991 = vrot.lane.b32.xlu0 %v1383, 32
        %v1992 = vpop.permute.xlu0 %1991
        %1993 = vrot.lane.b32.xlu0 %v1384, 32
        %v1994 = vpop.permute.xlu0 %1993
        %1999 = vrot.lane.b32.xlu0 %v1680, 64
        %v2000 = vpop.permute.xlu0 %1999
        %2001 = vrot.lane.b32.xlu0 %v1681, 64
        %v2002 = vpop.permute.xlu0 %2001
        %2003 = vrot.lane.b32.xlu0 %v1682, 64
        %v2004 = vpop.permute.xlu0 %2003
        %2005 = vrot.lane.b32.xlu0 %v1683, 64
        %v2006 = vpop.permute.xlu0 %2005
        %2011 = vrot.lane.b32.xlu0 %v1979, 96
        %v2012 = vpop.permute.xlu0 %2011
        %2013 = vrot.lane.b32.xlu0 %v1980, 96
        %v2014 = vpop.permute.xlu0 %2013
        %2015 = vrot.lane.b32.xlu0 %v1981, 96
        %v2016 = vpop.permute.xlu0 %2015
        %2017 = vrot.lane.b32.xlu0 %v1982, 96
        %v2018 = vpop.permute.xlu0 %2017
        %v2021 = vsel %vm810, %v1070, %v1988
        %v2024 = vsel %vm810, %v1071, %v1990
        %v2027 = vsel %vm810, %v1072, %v1992
        %v2030 = vsel %vm810, %v1073, %v1994
        %v2032 = vsel %vm900, %v2021, %v2000
        %v2034 = vsel %vm900, %v2024, %v2002
        %v2036 = vsel %vm900, %v2027, %v2004
        %v2038 = vsel %vm900, %v2030, %v2006
        %vm2039 = vcmask 785408
        %v2041 = vsel %vm2039, %v2032, %v2012
        %v2044 = vsel %vm2039, %v2034, %v2014
        %v2047 = vsel %vm2039, %v2036, %v2016
        %v2050 = vsel %vm2039, %v2038, %v2018
        %v2052 = vld [vmem:[#allocation4] sm:$0xf]
        %v2053 = vld [vmem:[#allocation4 + $0x4] sm:$0xf]
        %v2054 = vld [vmem:[#allocation4 + $0x8] sm:$0xf]
        %v2055 = vld [vmem:[#allocation4 + $0xc] sm:$0xf]
        %v2056 = vld [vmem:[#allocation4 + $0x10] sm:$0xf]
        %v2057 = vld [vmem:[#allocation4 + $0x14] sm:$0xf]
        %v2058 = vld [vmem:[#allocation4 + $0x18] sm:$0xf]
        %v2059 = vld [vmem:[#allocation4 + $0x1c] sm:$0xf]
        %v2060 = vld [vmem:[#allocation4 + $0x20] sm:$0xf]
        %v2061 = vld [vmem:[#allocation4 + $0x24] sm:$0xf]
        %v2062 = vld [vmem:[#allocation4 + $0x28] sm:$0xf]
        %v2063 = vld [vmem:[#allocation4 + $0x2c] sm:$0xf]
        %v2064 = vld [vmem:[#allocation4 + $0x30] sm:$0xf]
        %v2065 = vld [vmem:[#allocation4 + $0x34] sm:$0xf]
        %v2066 = vld [vmem:[#allocation4 + $0x38] sm:$0xf]
        %v2067 = vld [vmem:[#allocation4 + $0x3c] sm:$0xf]
        %v2068 = vld [vmem:[%s7] sm:$0x1]
        %v2070 = vlaneseq
        %v2071 = vshrl.u32 %v2070, 7
        %v2072 = vsub.s32 0, %v2071
        %v2073 = vrot.slane %v2068, %v2072
        %v2091 = vunpack.c.l.b16 %v2052
        %v2092 = vunpack.c.l.b16 %v2053
        %v2093 = vunpack.c.l.b16 %v2054
        %v2094 = vunpack.c.l.b16 %v2055
        %v2095 = vunpack.c.l.b16 %v2056
        %v2096 = vunpack.c.l.b16 %v2057
        %v2097 = vunpack.c.l.b16 %v2058
        %v2098 = vunpack.c.l.b16 %v2059
        %v2099 = vunpack.c.l.b16 %v2060
        %v2100 = vunpack.c.l.b16 %v2061
        %v2101 = vunpack.c.l.b16 %v2062
        %v2102 = vunpack.c.l.b16 %v2063
        %v2103 = vunpack.c.l.b16 %v2064
        %v2104 = vunpack.c.l.b16 %v2065
        %v2105 = vunpack.c.l.b16 %v2066
        %v2106 = vunpack.c.l.b16 %v2067
        %v2107 = vpack.c.b16 %v2092, %v2091
        %v2108 = vpack.c.b16 %v2094, %v2093
        %v2109 = vpack.c.b16 %v2096, %v2095
        %v2110 = vpack.c.b16 %v2098, %v2097
        %v2111 = vpack.c.b16 %v2100, %v2099
        %v2112 = vpack.c.b16 %v2102, %v2101
        %v2113 = vpack.c.b16 %v2104, %v2103
        %v2114 = vpack.c.b16 %v2106, %v2105
        %2123 = vmatprep.subr.bf16.mxu0 0
        %2124 = vmatpush1.bf16.msra.mxu0 %v2107
        %2125 = vmatprep.subr.bf16.mxu0 0
        %2126 = vmatpush1.bf16.msra.mxu0 %v2108
        %2127 = vmatprep.subr.bf16.mxu0 0
        %2128 = vmatpush1.bf16.msra.mxu0 %v2109
        %2129 = vmatprep.subr.bf16.mxu0 0
        %2130 = vmatpush1.bf16.msra.mxu0 %v2110
        %2131 = vmatprep.subr.bf16.mxu0 0
        %2132 = vmatpush1.bf16.msra.mxu0 %v2111
        %2133 = vmatprep.subr.bf16.mxu0 0
        %2134 = vmatpush1.bf16.msra.mxu0 %v2112
        %2135 = vmatprep.subr.bf16.mxu0 0
        %2136 = vmatpush1.bf16.msra.mxu0 %v2113
        %2137 = vmatprep.subr.bf16.mxu0 0
        %2138 = vmatpush1.bf16.msra.mxu0 %v2114
        %2139 = vmatprep.subr.bf16.mxu0 0
        %2140 = vmatpush1.bf16.msra.mxu0 0
        %2141 = vmatprep.subr.bf16.mxu0 0
        %2142 = vmatpush1.bf16.msra.mxu0 0
        %2143 = vmatprep.subr.bf16.mxu0 0
        %2144 = vmatpush1.bf16.msra.mxu0 0
        %2145 = vmatprep.subr.bf16.mxu0 0
        %2146 = vmatpush1.bf16.msra.mxu0 0
        %2147 = vmatprep.subr.bf16.mxu0 0
        %2148 = vmatpush1.bf16.msra.mxu0 0
        %2149 = vmatprep.subr.bf16.mxu0 0
        %2150 = vmatpush1.bf16.msra.mxu0 0
        %2151 = vmatprep.subr.bf16.mxu0 0
        %2152 = vmatpush1.bf16.msra.mxu0 0
        %2153 = vmatprep.subr.bf16.mxu0 0
        %2154 = vmatpush1.bf16.msra.mxu0 0
        %2155 = vmatprep.mubr.bf16.mxu0 0
        %2156 = vmatmul.mubr.bf16.gmra.mrb[0].mxu0 %v2041
        %v2157 = vpop.f32.mrb[0].mxu0
        %v2158 = vadd.f32 %v2073, %v2157
        %v2159 = vpop.f32.mrb[0].mxu0
        %v2160 = vpop.f32.mrb[0].mxu0
        %v2161 = vadd.f32 %v2073, %v2160
        %v2162 = vpop.f32.mrb[0].mxu0
        %2163 = vmatprep.mubr.bf16.mxu0 0
        %2164 = vmatmul.mubr.bf16.gmra.mrb[0].mxu0 %v2044
        %v2165 = vpop.f32.mrb[0].mxu0
        %v2166 = vadd.f32 %v2073, %v2165
        %v2167 = vpop.f32.mrb[0].mxu0
        %v2168 = vpop.f32.mrb[0].mxu0
        %v2169 = vadd.f32 %v2073, %v2168
        %v2170 = vpop.f32.mrb[0].mxu0
        %2171 = vmatprep.mubr.bf16.mxu0 0
        %2172 = vmatmul.mubr.bf16.gmra.mrb[0].mxu0 %v2047
        %v2173 = vpop.f32.mrb[0].mxu0
        %v2174 = vadd.f32 %v2073, %v2173
        %v2175 = vpop.f32.mrb[0].mxu0
        %v2176 = vpop.f32.mrb[0].mxu0
        %v2177 = vadd.f32 %v2073, %v2176
        %v2178 = vpop.f32.mrb[0].mxu0
        %2179 = vmatprep.mubr.bf16.mxu0 0
        %2180 = vmatmul.mubr.bf16.gmra.mrb[0].mxu0 %v2050
        %v2181 = vpop.f32.mrb[0].mxu0
        %v2182 = vadd.f32 %v2073, %v2181
        %v2183 = vpop.f32.mrb[0].mxu0
        %v2184 = vpop.f32.mrb[0].mxu0
        %v2185 = vadd.f32 %v2073, %v2184
        %v2186 = vpop.f32.mrb[0].mxu0
        %2187 = vdwg.mxu0
        %v2188 = vadd.f32 %v345, %v2158
        %v2189 = vadd.f32 %v346, %v2161
        %v2190 = vadd.f32 %v347, %v2166
        %v2191 = vadd.f32 %v348, %v2169
        %v2192 = vadd.f32 %v349, %v2174
        %v2193 = vadd.f32 %v350, %v2177
        %v2194 = vadd.f32 %v351, %v2182
        %v2195 = vadd.f32 %v352, %v2185
        %v2196 = vpack.c.bf16 %v2189, %v2188
        %v2197 = vpack.c.bf16 %v2191, %v2190
        %v2198 = vpack.c.bf16 %v2193, %v2192
        %v2199 = vpack.c.bf16 %v2195, %v2194
        %v2204 = vunpack.c.l.b16 %v2196
        %v2205 = vunpack.c.h.b16 %v2196
        %v2206 = vunpack.c.l.b16 %v2197
        %v2207 = vunpack.c.h.b16 %v2197
        %v2208 = vunpack.c.l.b16 %v2198
        %v2209 = vunpack.c.h.b16 %v2198
        %v2210 = vunpack.c.l.b16 %v2199
        %v2211 = vunpack.c.h.b16 %v2199
        %v2212 = vpack.c.b16 %v2204, %v2204
        %v2213 = vpack.c.b16 %v2205, %v2205
        %v2214 = vpack.c.b16 %v2206, %v2206
        %v2215 = vpack.c.b16 %v2207, %v2207
        %v2216 = vpack.c.b16 %v2208, %v2208
        %v2217 = vpack.c.b16 %v2209, %v2209
        %v2218 = vpack.c.b16 %v2210, %v2210
        %v2219 = vpack.c.b16 %v2211, %v2211
        %2228 = vst [vmem:[%s335] sm:$0xf] %v2212
        %2229 = vst [vmem:[%s335 + $0x4] sm:$0xf] %v2213
        %2230 = vst [vmem:[%s335 + $0x8] sm:$0xf] %v2214
        %2231 = vst [vmem:[%s335 + $0xc] sm:$0xf] %v2215
        %2232 = vst [vmem:[%s335 + $0x10] sm:$0xf] %v2216
        %2233 = vst [vmem:[%s335 + $0x14] sm:$0xf] %v2217
        %2234 = vst [vmem:[%s335 + $0x18] sm:$0xf] %v2218
        %2235 = vst [vmem:[%s335 + $0x1c] sm:$0xf] %v2219
        %p2236 = scmp.lt.s32.totalorder %s21, 1
        %s2237 = scalar_select %p2236, %s21, 1
        %s2238 = smul.addr %s2237, 8
        %s2239 = smul.addr %s2238, 4
        %s2240 = scalar_lea.vmem %s8, %s2239
        // Predicated region
        $region61: #{csa_block_forward.2} parent=51 // pred_check
          %p2241 = pneg %p212
        $region62: #{csa_block_forward.2} parent=51 // pred_check_branch
          %2243 = sbr.rel (%p2241) target = $region64
        $region63: #{csa_block_forward.2} parent=51 // pred_region
          _
        $region64: #{csa_block_forward.2} parent=51 // pred_fallthru
          _
      $region52: #{csa_block_forward.2} parent=5 // pred_fallthru
        _
      %p2244 = scmp.le.s32.totalorder 2, %s16
      // Predicated region
      $region65: #{csa_block_forward.2} parent=5 // pred_check
        %p2245 = pneg %p2244
      $region66: #{csa_block_forward.2} parent=5 // pred_check_branch
        %2247 = sbr.rel (%p2245) target = $region68
      $region67: #{csa_block_forward.2} parent=5 // pred_region
        %s2248 = ssub.s32 %s16, 2
        // Predicated region
        $region69: #{csa_block_forward.2} parent=67 // pred_check
          %p2249 = pneg %p218
        $region70: #{csa_block_forward.2} parent=67 // pred_check_branch
          %2251 = sbr.rel (%p2249) target = $region72
        $region71: #{csa_block_forward.2} parent=67 // pred_region
          %p2252 = scmp.lt.s32.totalorder %s22, 1
          %s2253 = scalar_select %p2252, %s22, 1
          %s2254 = smul.addr %s2253, 8
          %s2255 = smul.addr %s2254, 4
          %s2256 = scalar_lea.vmem %s8, %s2255
        $region72: #{csa_block_forward.2} parent=67 // pred_fallthru
          _
      $region68: #{csa_block_forward.2} parent=5 // pred_fallthru
        _
    $region6: #{csa_block_forward.2} parent=1 // loop_footer
      %s20 = sadd.s32 1, %s16
    $region7: #{csa_block_forward.2} parent=1 // loop_footer_branch
      %15 = sbr.rel target = $region3
    $region8: #{csa_block_forward.2} parent=1 // loop_exit
      _
    %2257 = vsyncpa [#allocation3], 1
    %s2258 = scalar_lea.sflag [#allocation3], 1
    %2259 = vsyncpa %s2258, 1
    %2260 = vsyncpa [#allocation5], 1

</llo_original>
